<compile_context>
chip_gen: v7x
topology: tpu7x:2x2x1
jax: 0.10.0
libtpu: 0.0.40
codegen_flags: <defaults>
</compile_context>

<pallas_src>
import functools
import math

import jax
import jax.numpy as jnp
from jax.experimental import pallas as pl
from jax.experimental.pallas import tpu as pltpu


_VMEM_LIMIT = 32 * 1024 * 1024   # safe on v5e/v6e/v7x; raises v5e's 16 MiB scoped default
_GELU_C = math.sqrt(2.0 / math.pi)


def _gelu(x):
    # TODO(synk): tanh-form GELU (EUP tanh slot) instead of PyTorch nn.GELU's exact erf;
    # max abs deviation ~3e-4, below the bf16-MXU noise floor used here.
    return 0.5 * x * (1.0 + jnp.tanh(_GELU_C * (x + 0.044715 * x * x * x)))


# ----------------------------------------------------------------------------
# Tile-size helpers (respect the (8,128) block constraint or full-dim blocks)
# ----------------------------------------------------------------------------
def _pick_tile(dim, target, base):
    """Largest multiple of `base` dividing `dim` that is <= target, else full dim."""
    if dim <= target:
        return dim
    t = (target // base) * base
    while t >= base:
        if dim % t == 0:
            return t
        t -= base
    return dim


def _pick_div(n, target):
    """Largest divisor of n that is <= target."""
    d = min(n, target)
    while n % d:
        d -= 1
    return d


# ----------------------------------------------------------------------------
# Tiled matmul (+ optional bias / GELU / fused residual)
# ----------------------------------------------------------------------------
def _matmul_kernel(*refs, act, has_bias, has_res, k_steps):
    x_ref, w_ref = refs[0], refs[1]
    idx = 2
    b_ref = None
    r_ref = None
    if has_bias:
        b_ref = refs[idx]; idx += 1
    if has_res:
        r_ref = refs[idx]; idx += 1
    o_ref = refs[idx]
    acc_ref = refs[idx + 1]

    @pl.when(pl.program_id(2) == 0)
    def _():
        acc_ref[...] = jnp.zeros(acc_ref.shape, acc_ref.dtype)

    acc_ref[...] += jnp.dot(
        x_ref[...].astype(jnp.bfloat16),
        w_ref[...].astype(jnp.bfloat16),
        preferred_element_type=jnp.float32)

    @pl.when(pl.program_id(2) == k_steps - 1)
    def _():
        acc = acc_ref[...]
        if has_bias:
            acc = acc + b_ref[...].astype(jnp.float32)
        if act == "gelu":
            acc = _gelu(acc)
        if has_res:
            acc = acc + r_ref[...].astype(jnp.float32)
        o_ref[...] = acc.astype(o_ref.dtype)


def matmul_bias(x, w, b=None, act=None, res=None, out_dtype=None,
                tm_target=512, tn_target=512, tk_target=512):
    """x:(M,K) @ w:(K,N) [+ b] [GELU] [+ res], tiled with K-axis accumulation."""
    M, K = x.shape
    K2, N = w.shape
    assert K == K2
    tm = _pick_tile(M, tm_target, 8)
    tn = _pick_tile(N, tn_target, 128)
    tk = _pick_tile(K, tk_target, 128)
    gm, gn, gk = M // tm, N // tn, K // tk

    in_specs = [pl.BlockSpec((tm, tk), lambda i, j, k: (i, k)),
                pl.BlockSpec((tk, tn), lambda i, j, k: (k, j))]
    args = [x, w]
    if b is not None:
        in_specs.append(pl.BlockSpec((1, tn), lambda i, j, k: (0, j)))
        args.append(b.reshape(1, N))
    if res is not None:
        in_specs.append(pl.BlockSpec((tm, tn), lambda i, j, k: (i, j)))
        args.append(res)

    kernel = functools.partial(_matmul_kernel, act=act, has_bias=b is not None,
                               has_res=res is not None, k_steps=gk)
    out_dtype = out_dtype or x.dtype
    return pl.pallas_call(
        kernel,
        out_shape=jax.ShapeDtypeStruct((M, N), out_dtype),
        grid=(gm, gn, gk),
        in_specs=in_specs,
        out_specs=pl.BlockSpec((tm, tn), lambda i, j, k: (i, j)),
        scratch_shapes=[pltpu.VMEM((tm, tn), jnp.float32)],
        compiler_params=pltpu.CompilerParams(
            dimension_semantics=("parallel", "parallel", "arbitrary"),
            vmem_limit_bytes=_VMEM_LIMIT),
    )(*args)


# ----------------------------------------------------------------------------
# Row-tiled LayerNorm (also used for LayerNorm2d in channels-last form)
# ----------------------------------------------------------------------------
def _ln_kernel(x_ref, g_ref, b_ref, o_ref, *, eps):
    x = x_ref[...].astype(jnp.float32)
    mu = jnp.mean(x, axis=-1, keepdims=True)
    var = jnp.mean((x - mu) * (x - mu), axis=-1, keepdims=True)
    y = (x - mu) * jax.lax.rsqrt(var + eps)
    y = y * g_ref[...].astype(jnp.float32) + b_ref[...].astype(jnp.float32)
    o_ref[...] = y.astype(o_ref.dtype)


def layernorm(x, g, b, eps):
    M, D = x.shape
    tm = _pick_tile(M, 1024, 8)
    return pl.pallas_call(
        functools.partial(_ln_kernel, eps=eps),
        out_shape=jax.ShapeDtypeStruct((M, D), x.dtype),
        grid=(M // tm,),
        in_specs=[pl.BlockSpec((tm, D), lambda i: (i, 0)),
                  pl.BlockSpec((1, D), lambda i: (0, 0)),
                  pl.BlockSpec((1, D), lambda i: (0, 0))],
        out_specs=pl.BlockSpec((tm, D), lambda i: (i, 0)),
        compiler_params=pltpu.CompilerParams(
            dimension_semantics=("parallel",), vmem_limit_bytes=_VMEM_LIMIT),
    )(x, g.reshape(1, D), b.reshape(1, D))


# ----------------------------------------------------------------------------
# Flash-style attention (online softmax), several heads per grid step
# ----------------------------------------------------------------------------
def _flash_attn_kernel(q_ref, k_ref, v_ref, o_ref, m_ref, l_ref, acc_ref,
                       *, scale, kv_steps):
    ki = pl.program_id(2)

    @pl.when(ki == 0)
    def _():
        m_ref[...] = jnp.full(m_ref.shape, -jnp.inf, m_ref.dtype)
        l_ref[...] = jnp.zeros(l_ref.shape, l_ref.dtype)
        acc_ref[...] = jnp.zeros(acc_ref.shape, acc_ref.dtype)

    q = (q_ref[...].astype(jnp.float32) * scale).astype(jnp.bfloat16)
    k = k_ref[...].astype(jnp.bfloat16)
    v = v_ref[...].astype(jnp.bfloat16)

    # contract on head_dim directly (no explicit k.T transpose)
    s = jnp.einsum("hqd,hkd->hqk", q, k, preferred_element_type=jnp.float32)

    m_prev = m_ref[...]
    m_new = jnp.maximum(m_prev, jnp.max(s, axis=-1, keepdims=True))
    alpha = jnp.exp(m_prev - m_new)
    p = jnp.exp(s - m_new)
    l_ref[...] = alpha * l_ref[...] + jnp.sum(p, axis=-1, keepdims=True)
    acc_ref[...] = alpha * acc_ref[...] + jnp.einsum(
        "hqk,hkd->hqd", p.astype(jnp.bfloat16), v, preferred_element_type=jnp.float32)
    m_ref[...] = m_new

    @pl.when(ki == kv_steps - 1)
    def _():
        inv_l = pl.reciprocal(l_ref[...], approx=True)
        o_ref[...] = (acc_ref[...] * inv_l).astype(o_ref.dtype)


def flash_attention(q, k, v, scale):
    """q,k,v: (B*num_heads, T, head_dim)."""
    BH, T, dh = q.shape
    hb = _pick_div(BH, 4)                 # heads processed per grid step
    tq = _pick_tile(T, 512, 8)
    tkv = _pick_tile(T, 512, 8)
    kv_steps = T // tkv

    q_spec = pl.BlockSpec((hb, tq, dh), lambda b, qi, ki: (b, qi, 0))
    kv_spec = pl.BlockSpec((hb, tkv, dh), lambda b, qi, ki: (b, ki, 0))
    return pl.pallas_call(
        functools.partial(_flash_attn_kernel, scale=scale, kv_steps=kv_steps),
        out_shape=jax.ShapeDtypeStruct((BH, T, dh), q.dtype),
        grid=(BH // hb, T // tq, kv_steps),
        in_specs=[q_spec, kv_spec, kv_spec],
        out_specs=q_spec,
        scratch_shapes=[pltpu.VMEM((hb, tq, 1), jnp.float32),
                        pltpu.VMEM((hb, tq, 1), jnp.float32),
                        pltpu.VMEM((hb, tq, dh), jnp.float32)],
        compiler_params=pltpu.CompilerParams(
            dimension_semantics=("parallel", "parallel", "arbitrary"),
            vmem_limit_bytes=_VMEM_LIMIT),
    )(q, k, v)


# ----------------------------------------------------------------------------
# Neck 3x3 conv (padding=1, no bias): 9 shifted matmuls from a padded NHWC block
# ----------------------------------------------------------------------------
def _conv3x3_kernel(x_ref, w_ref, o_ref, *, Hp, Wp):
    Cn = w_ref.shape[-1]

    def row_body(i, carry):
        acc = jnp.zeros((Wp, Cn), jnp.float32)
        for t in range(9):                       # static unroll over the 9 taps
            kh, kw = divmod(t, 3)
            patch = x_ref[0, i + kh, kw:kw + Wp, :].astype(jnp.bfloat16)
            acc = acc + jnp.dot(patch, w_ref[t].astype(jnp.bfloat16),
                                preferred_element_type=jnp.float32)
        o_ref[0, i] = acc.astype(o_ref.dtype)
        return carry

    jax.lax.fori_loop(0, Hp, row_body, 0)


def conv3x3(x_pad, w, Hp, Wp, Cn, out_dtype=jnp.float32):
    """x_pad: (B, Hp+2, Wp+2, Cn) channels-last; w: (9*Cn, Cn) in (kh, kw, cin) order."""
    B = x_pad.shape[0]
    w3 = w.reshape(9, Cn, Cn)
    return pl.pallas_call(
        functools.partial(_conv3x3_kernel, Hp=Hp, Wp=Wp),
        out_shape=jax.ShapeDtypeStruct((B, Hp, Wp, Cn), out_dtype),
        grid=(B,),
        in_specs=[pl.BlockSpec((1, Hp + 2, Wp + 2, Cn), lambda b: (b, 0, 0, 0)),
                  pl.BlockSpec((9, Cn, Cn), lambda b: (0, 0, 0))],
        out_specs=pl.BlockSpec((1, Hp, Wp, Cn), lambda b: (b, 0, 0, 0)),
        compiler_params=pltpu.CompilerParams(
            dimension_semantics=("parallel",), vmem_limit_bytes=_VMEM_LIMIT),
    )(x_pad, w3)


# ----------------------------------------------------------------------------
# Parameters (deterministic synthetic init — shapes follow the PyTorch __init__).
# Matmul/conv weights are stored bf16 (MXU inputs); biases / LN params / pos_embed f32.
# ----------------------------------------------------------------------------
def init_params(key, cfg):
    D = cfg["embed_dim"]
    p = cfg["patch_size"]
    C = cfg["in_chans"]
    Hp = cfg["img_size"] // p
    mlp_dim = int(D * cfg["mlp_ratio"])
    Cn = cfg["out_chans_pretrain"]

    keys = iter(jax.random.split(key, 128))

    def w(shape, scale=0.02, dtype=jnp.bfloat16):
        return (scale * jax.random.normal(next(keys), shape)).astype(dtype)

    params = {
        # patch-embed conv (kernel=stride=p) folded into a (p*p*C, D) matmul weight
        # with im2col ordering (ph, pw, cin).
        "patch_w": w((p * p * C, D)),
        "patch_b": jnp.zeros((D,), jnp.float32),
        "pos_embed": w((1, Hp, Hp, D), dtype=jnp.float32),
        "blocks": [],
        "neck_w1": w((D, Cn)),                 # 1x1 conv, bias=False
        "neck_ln1_g": jnp.ones((Cn,), jnp.float32),
        "neck_ln1_b": jnp.zeros((Cn,), jnp.float32),
        "neck_w2": w((9 * Cn, Cn)),            # 3x3 conv (kh, kw, cin) order, bias=False
        "neck_ln2_g": jnp.ones((Cn,), jnp.float32),
        "neck_ln2_b": jnp.zeros((Cn,), jnp.float32),
    }
    for _ in range(cfg["depth"]):
        params["blocks"].append({
            "ln1_g": jnp.ones((D,), jnp.float32), "ln1_b": jnp.zeros((D,), jnp.float32),
            "qkv_w": w((D, 3 * D)), "qkv_b": jnp.zeros((3 * D,), jnp.float32),
            "proj_w": w((D, D)), "proj_b": jnp.zeros((D,), jnp.float32),
            "ln2_g": jnp.ones((D,), jnp.float32), "ln2_b": jnp.zeros((D,), jnp.float32),
            "mlp_w1": w((D, mlp_dim)), "mlp_b1": jnp.zeros((mlp_dim,), jnp.float32),
            "mlp_w2": w((mlp_dim, D)), "mlp_b2": jnp.zeros((D,), jnp.float32),
        })
    return params


# ----------------------------------------------------------------------------
# Forward pass (mirrors MedSAM_encoder.forward; window_size=0 => global attention,
# use_rel_pos=False as in the module defaults)
# ----------------------------------------------------------------------------
def medsam_encoder_forward(x, params, cfg):
    B, C, H, W = x.shape
    p = cfg["patch_size"]
    D = cfg["embed_dim"]
    nH = cfg["num_heads"]
    Hp, Wp = H // p, W // p
    T = Hp * Wp
    dh = D // nH
    Cn = cfg["out_chans_pretrain"]

    # ---- patch embed: stride==kernel conv == non-overlapping patch extraction + matmul
    xp = jnp.transpose(x, (0, 2, 3, 1))                                    # NHWC
    xp = xp.reshape(B, Hp, p, Wp, p, C).transpose(0, 1, 3, 2, 4, 5)
    xp = xp.reshape(B * T, p * p * C)
    tok = matmul_bias(xp, params["patch_w"], params["patch_b"])            # (B*T, D) f32

    # ---- absolute position embedding
    tok = tok.reshape(B, Hp, Wp, D) + params["pos_embed"]
    xt = tok.reshape(B * T, D)

    vit_heads = []
    for i, blk in enumerate(params["blocks"]):
        # attention branch
        h = layernorm(xt, blk["ln1_g"], blk["ln1_b"], 1e-5)
        qkv = matmul_bias(h, blk["qkv_w"], blk["qkv_b"])                   # (B*T, 3D)
        # TODO(synk): the head split / merge below stays in the wrapper because per-head
        # column blocks (width dh < 128) violate the lane-alignment block constraint.
        qkv = qkv.reshape(B, T, 3, nH, dh).transpose(2, 0, 3, 1, 4).reshape(3, B * nH, T, dh)
        o = flash_attention(qkv[0], qkv[1], qkv[2], dh ** -0.5)            # (B*nH, T, dh)
        o = o.reshape(B, nH, T, dh).transpose(0, 2, 1, 3).reshape(B * T, D)
        xt = matmul_bias(o, blk["proj_w"], blk["proj_b"], res=xt)          # fused residual

        # MLP branch
        h = layernorm(xt, blk["ln2_g"], blk["ln2_b"], 1e-5)
        h = matmul_bias(h, blk["mlp_w1"], blk["mlp_b1"], act="gelu")
        xt = matmul_bias(h, blk["mlp_w2"], blk["mlp_b2"], res=xt)          # fused residual

        if i in cfg["global_attn_indexes"]:
            vit_heads.append(xt.reshape(B, Hp, Wp, D))

    # ---- neck: Conv1x1 -> LayerNorm2d -> Conv3x3(pad=1) -> LayerNorm2d (channels-last)
    y = matmul_bias(xt, params["neck_w1"])                                 # 1x1 conv, no bias
    y = layernorm(y, params["neck_ln1_g"], params["neck_ln1_b"], 1e-6)
    y = y.reshape(B, Hp, Wp, Cn)
    yp = jnp.pad(y, ((0, 0), (1, 1), (1, 1), (0, 0))).astype(jnp.bfloat16)
    y = conv3x3(yp, params["neck_w2"], Hp, Wp, Cn, out_dtype=jnp.float32)  # 3x3 conv, no bias
    y = layernorm(y.reshape(B * T, Cn), params["neck_ln2_g"], params["neck_ln2_b"], 1e-6)
    x_neck = y.reshape(B, Hp, Wp, Cn).transpose(0, 3, 1, 2)                # -> NCHW

    z3, z6, z9, z12 = [h.transpose(0, 3, 1, 2) for h in vit_heads]         # -> NCHW
    return z3, z6, z9, z12, x_neck


# ----------------------------------------------------------------------------
if __name__ == "__main__":
    # Small config consistent with the module (forward requires exactly 4 global-attn taps).
    cfg = dict(
        img_size=64, patch_size=16, in_chans=3,
        out_chans_pretrain=32, embed_dim=32, depth=4, num_heads=4,
        mlp_ratio=4.0, global_attn_indexes=(0, 1, 2, 3),
    )
    key = jax.random.PRNGKey(0)
    k_param, k_x = jax.random.split(key)
    params = init_params(k_param, cfg)

    B = 2
    x = jax.random.normal(k_x, (B, cfg["in_chans"], cfg["img_size"], cfg["img_size"]),
                          jnp.float32)

    fwd = jax.jit(lambda xx, pp: medsam_encoder_forward(xx, pp, cfg))
    z3, z6, z9, z12, x_neck = fwd(x, params)
    for o in (z3, z6, z9, z12, x_neck):
        jax.block_until_ready(o)

    Hp = cfg["img_size"] // cfg["patch_size"]
    assert z3.shape == (B, cfg["embed_dim"], Hp, Hp)
    assert z6.shape == (B, cfg["embed_dim"], Hp, Hp)
    assert z9.shape == (B, cfg["embed_dim"], Hp, Hp)
    assert z12.shape == (B, cfg["embed_dim"], Hp, Hp)
    assert x_neck.shape == (B, cfg["out_chans_pretrain"], Hp, Hp)
    for o in (z3, z6, z9, z12, x_neck):
        assert bool(jnp.all(jnp.isfinite(o)))
    print("KERNEL_OK")
</pallas_src>

<mosaic_0001>
module attributes {stable_mosaic.version = 11 : i64} {
  func.func @_matmul_kernel(%arg0: i32, %arg1: i32, %arg2: i32, %arg3: memref<32x384xf32, #tpu.memory_space<vmem>>, %arg4: memref<384x32xbf16, #tpu.memory_space<vmem>>, %arg5: memref<1x32xf32, #tpu.memory_space<vmem>>, %arg6: memref<32x32xf32, #tpu.memory_space<vmem>>, %arg7: memref<32x32xf32, #tpu.memory_space<vmem>>) attributes {dimension_semantics = [#tpu.dimension_semantics<parallel>, #tpu.dimension_semantics<parallel>, #tpu.dimension_semantics<arbitrary>], iteration_bounds = array<i64: 1, 1, 2>, scalar_prefetch = 0 : i64, scratch_operands = 1 : i64, tpu.core_type = #tpu.core_type<tc>, window_params = [{transform_indices = @transform_0, window_bounds = array<i64: 32, 384>}, {transform_indices = @transform_1, window_bounds = array<i64: 384, 32>}, {transform_indices = @transform_2, window_bounds = array<i64: 1, 32>}, {transform_indices = @transform_3, window_bounds = array<i64: 32, 32>}]} {
    %c0_i32 = arith.constant 0 : i32
    %0 = arith.cmpi eq, %arg2, %c0_i32 : i32
    %1 = arith.extui %0 : i1 to i32
    %c0_i32_0 = arith.constant 0 : i32
    %2 = arith.cmpi ne, %1, %c0_i32_0 : i32
    scf.if %2 {
      %cst_9 = arith.constant 0.000000e+00 : f32
      %13 = vector.broadcast %cst_9 : f32 to vector<32x32xf32>
      %c0_10 = arith.constant 0 : index
      %c0_11 = arith.constant 0 : index
      %14 = vector.load %arg7[%c0_10, %c0_11] : memref<32x32xf32, #tpu.memory_space<vmem>>, vector<32x32xf32>
      tpu.vector_store %arg7[%c0_10, %c0_11], %13 {strides = array<i32>} : memref<32x32xf32, #tpu.memory_space<vmem>>, vector<32x32xf32>,
    } else {
    }
    %c0 = arith.constant 0 : index
    %c0_1 = arith.constant 0 : index
    %3 = vector.load %arg7[%c0, %c0_1] : memref<32x32xf32, #tpu.memory_space<vmem>>, vector<32x32xf32>
    %c0_2 = arith.constant 0 : index
    %c0_3 = arith.constant 0 : index
    %4 = vector.load %arg3[%c0_2, %c0_3] : memref<32x384xf32, #tpu.memory_space<vmem>>, vector<32x384xf32>
    %5 = arith.truncf %4 : vector<32x384xf32> to vector<32x384xbf16>
    %c0_4 = arith.constant 0 : index
    %c0_5 = arith.constant 0 : index
    %6 = vector.load %arg4[%c0_4, %c0_5] : memref<384x32xbf16, #tpu.memory_space<vmem>>, vector<384x32xbf16>
    %cst = arith.constant dense<0.000000e+00> : vector<32x32xf32>
    %7 = tpu.matmul %5, %6, %cst {dimension_numbers = #tpu.dot_dimension_numbers<[1], [0], [0], [1], [0, 0, 1, 1], [], []>} : vector<32x384xbf16>, vector<384x32xbf16>, vector<32x32xf32> -> vector<32x32xf32>
    %8 = arith.addf %3, %7 : vector<32x32xf32>
    %c0_6 = arith.constant 0 : index
    %c0_7 = arith.constant 0 : index
    %9 = vector.load %arg7[%c0_6, %c0_7] : memref<32x32xf32, #tpu.memory_space<vmem>>, vector<32x32xf32>
    tpu.vector_store %arg7[%c0_6, %c0_7], %8 {strides = array<i32>} : memref<32x32xf32, #tpu.memory_space<vmem>>, vector<32x32xf32>,
    %c1_i32 = arith.constant 1 : i32
    %10 = arith.cmpi eq, %arg2, %c1_i32 : i32
    %11 = arith.extui %10 : i1 to i32
    %c0_i32_8 = arith.constant 0 : i32
    %12 = arith.cmpi ne, %11, %c0_i32_8 : i32
    scf.if %12 {
      %c0_9 = arith.constant 0 : index
      %c0_10 = arith.constant 0 : index
      %13 = vector.load %arg7[%c0_9, %c0_10] : memref<32x32xf32, #tpu.memory_space<vmem>>, vector<32x32xf32>
      %c0_11 = arith.constant 0 : index
      %c0_12 = arith.constant 0 : index
      %14 = vector.load %arg5[%c0_11, %c0_12] : memref<1x32xf32, #tpu.memory_space<vmem>>, vector<1x32xf32>
      %15 = vector.broadcast %14 : vector<1x32xf32> to vector<32x32xf32>
      %16 = arith.addf %13, %15 : vector<32x32xf32>
      %c0_13 = arith.constant 0 : index
      %c0_14 = arith.constant 0 : index
      %17 = vector.load %arg6[%c0_13, %c0_14] : memref<32x32xf32, #tpu.memory_space<vmem>>, vector<32x32xf32>
      tpu.vector_store %arg6[%c0_13, %c0_14], %16 {strides = array<i32>} : memref<32x32xf32, #tpu.memory_space<vmem>>, vector<32x32xf32>,
    } else {
    }
    return
  }
  func.func @transform_0(%arg0: i32, %arg1: i32, %arg2: i32) -> (i32, i32) {
    %c0_i32 = arith.constant 0 : i32
    return %arg0, %arg2 : i32, i32
  }
  func.func @transform_1(%arg0: i32, %arg1: i32, %arg2: i32) -> (i32, i32) {
    %c0_i32 = arith.constant 0 : i32
    return %arg2, %arg1 : i32, i32
  }
  func.func @transform_2(%arg0: i32, %arg1: i32, %arg2: i32) -> (i32, i32) {
    %c0_i32 = arith.constant 0 : i32
    %c0_i32_0 = arith.constant 0 : i32
    return %c0_i32, %arg1 : i32, i32
  }
  func.func @transform_3(%arg0: i32, %arg1: i32, %arg2: i32) -> (i32, i32) {
    %c0_i32 = arith.constant 0 : i32
    return %arg0, %arg1 : i32, i32
  }
}

module attributes {stable_mosaic.version = 11 : i64} {
  func.func @_ln_kernel(%arg0: i32, %arg1: memref<32x32xf32, #tpu.memory_space<vmem>>, %arg2: memref<1x32xf32, #tpu.memory_space<vmem>>, %arg3: memref<1x32xf32, #tpu.memory_space<vmem>>, %arg4: memref<32x32xf32, #tpu.memory_space<vmem>>) attributes {dimension_semantics = [#tpu.dimension_semantics<parallel>], iteration_bounds = array<i64: 1>, scalar_prefetch = 0 : i64, scratch_operands = 0 : i64, tpu.core_type = #tpu.core_type<tc>, window_params = [{transform_indices = @transform_0, window_bounds = array<i64: 32, 32>}, {pipeline_mode = #tpu.pipeline_mode<synchronous>, transform_indices = @transform_1, window_bounds = array<i64: 1, 32>}, {pipeline_mode = #tpu.pipeline_mode<synchronous>, transform_indices = @transform_2, window_bounds = array<i64: 1, 32>}, {transform_indices = @transform_3, window_bounds = array<i64: 32, 32>}]} {
    %c0 = arith.constant 0 : index
    %c0_0 = arith.constant 0 : index
    %0 = vector.load %arg1[%c0, %c0_0] : memref<32x32xf32, #tpu.memory_space<vmem>>, vector<32x32xf32>
    %cst = arith.constant dense<0.000000e+00> : vector<32xf32>
    %1 = vector.multi_reduction <add>, %0, %cst [1] : vector<32x32xf32> to vector<32xf32>
    %2 = vector.shape_cast %1 : vector<32xf32> to vector<32x1xf32>
    %cst_1 = arith.constant 3.200000e+01 : f32
    %3 = vector.broadcast %cst_1 : f32 to vector<32x1xf32>
    %4 = arith.divf %2, %3 : vector<32x1xf32>
    %5 = vector.broadcast %4 : vector<32x1xf32> to vector<32x32xf32>
    %6 = arith.subf %0, %5 : vector<32x32xf32>
    %7 = vector.broadcast %4 : vector<32x1xf32> to vector<32x32xf32>
    %8 = arith.subf %0, %7 : vector<32x32xf32>
    %9 = arith.mulf %6, %8 : vector<32x32xf32>
    %cst_2 = arith.constant dense<0.000000e+00> : vector<32xf32>
    %10 = vector.multi_reduction <add>, %9, %cst_2 [1] : vector<32x32xf32> to vector<32xf32>
    %11 = vector.shape_cast %10 : vector<32xf32> to vector<32x1xf32>
    %cst_3 = arith.constant 3.200000e+01 : f32
    %12 = vector.broadcast %cst_3 : f32 to vector<32x1xf32>
    %13 = arith.divf %11, %12 : vector<32x1xf32>
    %14 = vector.broadcast %4 : vector<32x1xf32> to vector<32x32xf32>
    %15 = arith.subf %0, %14 : vector<32x32xf32>
    %cst_4 = arith.constant 9.99999974E-6 : f32
    %16 = vector.broadcast %cst_4 : f32 to vector<32x1xf32>
    %17 = arith.addf %13, %16 : vector<32x1xf32>
    %18 = math.rsqrt %17 : vector<32x1xf32>
    %19 = vector.broadcast %18 : vector<32x1xf32> to vector<32x32xf32>
    %20 = arith.mulf %15, %19 : vector<32x32xf32>
    %c0_5 = arith.constant 0 : index
    %c0_6 = arith.constant 0 : index
    %21 = vector.load %arg2[%c0_5, %c0_6] : memref<1x32xf32, #tpu.memory_space<vmem>>, vector<1x32xf32>
    %22 = vector.broadcast %21 : vector<1x32xf32> to vector<32x32xf32>
    %23 = arith.mulf %20, %22 : vector<32x32xf32>
    %c0_7 = arith.constant 0 : index
    %c0_8 = arith.constant 0 : index
    %24 = vector.load %arg3[%c0_7, %c0_8] : memref<1x32xf32, #tpu.memory_space<vmem>>, vector<1x32xf32>
    %25 = vector.broadcast %24 : vector<1x32xf32> to vector<32x32xf32>
    %26 = arith.addf %23, %25 : vector<32x32xf32>
    %c0_9 = arith.constant 0 : index
    %c0_10 = arith.constant 0 : index
    %27 = vector.load %arg4[%c0_9, %c0_10] : memref<32x32xf32, #tpu.memory_space<vmem>>, vector<32x32xf32>
    tpu.vector_store %arg4[%c0_9, %c0_10], %26 {strides = array<i32>} : memref<32x32xf32, #tpu.memory_space<vmem>>, vector<32x32xf32>,
    return
  }
  func.func @transform_0(%arg0: i32) -> (i32, i32) {
    %c0_i32 = arith.constant 0 : i32
    %c0_i32_0 = arith.constant 0 : i32
    return %arg0, %c0_i32 : i32, i32
  }
  func.func @transform_1(%arg0: i32) -> (i32, i32) {
    %c0_i32 = arith.constant 0 : i32
    %c0_i32_0 = arith.constant 0 : i32
    %c0_i32_1 = arith.constant 0 : i32
    return %c0_i32, %c0_i32_0 : i32, i32
  }
  func.func @transform_2(%arg0: i32) -> (i32, i32) {
    %c0_i32 = arith.constant 0 : i32
    %c0_i32_0 = arith.constant 0 : i32
    %c0_i32_1 = arith.constant 0 : i32
    return %c0_i32, %c0_i32_0 : i32, i32
  }
  func.func @transform_3(%arg0: i32) -> (i32, i32) {
    %c0_i32 = arith.constant 0 : i32
    %c0_i32_0 = arith.constant 0 : i32
    return %arg0, %c0_i32 : i32, i32
  }
}

module attributes {stable_mosaic.version = 11 : i64} {
  func.func @_matmul_kernel(%arg0: i32, %arg1: i32, %arg2: i32, %arg3: memref<32x32xf32, #tpu.memory_space<vmem>>, %arg4: memref<32x96xbf16, #tpu.memory_space<vmem>>, %arg5: memref<1x96xf32, #tpu.memory_space<vmem>>, %arg6: memref<32x96xf32, #tpu.memory_space<vmem>>, %arg7: memref<32x96xf32, #tpu.memory_space<vmem>>) attributes {dimension_semantics = [#tpu.dimension_semantics<parallel>, #tpu.dimension_semantics<parallel>, #tpu.dimension_semantics<arbitrary>], iteration_bounds = array<i64: 1, 1, 1>, scalar_prefetch = 0 : i64, scratch_operands = 1 : i64, tpu.core_type = #tpu.core_type<tc>, window_params = [{transform_indices = @transform_0, window_bounds = array<i64: 32, 32>}, {transform_indices = @transform_1, window_bounds = array<i64: 32, 96>}, {transform_indices = @transform_2, window_bounds = array<i64: 1, 96>}, {transform_indices = @transform_3, window_bounds = array<i64: 32, 96>}]} {
    %c0_i32 = arith.constant 0 : i32
    %0 = arith.cmpi eq, %arg2, %c0_i32 : i32
    %1 = arith.extui %0 : i1 to i32
    %c0_i32_0 = arith.constant 0 : i32
    %2 = arith.cmpi ne, %1, %c0_i32_0 : i32
    scf.if %2 {
      %cst_10 = arith.constant 0.000000e+00 : f32
      %13 = vector.broadcast %cst_10 : f32 to vector<32x96xf32>
      %c0_11 = arith.constant 0 : index
      %c0_12 = arith.constant 0 : index
      %14 = vector.load %arg7[%c0_11, %c0_12] : memref<32x96xf32, #tpu.memory_space<vmem>>, vector<32x96xf32>
      tpu.vector_store %arg7[%c0_11, %c0_12], %13 {strides = array<i32>} : memref<32x96xf32, #tpu.memory_space<vmem>>, vector<32x96xf32>,
    } else {
    }
    %c0 = arith.constant 0 : index
    %c0_1 = arith.constant 0 : index
    %3 = vector.load %arg7[%c0, %c0_1] : memref<32x96xf32, #tpu.memory_space<vmem>>, vector<32x96xf32>
    %c0_2 = arith.constant 0 : index
    %c0_3 = arith.constant 0 : index
    %4 = vector.load %arg3[%c0_2, %c0_3] : memref<32x32xf32, #tpu.memory_space<vmem>>, vector<32x32xf32>
    %5 = arith.truncf %4 : vector<32x32xf32> to vector<32x32xbf16>
    %c0_4 = arith.constant 0 : index
    %c0_5 = arith.constant 0 : index
    %6 = vector.load %arg4[%c0_4, %c0_5] : memref<32x96xbf16, #tpu.memory_space<vmem>>, vector<32x96xbf16>
    %cst = arith.constant dense<0.000000e+00> : vector<32x96xf32>
    %7 = tpu.matmul %5, %6, %cst {dimension_numbers = #tpu.dot_dimension_numbers<[1], [0], [0], [1], [0, 0, 1, 1], [], []>} : vector<32x32xbf16>, vector<32x96xbf16>, vector<32x96xf32> -> vector<32x96xf32>
    %8 = arith.addf %3, %7 : vector<32x96xf32>
    %c0_6 = arith.constant 0 : index
    %c0_7 = arith.constant 0 : index
    %9 = vector.load %arg7[%c0_6, %c0_7] : memref<32x96xf32, #tpu.memory_space<vmem>>, vector<32x96xf32>
    tpu.vector_store %arg7[%c0_6, %c0_7], %8 {strides = array<i32>} : memref<32x96xf32, #tpu.memory_space<vmem>>, vector<32x96xf32>,
    %c0_i32_8 = arith.constant 0 : i32
    %10 = arith.cmpi eq, %arg2, %c0_i32_8 : i32
    %11 = arith.extui %10 : i1 to i32
    %c0_i32_9 = arith.constant 0 : i32
    %12 = arith.cmpi ne, %11, %c0_i32_9 : i32
    scf.if %12 {
      %c0_10 = arith.constant 0 : index
      %c0_11 = arith.constant 0 : index
      %13 = vector.load %arg7[%c0_10, %c0_11] : memref<32x96xf32, #tpu.memory_space<vmem>>, vector<32x96xf32>
      %c0_12 = arith.constant 0 : index
      %c0_13 = arith.constant 0 : index
      %14 = vector.load %arg5[%c0_12, %c0_13] : memref<1x96xf32, #tpu.memory_space<vmem>>, vector<1x96xf32>
      %15 = vector.broadcast %14 : vector<1x96xf32> to vector<32x96xf32>
      %16 = arith.addf %13, %15 : vector<32x96xf32>
      %c0_14 = arith.constant 0 : index
      %c0_15 = arith.constant 0 : index
      %17 = vector.load %arg6[%c0_14, %c0_15] : memref<32x96xf32, #tpu.memory_space<vmem>>, vector<32x96xf32>
      tpu.vector_store %arg6[%c0_14, %c0_15], %16 {strides = array<i32>} : memref<32x96xf32, #tpu.memory_space<vmem>>, vector<32x96xf32>,
    } else {
    }
    return
  }
  func.func @transform_0(%arg0: i32, %arg1: i32, %arg2: i32) -> (i32, i32) {
    %c0_i32 = arith.constant 0 : i32
    return %arg0, %arg2 : i32, i32
  }
  func.func @transform_1(%arg0: i32, %arg1: i32, %arg2: i32) -> (i32, i32) {
    %c0_i32 = arith.constant 0 : i32
    return %arg2, %arg1 : i32, i32
  }
  func.func @transform_2(%arg0: i32, %arg1: i32, %arg2: i32) -> (i32, i32) {
    %c0_i32 = arith.constant 0 : i32
    %c0_i32_0 = arith.constant 0 : i32
    return %c0_i32, %arg1 : i32, i32
  }
  func.func @transform_3(%arg0: i32, %arg1: i32, %arg2: i32) -> (i32, i32) {
    %c0_i32 = arith.constant 0 : i32
    return %arg0, %arg1 : i32, i32
  }
}

module attributes {stable_mosaic.version = 11 : i64} {
  func.func @_matmul_kernel(%arg0: i32, %arg1: i32, %arg2: i32, %arg3: memref<32x32xf32, #tpu.memory_space<vmem>>, %arg4: memref<32x32xbf16, #tpu.memory_space<vmem>>, %arg5: memref<1x32xf32, #tpu.memory_space<vmem>>, %arg6: memref<32x32xf32, #tpu.memory_space<vmem>>, %arg7: memref<32x32xf32, #tpu.memory_space<vmem>>, %arg8: memref<32x32xf32, #tpu.memory_space<vmem>>) attributes {dimension_semantics = [#tpu.dimension_semantics<parallel>, #tpu.dimension_semantics<parallel>, #tpu.dimension_semantics<arbitrary>], iteration_bounds = array<i64: 1, 1, 1>, scalar_prefetch = 0 : i64, scratch_operands = 1 : i64, tpu.core_type = #tpu.core_type<tc>, window_params = [{transform_indices = @transform_0, window_bounds = array<i64: 32, 32>}, {transform_indices = @transform_1, window_bounds = array<i64: 32, 32>}, {transform_indices = @transform_2, window_bounds = array<i64: 1, 32>}, {transform_indices = @transform_3, window_bounds = array<i64: 32, 32>}, {transform_indices = @transform_4, window_bounds = array<i64: 32, 32>}]} {
    %c0_i32 = arith.constant 0 : i32
    %0 = arith.cmpi eq, %arg2, %c0_i32 : i32
    %1 = arith.extui %0 : i1 to i32
    %c0_i32_0 = arith.constant 0 : i32
    %2 = arith.cmpi ne, %1, %c0_i32_0 : i32
    scf.if %2 {
      %cst_10 = arith.constant 0.000000e+00 : f32
      %13 = vector.broadcast %cst_10 : f32 to vector<32x32xf32>
      %c0_11 = arith.constant 0 : index
      %c0_12 = arith.constant 0 : index
      %14 = vector.load %arg8[%c0_11, %c0_12] : memref<32x32xf32, #tpu.memory_space<vmem>>, vector<32x32xf32>
      tpu.vector_store %arg8[%c0_11, %c0_12], %13 {strides = array<i32>} : memref<32x32xf32, #tpu.memory_space<vmem>>, vector<32x32xf32>,
    } else {
    }
    %c0 = arith.constant 0 : index
    %c0_1 = arith.constant 0 : index
    %3 = vector.load %arg8[%c0, %c0_1] : memref<32x32xf32, #tpu.memory_space<vmem>>, vector<32x32xf32>
    %c0_2 = arith.constant 0 : index
    %c0_3 = arith.constant 0 : index
    %4 = vector.load %arg3[%c0_2, %c0_3] : memref<32x32xf32, #tpu.memory_space<vmem>>, vector<32x32xf32>
    %5 = arith.truncf %4 : vector<32x32xf32> to vector<32x32xbf16>
    %c0_4 = arith.constant 0 : index
    %c0_5 = arith.constant 0 : index
    %6 = vector.load %arg4[%c0_4, %c0_5] : memref<32x32xbf16, #tpu.memory_space<vmem>>, vector<32x32xbf16>
    %cst = arith.constant dense<0.000000e+00> : vector<32x32xf32>
    %7 = tpu.matmul %5, %6, %cst {dimension_numbers = #tpu.dot_dimension_numbers<[1], [0], [0], [1], [0, 0, 1, 1], [], []>} : vector<32x32xbf16>, vector<32x32xbf16>, vector<32x32xf32> -> vector<32x32xf32>
    %8 = arith.addf %3, %7 : vector<32x32xf32>
    %c0_6 = arith.constant 0 : index
    %c0_7 = arith.constant 0 : index
    %9 = vector.load %arg8[%c0_6, %c0_7] : memref<32x32xf32, #tpu.memory_space<vmem>>, vector<32x32xf32>
    tpu.vector_store %arg8[%c0_6, %c0_7], %8 {strides = array<i32>} : memref<32x32xf32, #tpu.memory_space<vmem>>, vector<32x32xf32>,
    %c0_i32_8 = arith.constant 0 : i32
    %10 = arith.cmpi eq, %arg2, %c0_i32_8 : i32
    %11 = arith.extui %10 : i1 to i32
    %c0_i32_9 = arith.constant 0 : i32
    %12 = arith.cmpi ne, %11, %c0_i32_9 : i32
    scf.if %12 {
      %c0_10 = arith.constant 0 : index
      %c0_11 = arith.constant 0 : index
      %13 = vector.load %arg8[%c0_10, %c0_11] : memref<32x32xf32, #tpu.memory_space<vmem>>, vector<32x32xf32>
      %c0_12 = arith.constant 0 : index
      %c0_13 = arith.constant 0 : index
      %14 = vector.load %arg5[%c0_12, %c0_13] : memref<1x32xf32, #tpu.memory_space<vmem>>, vector<1x32xf32>
      %15 = vector.broadcast %14 : vector<1x32xf32> to vector<32x32xf32>
      %16 = arith.addf %13, %15 : vector<32x32xf32>
      %c0_14 = arith.constant 0 : index
      %c0_15 = arith.constant 0 : index
      %17 = vector.load %arg6[%c0_14, %c0_15] : memref<32x32xf32, #tpu.memory_space<vmem>>, vector<32x32xf32>
      %18 = arith.addf %16, %17 : vector<32x32xf32>
      %c0_16 = arith.constant 0 : index
      %c0_17 = arith.constant 0 : index
      %19 = vector.load %arg7[%c0_16, %c0_17] : memref<32x32xf32, #tpu.memory_space<vmem>>, vector<32x32xf32>
      tpu.vector_store %arg7[%c0_16, %c0_17], %18 {strides = array<i32>} : memref<32x32xf32, #tpu.memory_space<vmem>>, vector<32x32xf32>,
    } else {
    }
    return
  }
  func.func @transform_0(%arg0: i32, %arg1: i32, %arg2: i32) -> (i32, i32) {
    %c0_i32 = arith.constant 0 : i32
    return %arg0, %arg2 : i32, i32
  }
  func.func @transform_1(%arg0: i32, %arg1: i32, %arg2: i32) -> (i32, i32) {
    %c0_i32 = arith.constant 0 : i32
    return %arg2, %arg1 : i32, i32
  }
  func.func @transform_2(%arg0: i32, %arg1: i32, %arg2: i32) -> (i32, i32) {
    %c0_i32 = arith.constant 0 : i32
    %c0_i32_0 = arith.constant 0 : i32
    return %c0_i32, %arg1 : i32, i32
  }
  func.func @transform_3(%arg0: i32, %arg1: i32, %arg2: i32) -> (i32, i32) {
    %c0_i32 = arith.constant 0 : i32
    return %arg0, %arg1 : i32, i32
  }
  func.func @transform_4(%arg0: i32, %arg1: i32, %arg2: i32) -> (i32, i32) {
    %c0_i32 = arith.constant 0 : i32
    return %arg0, %arg1 : i32, i32
  }
}

module attributes {stable_mosaic.version = 11 : i64} {
  func.func @_flash_attn_kernel(%arg0: i32, %arg1: i32, %arg2: i32, %arg3: memref<4x16x8xf32, #tpu.memory_space<vmem>>, %arg4: memref<4x16x8xf32, #tpu.memory_space<vmem>>, %arg5: memref<4x16x8xf32, #tpu.memory_space<vmem>>, %arg6: memref<4x16x8xf32, #tpu.memory_space<vmem>>, %arg7: memref<4x16x1xf32, #tpu.memory_space<vmem>>, %arg8: memref<4x16x1xf32, #tpu.memory_space<vmem>>, %arg9: memref<4x16x8xf32, #tpu.memory_space<vmem>>) attributes {dimension_semantics = [#tpu.dimension_semantics<parallel>, #tpu.dimension_semantics<parallel>, #tpu.dimension_semantics<arbitrary>], iteration_bounds = array<i64: 2, 1, 1>, scalar_prefetch = 0 : i64, scratch_operands = 3 : i64, tpu.core_type = #tpu.core_type<tc>, window_params = [{transform_indices = @transform_0, window_bounds = array<i64: 4, 16, 8>}, {transform_indices = @transform_1, window_bounds = array<i64: 4, 16, 8>}, {transform_indices = @transform_2, window_bounds = array<i64: 4, 16, 8>}, {transform_indices = @transform_3, window_bounds = array<i64: 4, 16, 8>}]} {
    %c0_i32 = arith.constant 0 : i32
    %0 = arith.cmpi eq, %arg2, %c0_i32 : i32
    %1 = arith.extui %0 : i1 to i32
    %c0_i32_0 = arith.constant 0 : i32
    %2 = arith.cmpi ne, %1, %c0_i32_0 : i32
    scf.if %2 {
      %cst_33 = arith.constant 0xFF800000 : f32
      %38 = vector.broadcast %cst_33 : f32 to vector<4x16x1xf32>
      %c0_34 = arith.constant 0 : index
      %c0_35 = arith.constant 0 : index
      %c0_36 = arith.constant 0 : index
      %39 = vector.load %arg7[%c0_34, %c0_35, %c0_36] : memref<4x16x1xf32, #tpu.memory_space<vmem>>, vector<4x16x1xf32>
      tpu.vector_store %arg7[%c0_34, %c0_35, %c0_36], %38 {strides = array<i32>} : memref<4x16x1xf32, #tpu.memory_space<vmem>>, vector<4x16x1xf32>,
      %cst_37 = arith.constant 0.000000e+00 : f32
      %40 = vector.broadcast %cst_37 : f32 to vector<4x16x1xf32>
      %c0_38 = arith.constant 0 : index
      %c0_39 = arith.constant 0 : index
      %c0_40 = arith.constant 0 : index
      %41 = vector.load %arg8[%c0_38, %c0_39, %c0_40] : memref<4x16x1xf32, #tpu.memory_space<vmem>>, vector<4x16x1xf32>
      tpu.vector_store %arg8[%c0_38, %c0_39, %c0_40], %40 {strides = array<i32>} : memref<4x16x1xf32, #tpu.memory_space<vmem>>, vector<4x16x1xf32>,
      %cst_41 = arith.constant 0.000000e+00 : f32
      %42 = vector.broadcast %cst_41 : f32 to vector<4x16x8xf32>
      %c0_42 = arith.constant 0 : index
      %c0_43 = arith.constant 0 : index
      %c0_44 = arith.constant 0 : index
      %43 = vector.load %arg9[%c0_42, %c0_43, %c0_44] : memref<4x16x8xf32, #tpu.memory_space<vmem>>, vector<4x16x8xf32>
      tpu.vector_store %arg9[%c0_42, %c0_43, %c0_44], %42 {strides = array<i32>} : memref<4x16x8xf32, #tpu.memory_space<vmem>>, vector<4x16x8xf32>,
    } else {
    }
    %c0 = arith.constant 0 : index
    %c0_1 = arith.constant 0 : index
    %c0_2 = arith.constant 0 : index
    %3 = vector.load %arg3[%c0, %c0_1, %c0_2] : memref<4x16x8xf32, #tpu.memory_space<vmem>>, vector<4x16x8xf32>
    %cst = arith.constant 0.353553385 : f32
    %4 = vector.broadcast %cst : f32 to vector<4x16x8xf32>
    %5 = arith.mulf %3, %4 : vector<4x16x8xf32>
    %6 = arith.truncf %5 : vector<4x16x8xf32> to vector<4x16x8xbf16>
    %c0_3 = arith.constant 0 : index
    %c0_4 = arith.constant 0 : index
    %c0_5 = arith.constant 0 : index
    %7 = vector.load %arg4[%c0_3, %c0_4, %c0_5] : memref<4x16x8xf32, #tpu.memory_space<vmem>>, vector<4x16x8xf32>
    %8 = arith.truncf %7 : vector<4x16x8xf32> to vector<4x16x8xbf16>
    %c0_6 = arith.constant 0 : index
    %c0_7 = arith.constant 0 : index
    %c0_8 = arith.constant 0 : index
    %9 = vector.load %arg5[%c0_6, %c0_7, %c0_8] : memref<4x16x8xf32, #tpu.memory_space<vmem>>, vector<4x16x8xf32>
    %10 = arith.truncf %9 : vector<4x16x8xf32> to vector<4x16x8xbf16>
    "tpu.trace_start"() <{level = 10 : i32, message = "hqd,hkd->hqk"}> : () -> ()
    %cst_9 = arith.constant dense<0.000000e+00> : vector<4x16x16xf32>
    %11 = tpu.matmul %6, %8, %cst_9 {dimension_numbers = #tpu.dot_dimension_numbers<[2], [2], [1], [1], [0, 0, 0, 1, 1, 1], [0], [0]>} : vector<4x16x8xbf16>, vector<4x16x8xbf16>, vector<4x16x16xf32> -> vector<4x16x16xf32>
    "tpu.trace_stop"() : () -> ()
    %c0_10 = arith.constant 0 : index
    %c0_11 = arith.constant 0 : index
    %c0_12 = arith.constant 0 : index
    %12 = vector.load %arg7[%c0_10, %c0_11, %c0_12] : memref<4x16x1xf32, #tpu.memory_space<vmem>>, vector<4x16x1xf32>
    %cst_13 = arith.constant dense<0xFF800000> : vector<4x16xf32>
    %13 = vector.multi_reduction <maximumf>, %11, %cst_13 [2] : vector<4x16x16xf32> to vector<4x16xf32>
    %14 = vector.shape_cast %13 : vector<4x16xf32> to vector<4x16x1xf32>
    %15 = arith.maximumf %12, %14 : vector<4x16x1xf32>
    %16 = arith.subf %12, %15 : vector<4x16x1xf32>
    %17 = math.exp %16 : vector<4x16x1xf32>
    %18 = vector.broadcast %15 : vector<4x16x1xf32> to vector<4x16x16xf32>
    %19 = arith.subf %11, %18 : vector<4x16x16xf32>
    %20 = math.exp %19 : vector<4x16x16xf32>
    %c0_14 = arith.constant 0 : index
    %c0_15 = arith.constant 0 : index
    %c0_16 = arith.constant 0 : index
    %21 = vector.load %arg8[%c0_14, %c0_15, %c0_16] : memref<4x16x1xf32, #tpu.memory_space<vmem>>, vector<4x16x1xf32>
    %22 = arith.mulf %17, %21 : vector<4x16x1xf32>
    %cst_17 = arith.constant dense<0.000000e+00> : vector<4x16xf32>
    %23 = vector.multi_reduction <add>, %20, %cst_17 [2] : vector<4x16x16xf32> to vector<4x16xf32>
    %24 = vector.shape_cast %23 : vector<4x16xf32> to vector<4x16x1xf32>
    %25 = arith.addf %22, %24 : vector<4x16x1xf32>
    %c0_18 = arith.constant 0 : index
    %c0_19 = arith.constant 0 : index
    %c0_20 = arith.constant 0 : index
    %26 = vector.load %arg8[%c0_18, %c0_19, %c0_20] : memref<4x16x1xf32, #tpu.memory_space<vmem>>, vector<4x16x1xf32>
    tpu.vector_store %arg8[%c0_18, %c0_19, %c0_20], %25 {strides = array<i32>} : memref<4x16x1xf32, #tpu.memory_space<vmem>>, vector<4x16x1xf32>,
    %c0_21 = arith.constant 0 : index
    %c0_22 = arith.constant 0 : index
    %c0_23 = arith.constant 0 : index
    %27 = vector.load %arg9[%c0_21, %c0_22, %c0_23] : memref<4x16x8xf32, #tpu.memory_space<vmem>>, vector<4x16x8xf32>
    %28 = vector.broadcast %17 : vector<4x16x1xf32> to vector<4x16x8xf32>
    %29 = arith.mulf %28, %27 : vector<4x16x8xf32>
    %30 = arith.truncf %20 : vector<4x16x16xf32> to vector<4x16x16xbf16>
    "tpu.trace_start"() <{level = 10 : i32, message = "hqk,hkd->hqd"}> : () -> ()
    %cst_24 = arith.constant dense<0.000000e+00> : vector<4x16x8xf32>
    %31 = tpu.matmul %30, %10, %cst_24 {dimension_numbers = #tpu.dot_dimension_numbers<[2], [1], [1], [2], [0, 0, 0, 1, 1, 2], [0], [0]>} : vector<4x16x16xbf16>, vector<4x16x8xbf16>, vector<4x16x8xf32> -> vector<4x16x8xf32>
    "tpu.trace_stop"() : () -> ()
    %32 = arith.addf %29, %31 : vector<4x16x8xf32>
    %c0_25 = arith.constant 0 : index
    %c0_26 = arith.constant 0 : index
    %c0_27 = arith.constant 0 : index
    %33 = vector.load %arg9[%c0_25, %c0_26, %c0_27] : memref<4x16x8xf32, #tpu.memory_space<vmem>>, vector<4x16x8xf32>
    tpu.vector_store %arg9[%c0_25, %c0_26, %c0_27], %32 {strides = array<i32>} : memref<4x16x8xf32, #tpu.memory_space<vmem>>, vector<4x16x8xf32>,
    %c0_28 = arith.constant 0 : index
    %c0_29 = arith.constant 0 : index
    %c0_30 = arith.constant 0 : index
    %34 = vector.load %arg7[%c0_28, %c0_29, %c0_30] : memref<4x16x1xf32, #tpu.memory_space<vmem>>, vector<4x16x1xf32>
    tpu.vector_store %arg7[%c0_28, %c0_29, %c0_30], %15 {strides = array<i32>} : memref<4x16x1xf32, #tpu.memory_space<vmem>>, vector<4x16x1xf32>,
    %c0_i32_31 = arith.constant 0 : i32
    %35 = arith.cmpi eq, %arg2, %c0_i32_31 : i32
    %36 = arith.extui %35 : i1 to i32
    %c0_i32_32 = arith.constant 0 : i32
    %37 = arith.cmpi ne, %36, %c0_i32_32 : i32
    scf.if %37 {
      %c0_33 = arith.constant 0 : index
      %c0_34 = arith.constant 0 : index
      %c0_35 = arith.constant 0 : index
      %38 = vector.load %arg8[%c0_33, %c0_34, %c0_35] : memref<4x16x1xf32, #tpu.memory_space<vmem>>, vector<4x16x1xf32>
      %39 = tpu.reciprocal %38 {approx = true} : vector<4x16x1xf32> -> vector<4x16x1xf32>
      %c0_36 = arith.constant 0 : index
      %c0_37 = arith.constant 0 : index
      %c0_38 = arith.constant 0 : index
      %40 = vector.load %arg9[%c0_36, %c0_37, %c0_38] : memref<4x16x8xf32, #tpu.memory_space<vmem>>, vector<4x16x8xf32>
      %41 = vector.broadcast %39 : vector<4x16x1xf32> to vector<4x16x8xf32>
      %42 = arith.mulf %40, %41 : vector<4x16x8xf32>
      %c0_39 = arith.constant 0 : index
      %c0_40 = arith.constant 0 : index
      %c0_41 = arith.constant 0 : index
      %43 = vector.load %arg6[%c0_39, %c0_40, %c0_41] : memref<4x16x8xf32, #tpu.memory_space<vmem>>, vector<4x16x8xf32>
      tpu.vector_store %arg6[%c0_39, %c0_40, %c0_41], %42 {strides = array<i32>} : memref<4x16x8xf32, #tpu.memory_space<vmem>>, vector<4x16x8xf32>,
    } else {
    }
    return
  }
  func.func @transform_0(%arg0: i32, %arg1: i32, %arg2: i32) -> (i32, i32, i32) {
    %c0_i32 = arith.constant 0 : i32
    %c0_i32_0 = arith.constant 0 : i32
    return %arg0, %arg1, %c0_i32 : i32, i32, i32
  }
  func.func @transform_1(%arg0: i32, %arg1: i32, %arg2: i32) -> (i32, i32, i32) {
    %c0_i32 = arith.constant 0 : i32
    %c0_i32_0 = arith.constant 0 : i32
    return %arg0, %arg2, %c0_i32 : i32, i32, i32
  }
  func.func @transform_2(%arg0: i32, %arg1: i32, %arg2: i32) -> (i32, i32, i32) {
    %c0_i32 = arith.constant 0 : i32
    %c0_i32_0 = arith.constant 0 : i32
    return %arg0, %arg2, %c0_i32 : i32, i32, i32
  }
  func.func @transform_3(%arg0: i32, %arg1: i32, %arg2: i32) -> (i32, i32, i32) {
    %c0_i32 = arith.constant 0 : i32
    %c0_i32_0 = arith.constant 0 : i32
    return %arg0, %arg1, %c0_i32 : i32, i32, i32
  }
}

module attributes {stable_mosaic.version = 11 : i64} {
  func.func @_matmul_kernel(%arg0: i32, %arg1: i32, %arg2: i32, %arg3: memref<32x32xf32, #tpu.memory_space<vmem>>, %arg4: memref<32x128xbf16, #tpu.memory_space<vmem>>, %arg5: memref<1x128xf32, #tpu.memory_space<vmem>>, %arg6: memref<32x128xf32, #tpu.memory_space<vmem>>, %arg7: memref<32x128xf32, #tpu.memory_space<vmem>>) attributes {dimension_semantics = [#tpu.dimension_semantics<parallel>, #tpu.dimension_semantics<parallel>, #tpu.dimension_semantics<arbitrary>], iteration_bounds = array<i64: 1, 1, 1>, scalar_prefetch = 0 : i64, scratch_operands = 1 : i64, tpu.core_type = #tpu.core_type<tc>, window_params = [{transform_indices = @transform_0, window_bounds = array<i64: 32, 32>}, {transform_indices = @transform_1, window_bounds = array<i64: 32, 128>}, {transform_indices = @transform_2, window_bounds = array<i64: 1, 128>}, {transform_indices = @transform_3, window_bounds = array<i64: 32, 128>}]} {
    %c0_i32 = arith.constant 0 : i32
    %0 = arith.cmpi eq, %arg2, %c0_i32 : i32
    %1 = arith.extui %0 : i1 to i32
    %c0_i32_0 = arith.constant 0 : i32
    %2 = arith.cmpi ne, %1, %c0_i32_0 : i32
    scf.if %2 {
      %cst_10 = arith.constant 0.000000e+00 : f32
      %13 = vector.broadcast %cst_10 : f32 to vector<32x128xf32>
      %c0_11 = arith.constant 0 : index
      %c0_12 = arith.constant 0 : index
      %14 = vector.load %arg7[%c0_11, %c0_12] : memref<32x128xf32, #tpu.memory_space<vmem>>, vector<32x128xf32>
      tpu.vector_store %arg7[%c0_11, %c0_12], %13 {strides = array<i32>} : memref<32x128xf32, #tpu.memory_space<vmem>>, vector<32x128xf32>,
    } else {
    }
    %c0 = arith.constant 0 : index
    %c0_1 = arith.constant 0 : index
    %3 = vector.load %arg7[%c0, %c0_1] : memref<32x128xf32, #tpu.memory_space<vmem>>, vector<32x128xf32>
    %c0_2 = arith.constant 0 : index
    %c0_3 = arith.constant 0 : index
    %4 = vector.load %arg3[%c0_2, %c0_3] : memref<32x32xf32, #tpu.memory_space<vmem>>, vector<32x32xf32>
    %5 = arith.truncf %4 : vector<32x32xf32> to vector<32x32xbf16>
    %c0_4 = arith.constant 0 : index
    %c0_5 = arith.constant 0 : index
    %6 = vector.load %arg4[%c0_4, %c0_5] : memref<32x128xbf16, #tpu.memory_space<vmem>>, vector<32x128xbf16>
    %cst = arith.constant dense<0.000000e+00> : vector<32x128xf32>
    %7 = tpu.matmul %5, %6, %cst {dimension_numbers = #tpu.dot_dimension_numbers<[1], [0], [0], [1], [0, 0, 1, 1], [], []>} : vector<32x32xbf16>, vector<32x128xbf16>, vector<32x128xf32> -> vector<32x128xf32>
    %8 = arith.addf %3, %7 : vector<32x128xf32>
    %c0_6 = arith.constant 0 : index
    %c0_7 = arith.constant 0 : index
    %9 = vector.load %arg7[%c0_6, %c0_7] : memref<32x128xf32, #tpu.memory_space<vmem>>, vector<32x128xf32>
    tpu.vector_store %arg7[%c0_6, %c0_7], %8 {strides = array<i32>} : memref<32x128xf32, #tpu.memory_space<vmem>>, vector<32x128xf32>,
    %c0_i32_8 = arith.constant 0 : i32
    %10 = arith.cmpi eq, %arg2, %c0_i32_8 : i32
    %11 = arith.extui %10 : i1 to i32
    %c0_i32_9 = arith.constant 0 : i32
    %12 = arith.cmpi ne, %11, %c0_i32_9 : i32
    scf.if %12 {
      %c0_10 = arith.constant 0 : index
      %c0_11 = arith.constant 0 : index
      %13 = vector.load %arg7[%c0_10, %c0_11] : memref<32x128xf32, #tpu.memory_space<vmem>>, vector<32x128xf32>
      %c0_12 = arith.constant 0 : index
      %c0_13 = arith.constant 0 : index
      %14 = vector.load %arg5[%c0_12, %c0_13] : memref<1x128xf32, #tpu.memory_space<vmem>>, vector<1x128xf32>
      %15 = vector.broadcast %14 : vector<1x128xf32> to vector<32x128xf32>
      %16 = arith.addf %13, %15 : vector<32x128xf32>
      %cst_14 = arith.constant 5.000000e-01 : f32
      %17 = vector.broadcast %cst_14 : f32 to vector<32x128xf32>
      %18 = arith.mulf %17, %16 : vector<32x128xf32>
      %cst_15 = arith.constant 4.471500e-02 : f32
      %19 = vector.broadcast %cst_15 : f32 to vector<32x128xf32>
      %20 = arith.mulf %19, %16 : vector<32x128xf32>
      %21 = arith.mulf %20, %16 : vector<32x128xf32>
      %22 = arith.mulf %21, %16 : vector<32x128xf32>
      %23 = arith.addf %16, %22 : vector<32x128xf32>
      %cst_16 = arith.constant 0.797884583 : f32
      %24 = vector.broadcast %cst_16 : f32 to vector<32x128xf32>
      %25 = arith.mulf %24, %23 : vector<32x128xf32>
      %26 = math.tanh %25 : vector<32x128xf32>
      %cst_17 = arith.constant 1.000000e+00 : f32
      %27 = vector.broadcast %cst_17 : f32 to vector<32x128xf32>
      %28 = arith.addf %27, %26 : vector<32x128xf32>
      %29 = arith.mulf %18, %28 : vector<32x128xf32>
      %c0_18 = arith.constant 0 : index
      %c0_19 = arith.constant 0 : index
      %30 = vector.load %arg6[%c0_18, %c0_19] : memref<32x128xf32, #tpu.memory_space<vmem>>, vector<32x128xf32>
      tpu.vector_store %arg6[%c0_18, %c0_19], %29 {strides = array<i32>} : memref<32x128xf32, #tpu.memory_space<vmem>>, vector<32x128xf32>,
    } else {
    }
    return
  }
  func.func @transform_0(%arg0: i32, %arg1: i32, %arg2: i32) -> (i32, i32) {
    %c0_i32 = arith.constant 0 : i32
    return %arg0, %arg2 : i32, i32
  }
  func.func @transform_1(%arg0: i32, %arg1: i32, %arg2: i32) -> (i32, i32) {
    %c0_i32 = arith.constant 0 : i32
    return %arg2, %arg1 : i32, i32
  }
  func.func @transform_2(%arg0: i32, %arg1: i32, %arg2: i32) -> (i32, i32) {
    %c0_i32 = arith.constant 0 : i32
    %c0_i32_0 = arith.constant 0 : i32
    return %c0_i32, %arg1 : i32, i32
  }
  func.func @transform_3(%arg0: i32, %arg1: i32, %arg2: i32) -> (i32, i32) {
    %c0_i32 = arith.constant 0 : i32
    return %arg0, %arg1 : i32, i32
  }
}

module attributes {stable_mosaic.version = 11 : i64} {
  func.func @_matmul_kernel(%arg0: i32, %arg1: i32, %arg2: i32, %arg3: memref<32x128xf32, #tpu.memory_space<vmem>>, %arg4: memref<128x32xbf16, #tpu.memory_space<vmem>>, %arg5: memref<1x32xf32, #tpu.memory_space<vmem>>, %arg6: memref<32x32xf32, #tpu.memory_space<vmem>>, %arg7: memref<32x32xf32, #tpu.memory_space<vmem>>, %arg8: memref<32x32xf32, #tpu.memory_space<vmem>>) attributes {dimension_semantics = [#tpu.dimension_semantics<parallel>, #tpu.dimension_semantics<parallel>, #tpu.dimension_semantics<arbitrary>], iteration_bounds = array<i64: 1, 1, 1>, scalar_prefetch = 0 : i64, scratch_operands = 1 : i64, tpu.core_type = #tpu.core_type<tc>, window_params = [{transform_indices = @transform_0, window_bounds = array<i64: 32, 128>}, {transform_indices = @transform_1, window_bounds = array<i64: 128, 32>}, {transform_indices = @transform_2, window_bounds = array<i64: 1, 32>}, {transform_indices = @transform_3, window_bounds = array<i64: 32, 32>}, {transform_indices = @transform_4, window_bounds = array<i64: 32, 32>}]} {
    %c0_i32 = arith.constant 0 : i32
    %0 = arith.cmpi eq, %arg2, %c0_i32 : i32
    %1 = arith.extui %0 : i1 to i32
    %c0_i32_0 = arith.constant 0 : i32
    %2 = arith.cmpi ne, %1, %c0_i32_0 : i32
    scf.if %2 {
      %cst_10 = arith.constant 0.000000e+00 : f32
      %13 = vector.broadcast %cst_10 : f32 to vector<32x32xf32>
      %c0_11 = arith.constant 0 : index
      %c0_12 = arith.constant 0 : index
      %14 = vector.load %arg8[%c0_11, %c0_12] : memref<32x32xf32, #tpu.memory_space<vmem>>, vector<32x32xf32>
      tpu.vector_store %arg8[%c0_11, %c0_12], %13 {strides = array<i32>} : memref<32x32xf32, #tpu.memory_space<vmem>>, vector<32x32xf32>,
    } else {
    }
    %c0 = arith.constant 0 : index
    %c0_1 = arith.constant 0 : index
    %3 = vector.load %arg8[%c0, %c0_1] : memref<32x32xf32, #tpu.memory_space<vmem>>, vector<32x32xf32>
    %c0_2 = arith.constant 0 : index
    %c0_3 = arith.constant 0 : index
    %4 = vector.load %arg3[%c0_2, %c0_3] : memref<32x128xf32, #tpu.memory_space<vmem>>, vector<32x128xf32>
    %5 = arith.truncf %4 : vector<32x128xf32> to vector<32x128xbf16>
    %c0_4 = arith.constant 0 : index
    %c0_5 = arith.constant 0 : index
    %6 = vector.load %arg4[%c0_4, %c0_5] : memref<128x32xbf16, #tpu.memory_space<vmem>>, vector<128x32xbf16>
    %cst = arith.constant dense<0.000000e+00> : vector<32x32xf32>
    %7 = tpu.matmul %5, %6, %cst {dimension_numbers = #tpu.dot_dimension_numbers<[1], [0], [0], [1], [0, 0, 1, 1], [], []>} : vector<32x128xbf16>, vector<128x32xbf16>, vector<32x32xf32> -> vector<32x32xf32>
    %8 = arith.addf %3, %7 : vector<32x32xf32>
    %c0_6 = arith.constant 0 : index
    %c0_7 = arith.constant 0 : index
    %9 = vector.load %arg8[%c0_6, %c0_7] : memref<32x32xf32, #tpu.memory_space<vmem>>, vector<32x32xf32>
    tpu.vector_store %arg8[%c0_6, %c0_7], %8 {strides = array<i32>} : memref<32x32xf32, #tpu.memory_space<vmem>>, vector<32x32xf32>,
    %c0_i32_8 = arith.constant 0 : i32
    %10 = arith.cmpi eq, %arg2, %c0_i32_8 : i32
    %11 = arith.extui %10 : i1 to i32
    %c0_i32_9 = arith.constant 0 : i32
    %12 = arith.cmpi ne, %11, %c0_i32_9 : i32
    scf.if %12 {
      %c0_10 = arith.constant 0 : index
      %c0_11 = arith.constant 0 : index
      %13 = vector.load %arg8[%c0_10, %c0_11] : memref<32x32xf32, #tpu.memory_space<vmem>>, vector<32x32xf32>
      %c0_12 = arith.constant 0 : index
      %c0_13 = arith.constant 0 : index
      %14 = vector.load %arg5[%c0_12, %c0_13] : memref<1x32xf32, #tpu.memory_space<vmem>>, vector<1x32xf32>
      %15 = vector.broadcast %14 : vector<1x32xf32> to vector<32x32xf32>
      %16 = arith.addf %13, %15 : vector<32x32xf32>
      %c0_14 = arith.constant 0 : index
      %c0_15 = arith.constant 0 : index
      %17 = vector.load %arg6[%c0_14, %c0_15] : memref<32x32xf32, #tpu.memory_space<vmem>>, vector<32x32xf32>
      %18 = arith.addf %16, %17 : vector<32x32xf32>
      %c0_16 = arith.constant 0 : index
      %c0_17 = arith.constant 0 : index
      %19 = vector.load %arg7[%c0_16, %c0_17] : memref<32x32xf32, #tpu.memory_space<vmem>>, vector<32x32xf32>
      tpu.vector_store %arg7[%c0_16, %c0_17], %18 {strides = array<i32>} : memref<32x32xf32, #tpu.memory_space<vmem>>, vector<32x32xf32>,
    } else {
    }
    return
  }
  func.func @transform_0(%arg0: i32, %arg1: i32, %arg2: i32) -> (i32, i32) {
    %c0_i32 = arith.constant 0 : i32
    return %arg0, %arg2 : i32, i32
  }
  func.func @transform_1(%arg0: i32, %arg1: i32, %arg2: i32) -> (i32, i32) {
    %c0_i32 = arith.constant 0 : i32
    return %arg2, %arg1 : i32, i32
  }
  func.func @transform_2(%arg0: i32, %arg1: i32, %arg2: i32) -> (i32, i32) {
    %c0_i32 = arith.constant 0 : i32
    %c0_i32_0 = arith.constant 0 : i32
    return %c0_i32, %arg1 : i32, i32
  }
  func.func @transform_3(%arg0: i32, %arg1: i32, %arg2: i32) -> (i32, i32) {
    %c0_i32 = arith.constant 0 : i32
    return %arg0, %arg1 : i32, i32
  }
  func.func @transform_4(%arg0: i32, %arg1: i32, %arg2: i32) -> (i32, i32) {
    %c0_i32 = arith.constant 0 : i32
    return %arg0, %arg1 : i32, i32
  }
}

module attributes {stable_mosaic.version = 11 : i64} {
  func.func @_matmul_kernel(%arg0: i32, %arg1: i32, %arg2: i32, %arg3: memref<32x32xf32, #tpu.memory_space<vmem>>, %arg4: memref<32x96xbf16, #tpu.memory_space<vmem>>, %arg5: memref<1x96xf32, #tpu.memory_space<vmem>>, %arg6: memref<32x96xf32, #tpu.memory_space<vmem>>, %arg7: memref<32x96xf32, #tpu.memory_space<vmem>>) attributes {dimension_semantics = [#tpu.dimension_semantics<parallel>, #tpu.dimension_semantics<parallel>, #tpu.dimension_semantics<arbitrary>], iteration_bounds = array<i64: 1, 1, 1>, scalar_prefetch = 0 : i64, scratch_operands = 1 : i64, tpu.core_type = #tpu.core_type<tc>, window_params = [{transform_indices = @transform_0, window_bounds = array<i64: 32, 32>}, {transform_indices = @transform_1, window_bounds = array<i64: 32, 96>}, {transform_indices = @transform_2, window_bounds = array<i64: 1, 96>}, {transform_indices = @transform_3, window_bounds = array<i64: 32, 96>}]} {
    %c0_i32 = arith.constant 0 : i32
    %0 = arith.cmpi eq, %arg2, %c0_i32 : i32
    %1 = arith.extui %0 : i1 to i32
    %c0_i32_0 = arith.constant 0 : i32
    %2 = arith.cmpi ne, %1, %c0_i32_0 : i32
    scf.if %2 {
      %cst_10 = arith.constant 0.000000e+00 : f32
      %13 = vector.broadcast %cst_10 : f32 to vector<32x96xf32>
      %c0_11 = arith.constant 0 : index
      %c0_12 = arith.constant 0 : index
      %14 = vector.load %arg7[%c0_11, %c0_12] : memref<32x96xf32, #tpu.memory_space<vmem>>, vector<32x96xf32>
      tpu.vector_store %arg7[%c0_11, %c0_12], %13 {strides = array<i32>} : memref<32x96xf32, #tpu.memory_space<vmem>>, vector<32x96xf32>,
    } else {
    }
    %c0 = arith.constant 0 : index
    %c0_1 = arith.constant 0 : index
    %3 = vector.load %arg7[%c0, %c0_1] : memref<32x96xf32, #tpu.memory_space<vmem>>, vector<32x96xf32>
    %c0_2 = arith.constant 0 : index
    %c0_3 = arith.constant 0 : index
    %4 = vector.load %arg3[%c0_2, %c0_3] : memref<32x32xf32, #tpu.memory_space<vmem>>, vector<32x32xf32>
    %5 = arith.truncf %4 : vector<32x32xf32> to vector<32x32xbf16>
    %c0_4 = arith.constant 0 : index
    %c0_5 = arith.constant 0 : index
    %6 = vector.load %arg4[%c0_4, %c0_5] : memref<32x96xbf16, #tpu.memory_space<vmem>>, vector<32x96xbf16>
    %cst = arith.constant dense<0.000000e+00> : vector<32x96xf32>
    %7 = tpu.matmul %5, %6, %cst {dimension_numbers = #tpu.dot_dimension_numbers<[1], [0], [0], [1], [0, 0, 1, 1], [], []>} : vector<32x32xbf16>, vector<32x96xbf16>, vector<32x96xf32> -> vector<32x96xf32>
    %8 = arith.addf %3, %7 : vector<32x96xf32>
    %c0_6 = arith.constant 0 : index
    %c0_7 = arith.constant 0 : index
    %9 = vector.load %arg7[%c0_6, %c0_7] : memref<32x96xf32, #tpu.memory_space<vmem>>, vector<32x96xf32>
    tpu.vector_store %arg7[%c0_6, %c0_7], %8 {strides = array<i32>} : memref<32x96xf32, #tpu.memory_space<vmem>>, vector<32x96xf32>,
    %c0_i32_8 = arith.constant 0 : i32
    %10 = arith.cmpi eq, %arg2, %c0_i32_8 : i32
    %11 = arith.extui %10 : i1 to i32
    %c0_i32_9 = arith.constant 0 : i32
    %12 = arith.cmpi ne, %11, %c0_i32_9 : i32
    scf.if %12 {
      %c0_10 = arith.constant 0 : index
      %c0_11 = arith.constant 0 : index
      %13 = vector.load %arg7[%c0_10, %c0_11] : memref<32x96xf32, #tpu.memory_space<vmem>>, vector<32x96xf32>
      %c0_12 = arith.constant 0 : index
      %c0_13 = arith.constant 0 : index
      %14 = vector.load %arg5[%c0_12, %c0_13] : memref<1x96xf32, #tpu.memory_space<vmem>>, vector<1x96xf32>
      %15 = vector.broadcast %14 : vector<1x96xf32> to vector<32x96xf32>
      %16 = arith.addf %13, %15 : vector<32x96xf32>
      %c0_14 = arith.constant 0 : index
      %c0_15 = arith.constant 0 : index
      %17 = vector.load %arg6[%c0_14, %c0_15] : memref<32x96xf32, #tpu.memory_space<vmem>>, vector<32x96xf32>
      tpu.vector_store %arg6[%c0_14, %c0_15], %16 {strides = array<i32>} : memref<32x96xf32, #tpu.memory_space<vmem>>, vector<32x96xf32>,
    } else {
    }
    return
  }
  func.func @transform_0(%arg0: i32, %arg1: i32, %arg2: i32) -> (i32, i32) {
    %c0_i32 = arith.constant 0 : i32
    return %arg0, %arg2 : i32, i32
  }
  func.func @transform_1(%arg0: i32, %arg1: i32, %arg2: i32) -> (i32, i32) {
    %c0_i32 = arith.constant 0 : i32
    return %arg2, %arg1 : i32, i32
  }
  func.func @transform_2(%arg0: i32, %arg1: i32, %arg2: i32) -> (i32, i32) {
    %c0_i32 = arith.constant 0 : i32
    %c0_i32_0 = arith.constant 0 : i32
    return %c0_i32, %arg1 : i32, i32
  }
  func.func @transform_3(%arg0: i32, %arg1: i32, %arg2: i32) -> (i32, i32) {
    %c0_i32 = arith.constant 0 : i32
    return %arg0, %arg1 : i32, i32
  }
}

module attributes {stable_mosaic.version = 11 : i64} {
  func.func @_matmul_kernel(%arg0: i32, %arg1: i32, %arg2: i32, %arg3: memref<32x32xf32, #tpu.memory_space<vmem>>, %arg4: memref<32x128xbf16, #tpu.memory_space<vmem>>, %arg5: memref<1x128xf32, #tpu.memory_space<vmem>>, %arg6: memref<32x128xf32, #tpu.memory_space<vmem>>, %arg7: memref<32x128xf32, #tpu.memory_space<vmem>>) attributes {dimension_semantics = [#tpu.dimension_semantics<parallel>, #tpu.dimension_semantics<parallel>, #tpu.dimension_semantics<arbitrary>], iteration_bounds = array<i64: 1, 1, 1>, scalar_prefetch = 0 : i64, scratch_operands = 1 : i64, tpu.core_type = #tpu.core_type<tc>, window_params = [{transform_indices = @transform_0, window_bounds = array<i64: 32, 32>}, {transform_indices = @transform_1, window_bounds = array<i64: 32, 128>}, {transform_indices = @transform_2, window_bounds = array<i64: 1, 128>}, {transform_indices = @transform_3, window_bounds = array<i64: 32, 128>}]} {
    %c0_i32 = arith.constant 0 : i32
    %0 = arith.cmpi eq, %arg2, %c0_i32 : i32
    %1 = arith.extui %0 : i1 to i32
    %c0_i32_0 = arith.constant 0 : i32
    %2 = arith.cmpi ne, %1, %c0_i32_0 : i32
    scf.if %2 {
      %cst_10 = arith.constant 0.000000e+00 : f32
      %13 = vector.broadcast %cst_10 : f32 to vector<32x128xf32>
      %c0_11 = arith.constant 0 : index
      %c0_12 = arith.constant 0 : index
      %14 = vector.load %arg7[%c0_11, %c0_12] : memref<32x128xf32, #tpu.memory_space<vmem>>, vector<32x128xf32>
      tpu.vector_store %arg7[%c0_11, %c0_12], %13 {strides = array<i32>} : memref<32x128xf32, #tpu.memory_space<vmem>>, vector<32x128xf32>,
    } else {
    }
    %c0 = arith.constant 0 : index
    %c0_1 = arith.constant 0 : index
    %3 = vector.load %arg7[%c0, %c0_1] : memref<32x128xf32, #tpu.memory_space<vmem>>, vector<32x128xf32>
    %c0_2 = arith.constant 0 : index
    %c0_3 = arith.constant 0 : index
    %4 = vector.load %arg3[%c0_2, %c0_3] : memref<32x32xf32, #tpu.memory_space<vmem>>, vector<32x32xf32>
    %5 = arith.truncf %4 : vector<32x32xf32> to vector<32x32xbf16>
    %c0_4 = arith.constant 0 : index
    %c0_5 = arith.constant 0 : index
    %6 = vector.load %arg4[%c0_4, %c0_5] : memref<32x128xbf16, #tpu.memory_space<vmem>>, vector<32x128xbf16>
    %cst = arith.constant dense<0.000000e+00> : vector<32x128xf32>
    %7 = tpu.matmul %5, %6, %cst {dimension_numbers = #tpu.dot_dimension_numbers<[1], [0], [0], [1], [0, 0, 1, 1], [], []>} : vector<32x32xbf16>, vector<32x128xbf16>, vector<32x128xf32> -> vector<32x128xf32>
    %8 = arith.addf %3, %7 : vector<32x128xf32>
    %c0_6 = arith.constant 0 : index
    %c0_7 = arith.constant 0 : index
    %9 = vector.load %arg7[%c0_6, %c0_7] : memref<32x128xf32, #tpu.memory_space<vmem>>, vector<32x128xf32>
    tpu.vector_store %arg7[%c0_6, %c0_7], %8 {strides = array<i32>} : memref<32x128xf32, #tpu.memory_space<vmem>>, vector<32x128xf32>,
    %c0_i32_8 = arith.constant 0 : i32
    %10 = arith.cmpi eq, %arg2, %c0_i32_8 : i32
    %11 = arith.extui %10 : i1 to i32
    %c0_i32_9 = arith.constant 0 : i32
    %12 = arith.cmpi ne, %11, %c0_i32_9 : i32
    scf.if %12 {
      %c0_10 = arith.constant 0 : index
      %c0_11 = arith.constant 0 : index
      %13 = vector.load %arg7[%c0_10, %c0_11] : memref<32x128xf32, #tpu.memory_space<vmem>>, vector<32x128xf32>
      %c0_12 = arith.constant 0 : index
      %c0_13 = arith.constant 0 : index
      %14 = vector.load %arg5[%c0_12, %c0_13] : memref<1x128xf32, #tpu.memory_space<vmem>>, vector<1x128xf32>
      %15 = vector.broadcast %14 : vector<1x128xf32> to vector<32x128xf32>
      %16 = arith.addf %13, %15 : vector<32x128xf32>
      %cst_14 = arith.constant 5.000000e-01 : f32
      %17 = vector.broadcast %cst_14 : f32 to vector<32x128xf32>
      %18 = arith.mulf %17, %16 : vector<32x128xf32>
      %cst_15 = arith.constant 4.471500e-02 : f32
      %19 = vector.broadcast %cst_15 : f32 to vector<32x128xf32>
      %20 = arith.mulf %19, %16 : vector<32x128xf32>
      %21 = arith.mulf %20, %16 : vector<32x128xf32>
      %22 = arith.mulf %21, %16 : vector<32x128xf32>
      %23 = arith.addf %16, %22 : vector<32x128xf32>
      %cst_16 = arith.constant 0.797884583 : f32
      %24 = vector.broadcast %cst_16 : f32 to vector<32x128xf32>
      %25 = arith.mulf %24, %23 : vector<32x128xf32>
      %26 = math.tanh %25 : vector<32x128xf32>
      %cst_17 = arith.constant 1.000000e+00 : f32
      %27 = vector.broadcast %cst_17 : f32 to vector<32x128xf32>
      %28 = arith.addf %27, %26 : vector<32x128xf32>
      %29 = arith.mulf %18, %28 : vector<32x128xf32>
      %c0_18 = arith.constant 0 : index
      %c0_19 = arith.constant 0 : index
      %30 = vector.load %arg6[%c0_18, %c0_19] : memref<32x128xf32, #tpu.memory_space<vmem>>, vector<32x128xf32>
      tpu.vector_store %arg6[%c0_18, %c0_19], %29 {strides = array<i32>} : memref<32x128xf32, #tpu.memory_space<vmem>>, vector<32x128xf32>,
    } else {
    }
    return
  }
  func.func @transform_0(%arg0: i32, %arg1: i32, %arg2: i32) -> (i32, i32) {
    %c0_i32 = arith.constant 0 : i32
    return %arg0, %arg2 : i32, i32
  }
  func.func @transform_1(%arg0: i32, %arg1: i32, %arg2: i32) -> (i32, i32) {
    %c0_i32 = arith.constant 0 : i32
    return %arg2, %arg1 : i32, i32
  }
  func.func @transform_2(%arg0: i32, %arg1: i32, %arg2: i32) -> (i32, i32) {
    %c0_i32 = arith.constant 0 : i32
    %c0_i32_0 = arith.constant 0 : i32
    return %c0_i32, %arg1 : i32, i32
  }
  func.func @transform_3(%arg0: i32, %arg1: i32, %arg2: i32) -> (i32, i32) {
    %c0_i32 = arith.constant 0 : i32
    return %arg0, %arg1 : i32, i32
  }
}

module attributes {stable_mosaic.version = 11 : i64} {
  func.func @_ln_kernel(%arg0: i32, %arg1: memref<32x32xf32, #tpu.memory_space<vmem>>, %arg2: memref<1x32xf32, #tpu.memory_space<vmem>>, %arg3: memref<1x32xf32, #tpu.memory_space<vmem>>, %arg4: memref<32x32xf32, #tpu.memory_space<vmem>>) attributes {dimension_semantics = [#tpu.dimension_semantics<parallel>], iteration_bounds = array<i64: 1>, scalar_prefetch = 0 : i64, scratch_operands = 0 : i64, tpu.core_type = #tpu.core_type<tc>, window_params = [{transform_indices = @transform_0, window_bounds = array<i64: 32, 32>}, {pipeline_mode = #tpu.pipeline_mode<synchronous>, transform_indices = @transform_1, window_bounds = array<i64: 1, 32>}, {pipeline_mode = #tpu.pipeline_mode<synchronous>, transform_indices = @transform_2, window_bounds = array<i64: 1, 32>}, {transform_indices = @transform_3, window_bounds = array<i64: 32, 32>}]} {
    %c0 = arith.constant 0 : index
    %c0_0 = arith.constant 0 : index
    %0 = vector.load %arg1[%c0, %c0_0] : memref<32x32xf32, #tpu.memory_space<vmem>>, vector<32x32xf32>
    %cst = arith.constant dense<0.000000e+00> : vector<32xf32>
    %1 = vector.multi_reduction <add>, %0, %cst [1] : vector<32x32xf32> to vector<32xf32>
    %2 = vector.shape_cast %1 : vector<32xf32> to vector<32x1xf32>
    %cst_1 = arith.constant 3.200000e+01 : f32
    %3 = vector.broadcast %cst_1 : f32 to vector<32x1xf32>
    %4 = arith.divf %2, %3 : vector<32x1xf32>
    %5 = vector.broadcast %4 : vector<32x1xf32> to vector<32x32xf32>
    %6 = arith.subf %0, %5 : vector<32x32xf32>
    %7 = vector.broadcast %4 : vector<32x1xf32> to vector<32x32xf32>
    %8 = arith.subf %0, %7 : vector<32x32xf32>
    %9 = arith.mulf %6, %8 : vector<32x32xf32>
    %cst_2 = arith.constant dense<0.000000e+00> : vector<32xf32>
    %10 = vector.multi_reduction <add>, %9, %cst_2 [1] : vector<32x32xf32> to vector<32xf32>
    %11 = vector.shape_cast %10 : vector<32xf32> to vector<32x1xf32>
    %cst_3 = arith.constant 3.200000e+01 : f32
    %12 = vector.broadcast %cst_3 : f32 to vector<32x1xf32>
    %13 = arith.divf %11, %12 : vector<32x1xf32>
    %14 = vector.broadcast %4 : vector<32x1xf32> to vector<32x32xf32>
    %15 = arith.subf %0, %14 : vector<32x32xf32>
    %cst_4 = arith.constant 9.99999997E-7 : f32
    %16 = vector.broadcast %cst_4 : f32 to vector<32x1xf32>
    %17 = arith.addf %13, %16 : vector<32x1xf32>
    %18 = math.rsqrt %17 : vector<32x1xf32>
    %19 = vector.broadcast %18 : vector<32x1xf32> to vector<32x32xf32>
    %20 = arith.mulf %15, %19 : vector<32x32xf32>
    %c0_5 = arith.constant 0 : index
    %c0_6 = arith.constant 0 : index
    %21 = vector.load %arg2[%c0_5, %c0_6] : memref<1x32xf32, #tpu.memory_space<vmem>>, vector<1x32xf32>
    %22 = vector.broadcast %21 : vector<1x32xf32> to vector<32x32xf32>
    %23 = arith.mulf %20, %22 : vector<32x32xf32>
    %c0_7 = arith.constant 0 : index
    %c0_8 = arith.constant 0 : index
    %24 = vector.load %arg3[%c0_7, %c0_8] : memref<1x32xf32, #tpu.memory_space<vmem>>, vector<1x32xf32>
    %25 = vector.broadcast %24 : vector<1x32xf32> to vector<32x32xf32>
    %26 = arith.addf %23, %25 : vector<32x32xf32>
    %c0_9 = arith.constant 0 : index
    %c0_10 = arith.constant 0 : index
    %27 = vector.load %arg4[%c0_9, %c0_10] : memref<32x32xf32, #tpu.memory_space<vmem>>, vector<32x32xf32>
    tpu.vector_store %arg4[%c0_9, %c0_10], %26 {strides = array<i32>} : memref<32x32xf32, #tpu.memory_space<vmem>>, vector<32x32xf32>,
    return
  }
  func.func @transform_0(%arg0: i32) -> (i32, i32) {
    %c0_i32 = arith.constant 0 : i32
    %c0_i32_0 = arith.constant 0 : i32
    return %arg0, %c0_i32 : i32, i32
  }
  func.func @transform_1(%arg0: i32) -> (i32, i32) {
    %c0_i32 = arith.constant 0 : i32
    %c0_i32_0 = arith.constant 0 : i32
    %c0_i32_1 = arith.constant 0 : i32
    return %c0_i32, %c0_i32_0 : i32, i32
  }
  func.func @transform_2(%arg0: i32) -> (i32, i32) {
    %c0_i32 = arith.constant 0 : i32
    %c0_i32_0 = arith.constant 0 : i32
    %c0_i32_1 = arith.constant 0 : i32
    return %c0_i32, %c0_i32_0 : i32, i32
  }
  func.func @transform_3(%arg0: i32) -> (i32, i32) {
    %c0_i32 = arith.constant 0 : i32
    %c0_i32_0 = arith.constant 0 : i32
    return %arg0, %c0_i32 : i32, i32
  }
}

module attributes {stable_mosaic.version = 11 : i64} {
  func.func @_matmul_kernel(%arg0: i32, %arg1: i32, %arg2: i32, %arg3: memref<32x32xf32, #tpu.memory_space<vmem>>, %arg4: memref<32x32xbf16, #tpu.memory_space<vmem>>, %arg5: memref<32x32xf32, #tpu.memory_space<vmem>>, %arg6: memref<32x32xf32, #tpu.memory_space<vmem>>) attributes {dimension_semantics = [#tpu.dimension_semantics<parallel>, #tpu.dimension_semantics<parallel>, #tpu.dimension_semantics<arbitrary>], iteration_bounds = array<i64: 1, 1, 1>, scalar_prefetch = 0 : i64, scratch_operands = 1 : i64, tpu.core_type = #tpu.core_type<tc>, window_params = [{transform_indices = @transform_0, window_bounds = array<i64: 32, 32>}, {transform_indices = @transform_1, window_bounds = array<i64: 32, 32>}, {transform_indices = @transform_2, window_bounds = array<i64: 32, 32>}]} {
    %c0_i32 = arith.constant 0 : i32
    %0 = arith.cmpi eq, %arg2, %c0_i32 : i32
    %1 = arith.extui %0 : i1 to i32
    %c0_i32_0 = arith.constant 0 : i32
    %2 = arith.cmpi ne, %1, %c0_i32_0 : i32
    scf.if %2 {
      %cst_10 = arith.constant 0.000000e+00 : f32
      %13 = vector.broadcast %cst_10 : f32 to vector<32x32xf32>
      %c0_11 = arith.constant 0 : index
      %c0_12 = arith.constant 0 : index
      %14 = vector.load %arg6[%c0_11, %c0_12] : memref<32x32xf32, #tpu.memory_space<vmem>>, vector<32x32xf32>
      tpu.vector_store %arg6[%c0_11, %c0_12], %13 {strides = array<i32>} : memref<32x32xf32, #tpu.memory_space<vmem>>, vector<32x32xf32>,
    } else {
    }
    %c0 = arith.constant 0 : index
    %c0_1 = arith.constant 0 : index
    %3 = vector.load %arg6[%c0, %c0_1] : memref<32x32xf32, #tpu.memory_space<vmem>>, vector<32x32xf32>
    %c0_2 = arith.constant 0 : index
    %c0_3 = arith.constant 0 : index
    %4 = vector.load %arg3[%c0_2, %c0_3] : memref<32x32xf32, #tpu.memory_space<vmem>>, vector<32x32xf32>
    %5 = arith.truncf %4 : vector<32x32xf32> to vector<32x32xbf16>
    %c0_4 = arith.constant 0 : index
    %c0_5 = arith.constant 0 : index
    %6 = vector.load %arg4[%c0_4, %c0_5] : memref<32x32xbf16, #tpu.memory_space<vmem>>, vector<32x32xbf16>
    %cst = arith.constant dense<0.000000e+00> : vector<32x32xf32>
    %7 = tpu.matmul %5, %6, %cst {dimension_numbers = #tpu.dot_dimension_numbers<[1], [0], [0], [1], [0, 0, 1, 1], [], []>} : vector<32x32xbf16>, vector<32x32xbf16>, vector<32x32xf32> -> vector<32x32xf32>
    %8 = arith.addf %3, %7 : vector<32x32xf32>
    %c0_6 = arith.constant 0 : index
    %c0_7 = arith.constant 0 : index
    %9 = vector.load %arg6[%c0_6, %c0_7] : memref<32x32xf32, #tpu.memory_space<vmem>>, vector<32x32xf32>
    tpu.vector_store %arg6[%c0_6, %c0_7], %8 {strides = array<i32>} : memref<32x32xf32, #tpu.memory_space<vmem>>, vector<32x32xf32>,
    %c0_i32_8 = arith.constant 0 : i32
    %10 = arith.cmpi eq, %arg2, %c0_i32_8 : i32
    %11 = arith.extui %10 : i1 to i32
    %c0_i32_9 = arith.constant 0 : i32
    %12 = arith.cmpi ne, %11, %c0_i32_9 : i32
    scf.if %12 {
      %c0_10 = arith.constant 0 : index
      %c0_11 = arith.constant 0 : index
      %13 = vector.load %arg6[%c0_10, %c0_11] : memref<32x32xf32, #tpu.memory_space<vmem>>, vector<32x32xf32>
      %c0_12 = arith.constant 0 : index
      %c0_13 = arith.constant 0 : index
      %14 = vector.load %arg5[%c0_12, %c0_13] : memref<32x32xf32, #tpu.memory_space<vmem>>, vector<32x32xf32>
      tpu.vector_store %arg5[%c0_12, %c0_13], %13 {strides = array<i32>} : memref<32x32xf32, #tpu.memory_space<vmem>>, vector<32x32xf32>,
    } else {
    }
    return
  }
  func.func @transform_0(%arg0: i32, %arg1: i32, %arg2: i32) -> (i32, i32) {
    %c0_i32 = arith.constant 0 : i32
    return %arg0, %arg2 : i32, i32
  }
  func.func @transform_1(%arg0: i32, %arg1: i32, %arg2: i32) -> (i32, i32) {
    %c0_i32 = arith.constant 0 : i32
    return %arg2, %arg1 : i32, i32
  }
  func.func @transform_2(%arg0: i32, %arg1: i32, %arg2: i32) -> (i32, i32) {
    %c0_i32 = arith.constant 0 : i32
    return %arg0, %arg1 : i32, i32
  }
}

module attributes {stable_mosaic.version = 11 : i64} {
  func.func @_conv3x3_kernel(%arg0: i32, %arg1: memref<1x6x6x32xbf16, #tpu.memory_space<vmem>>, %arg2: memref<9x32x32xbf16, #tpu.memory_space<vmem>>, %arg3: memref<1x4x4x32xf32, #tpu.memory_space<vmem>>) attributes {dimension_semantics = [#tpu.dimension_semantics<parallel>], iteration_bounds = array<i64: 2>, scalar_prefetch = 0 : i64, scratch_operands = 0 : i64, tpu.core_type = #tpu.core_type<tc>, window_params = [{transform_indices = @transform_0, window_bounds = array<i64: 1, 6, 6, 32>}, {pipeline_mode = #tpu.pipeline_mode<synchronous>, transform_indices = @transform_1, window_bounds = array<i64: 9, 32, 32>}, {transform_indices = @transform_2, window_bounds = array<i64: 1, 4, 4, 32>}]} {
    %c0_i32 = arith.constant 0 : i32
    %c4_i32 = arith.constant 4 : i32
    %0 = arith.addi %c0_i32, %c4_i32 : i32
    %c1_i32 = arith.constant 1 : i32
    scf.for %arg4 = %c0_i32 to %0 step %c1_i32  : i32 {
      %cst = arith.constant 0.000000e+00 : f32
      %1 = vector.broadcast %cst : f32 to vector<4x32xf32>
      %c0_i32_1 = arith.constant 0 : i32
      %2 = arith.addi %arg4, %c0_i32_1 : i32
      %c0 = arith.constant 0 : index
      %3 = arith.index_cast %2 : i32 to index
      %c0_2 = arith.constant 0 : index
      %c0_3 = arith.constant 0 : index
      %4 = vector.load %arg1[%c0, %3, %c0_2, %c0_3] : memref<1x6x6x32xbf16, #tpu.memory_space<vmem>>, vector<1x1x4x32xbf16>
      %5 = vector.shape_cast %4 : vector<1x1x4x32xbf16> to vector<4x32xbf16>
      %c0_4 = arith.constant 0 : index
      %c0_5 = arith.constant 0 : index
      %c0_6 = arith.constant 0 : index
      %6 = vector.load %arg2[%c0_4, %c0_5, %c0_6] : memref<9x32x32xbf16, #tpu.memory_space<vmem>>, vector<1x32x32xbf16>
      %7 = vector.shape_cast %6 : vector<1x32x32xbf16> to vector<32x32xbf16>
      %cst_7 = arith.constant dense<0.000000e+00> : vector<4x32xf32>
      %8 = tpu.matmul %5, %7, %cst_7 {dimension_numbers = #tpu.dot_dimension_numbers<[1], [0], [0], [1], [0, 0, 1, 1], [], []>} : vector<4x32xbf16>, vector<32x32xbf16>, vector<4x32xf32> -> vector<4x32xf32>
      %9 = arith.addf %1, %8 : vector<4x32xf32>
      %c0_i32_8 = arith.constant 0 : i32
      %10 = arith.addi %arg4, %c0_i32_8 : i32
      %c0_9 = arith.constant 0 : index
      %11 = arith.index_cast %10 : i32 to index
      %c1 = arith.constant 1 : index
      %c0_10 = arith.constant 0 : index
      %12 = vector.load %arg1[%c0_9, %11, %c1, %c0_10] : memref<1x6x6x32xbf16, #tpu.memory_space<vmem>>, vector<1x1x4x32xbf16>
      %13 = vector.shape_cast %12 : vector<1x1x4x32xbf16> to vector<4x32xbf16>
      %c1_11 = arith.constant 1 : index
      %c0_12 = arith.constant 0 : index
      %c0_13 = arith.constant 0 : index
      %14 = vector.load %arg2[%c1_11, %c0_12, %c0_13] : memref<9x32x32xbf16, #tpu.memory_space<vmem>>, vector<1x32x32xbf16>
      %15 = vector.shape_cast %14 : vector<1x32x32xbf16> to vector<32x32xbf16>
      %cst_14 = arith.constant dense<0.000000e+00> : vector<4x32xf32>
      %16 = tpu.matmul %13, %15, %cst_14 {dimension_numbers = #tpu.dot_dimension_numbers<[1], [0], [0], [1], [0, 0, 1, 1], [], []>} : vector<4x32xbf16>, vector<32x32xbf16>, vector<4x32xf32> -> vector<4x32xf32>
      %17 = arith.addf %9, %16 : vector<4x32xf32>
      %c0_i32_15 = arith.constant 0 : i32
      %18 = arith.addi %arg4, %c0_i32_15 : i32
      %c0_16 = arith.constant 0 : index
      %19 = arith.index_cast %18 : i32 to index
      %c2 = arith.constant 2 : index
      %c0_17 = arith.constant 0 : index
      %20 = vector.load %arg1[%c0_16, %19, %c2, %c0_17] : memref<1x6x6x32xbf16, #tpu.memory_space<vmem>>, vector<1x1x4x32xbf16>
      %21 = vector.shape_cast %20 : vector<1x1x4x32xbf16> to vector<4x32xbf16>
      %c2_18 = arith.constant 2 : index
      %c0_19 = arith.constant 0 : index
      %c0_20 = arith.constant 0 : index
      %22 = vector.load %arg2[%c2_18, %c0_19, %c0_20] : memref<9x32x32xbf16, #tpu.memory_space<vmem>>, vector<1x32x32xbf16>
      %23 = vector.shape_cast %22 : vector<1x32x32xbf16> to vector<32x32xbf16>
      %cst_21 = arith.constant dense<0.000000e+00> : vector<4x32xf32>
      %24 = tpu.matmul %21, %23, %cst_21 {dimension_numbers = #tpu.dot_dimension_numbers<[1], [0], [0], [1], [0, 0, 1, 1], [], []>} : vector<4x32xbf16>, vector<32x32xbf16>, vector<4x32xf32> -> vector<4x32xf32>
      %25 = arith.addf %17, %24 : vector<4x32xf32>
      %c1_i32_22 = arith.constant 1 : i32
      %26 = arith.addi %arg4, %c1_i32_22 : i32
      %c0_23 = arith.constant 0 : index
      %27 = arith.index_cast %26 : i32 to index
      %c0_24 = arith.constant 0 : index
      %c0_25 = arith.constant 0 : index
      %28 = vector.load %arg1[%c0_23, %27, %c0_24, %c0_25] : memref<1x6x6x32xbf16, #tpu.memory_space<vmem>>, vector<1x1x4x32xbf16>
      %29 = vector.shape_cast %28 : vector<1x1x4x32xbf16> to vector<4x32xbf16>
      %c3 = arith.constant 3 : index
      %c0_26 = arith.constant 0 : index
      %c0_27 = arith.constant 0 : index
      %30 = vector.load %arg2[%c3, %c0_26, %c0_27] : memref<9x32x32xbf16, #tpu.memory_space<vmem>>, vector<1x32x32xbf16>
      %31 = vector.shape_cast %30 : vector<1x32x32xbf16> to vector<32x32xbf16>
      %cst_28 = arith.constant dense<0.000000e+00> : vector<4x32xf32>
      %32 = tpu.matmul %29, %31, %cst_28 {dimension_numbers = #tpu.dot_dimension_numbers<[1], [0], [0], [1], [0, 0, 1, 1], [], []>} : vector<4x32xbf16>, vector<32x32xbf16>, vector<4x32xf32> -> vector<4x32xf32>
      %33 = arith.addf %25, %32 : vector<4x32xf32>
      %c1_i32_29 = arith.constant 1 : i32
      %34 = arith.addi %arg4, %c1_i32_29 : i32
      %c0_30 = arith.constant 0 : index
      %35 = arith.index_cast %34 : i32 to index
      %c1_31 = arith.constant 1 : index
      %c0_32 = arith.constant 0 : index
      %36 = vector.load %arg1[%c0_30, %35, %c1_31, %c0_32] : memref<1x6x6x32xbf16, #tpu.memory_space<vmem>>, vector<1x1x4x32xbf16>
      %37 = vector.shape_cast %36 : vector<1x1x4x32xbf16> to vector<4x32xbf16>
      %c4 = arith.constant 4 : index
      %c0_33 = arith.constant 0 : index
      %c0_34 = arith.constant 0 : index
      %38 = vector.load %arg2[%c4, %c0_33, %c0_34] : memref<9x32x32xbf16, #tpu.memory_space<vmem>>, vector<1x32x32xbf16>
      %39 = vector.shape_cast %38 : vector<1x32x32xbf16> to vector<32x32xbf16>
      %cst_35 = arith.constant dense<0.000000e+00> : vector<4x32xf32>
      %40 = tpu.matmul %37, %39, %cst_35 {dimension_numbers = #tpu.dot_dimension_numbers<[1], [0], [0], [1], [0, 0, 1, 1], [], []>} : vector<4x32xbf16>, vector<32x32xbf16>, vector<4x32xf32> -> vector<4x32xf32>
      %41 = arith.addf %33, %40 : vector<4x32xf32>
      %c1_i32_36 = arith.constant 1 : i32
      %42 = arith.addi %arg4, %c1_i32_36 : i32
      %c0_37 = arith.constant 0 : index
      %43 = arith.index_cast %42 : i32 to index
      %c2_38 = arith.constant 2 : index
      %c0_39 = arith.constant 0 : index
      %44 = vector.load %arg1[%c0_37, %43, %c2_38, %c0_39] : memref<1x6x6x32xbf16, #tpu.memory_space<vmem>>, vector<1x1x4x32xbf16>
      %45 = vector.shape_cast %44 : vector<1x1x4x32xbf16> to vector<4x32xbf16>
      %c5 = arith.constant 5 : index
      %c0_40 = arith.constant 0 : index
      %c0_41 = arith.constant 0 : index
      %46 = vector.load %arg2[%c5, %c0_40, %c0_41] : memref<9x32x32xbf16, #tpu.memory_space<vmem>>, vector<1x32x32xbf16>
      %47 = vector.shape_cast %46 : vector<1x32x32xbf16> to vector<32x32xbf16>
      %cst_42 = arith.constant dense<0.000000e+00> : vector<4x32xf32>
      %48 = tpu.matmul %45, %47, %cst_42 {dimension_numbers = #tpu.dot_dimension_numbers<[1], [0], [0], [1], [0, 0, 1, 1], [], []>} : vector<4x32xbf16>, vector<32x32xbf16>, vector<4x32xf32> -> vector<4x32xf32>
      %49 = arith.addf %41, %48 : vector<4x32xf32>
      %c2_i32 = arith.constant 2 : i32
      %50 = arith.addi %arg4, %c2_i32 : i32
      %c0_43 = arith.constant 0 : index
      %51 = arith.index_cast %50 : i32 to index
      %c0_44 = arith.constant 0 : index
      %c0_45 = arith.constant 0 : index
      %52 = vector.load %arg1[%c0_43, %51, %c0_44, %c0_45] : memref<1x6x6x32xbf16, #tpu.memory_space<vmem>>, vector<1x1x4x32xbf16>
      %53 = vector.shape_cast %52 : vector<1x1x4x32xbf16> to vector<4x32xbf16>
      %c6 = arith.constant 6 : index
      %c0_46 = arith.constant 0 : index
      %c0_47 = arith.constant 0 : index
      %54 = vector.load %arg2[%c6, %c0_46, %c0_47] : memref<9x32x32xbf16, #tpu.memory_space<vmem>>, vector<1x32x32xbf16>
      %55 = vector.shape_cast %54 : vector<1x32x32xbf16> to vector<32x32xbf16>
      %cst_48 = arith.constant dense<0.000000e+00> : vector<4x32xf32>
      %56 = tpu.matmul %53, %55, %cst_48 {dimension_numbers = #tpu.dot_dimension_numbers<[1], [0], [0], [1], [0, 0, 1, 1], [], []>} : vector<4x32xbf16>, vector<32x32xbf16>, vector<4x32xf32> -> vector<4x32xf32>
      %57 = arith.addf %49, %56 : vector<4x32xf32>
      %c2_i32_49 = arith.constant 2 : i32
      %58 = arith.addi %arg4, %c2_i32_49 : i32
      %c0_50 = arith.constant 0 : index
      %59 = arith.index_cast %58 : i32 to index
      %c1_51 = arith.constant 1 : index
      %c0_52 = arith.constant 0 : index
      %60 = vector.load %arg1[%c0_50, %59, %c1_51, %c0_52] : memref<1x6x6x32xbf16, #tpu.memory_space<vmem>>, vector<1x1x4x32xbf16>
      %61 = vector.shape_cast %60 : vector<1x1x4x32xbf16> to vector<4x32xbf16>
      %c7 = arith.constant 7 : index
      %c0_53 = arith.constant 0 : index
      %c0_54 = arith.constant 0 : index
      %62 = vector.load %arg2[%c7, %c0_53, %c0_54] : memref<9x32x32xbf16, #tpu.memory_space<vmem>>, vector<1x32x32xbf16>
      %63 = vector.shape_cast %62 : vector<1x32x32xbf16> to vector<32x32xbf16>
      %cst_55 = arith.constant dense<0.000000e+00> : vector<4x32xf32>
      %64 = tpu.matmul %61, %63, %cst_55 {dimension_numbers = #tpu.dot_dimension_numbers<[1], [0], [0], [1], [0, 0, 1, 1], [], []>} : vector<4x32xbf16>, vector<32x32xbf16>, vector<4x32xf32> -> vector<4x32xf32>
      %65 = arith.addf %57, %64 : vector<4x32xf32>
      %c2_i32_56 = arith.constant 2 : i32
      %66 = arith.addi %arg4, %c2_i32_56 : i32
      %c0_57 = arith.constant 0 : index
      %67 = arith.index_cast %66 : i32 to index
      %c2_58 = arith.constant 2 : index
      %c0_59 = arith.constant 0 : index
      %68 = vector.load %arg1[%c0_57, %67, %c2_58, %c0_59] : memref<1x6x6x32xbf16, #tpu.memory_space<vmem>>, vector<1x1x4x32xbf16>
      %69 = vector.shape_cast %68 : vector<1x1x4x32xbf16> to vector<4x32xbf16>
      %c8 = arith.constant 8 : index
      %c0_60 = arith.constant 0 : index
      %c0_61 = arith.constant 0 : index
      %70 = vector.load %arg2[%c8, %c0_60, %c0_61] : memref<9x32x32xbf16, #tpu.memory_space<vmem>>, vector<1x32x32xbf16>
      %71 = vector.shape_cast %70 : vector<1x32x32xbf16> to vector<32x32xbf16>
      %cst_62 = arith.constant dense<0.000000e+00> : vector<4x32xf32>
      %72 = tpu.matmul %69, %71, %cst_62 {dimension_numbers = #tpu.dot_dimension_numbers<[1], [0], [0], [1], [0, 0, 1, 1], [], []>} : vector<4x32xbf16>, vector<32x32xbf16>, vector<4x32xf32> -> vector<4x32xf32>
      %73 = arith.addf %65, %72 : vector<4x32xf32>
      %c0_63 = arith.constant 0 : index
      %74 = arith.index_cast %arg4 : i32 to index
      %c0_64 = arith.constant 0 : index
      %c0_65 = arith.constant 0 : index
      %75 = vector.load %arg3[%c0_63, %74, %c0_64, %c0_65] : memref<1x4x4x32xf32, #tpu.memory_space<vmem>>, vector<1x1x4x32xf32>
      %76 = vector.shape_cast %75 : vector<1x1x4x32xf32> to vector<4x32xf32>
      %77 = vector.shape_cast %73 : vector<4x32xf32> to vector<1x1x4x32xf32>
      tpu.vector_store %arg3[%c0_63, %74, %c0_64, %c0_65], %77 {strides = array<i32>} : memref<1x4x4x32xf32, #tpu.memory_space<vmem>>, vector<1x1x4x32xf32>,
    }
    %c4_i32_0 = arith.constant 4 : i32
    return
  }
  func.func @transform_0(%arg0: i32) -> (i32, i32, i32, i32) {
    %c0_i32 = arith.constant 0 : i32
    %c0_i32_0 = arith.constant 0 : i32
    %c0_i32_1 = arith.constant 0 : i32
    %c0_i32_2 = arith.constant 0 : i32
    return %arg0, %c0_i32, %c0_i32_0, %c0_i32_1 : i32, i32, i32, i32
  }
  func.func @transform_1(%arg0: i32) -> (i32, i32, i32) {
    %c0_i32 = arith.constant 0 : i32
    %c0_i32_0 = arith.constant 0 : i32
    %c0_i32_1 = arith.constant 0 : i32
    %c0_i32_2 = arith.constant 0 : i32
    return %c0_i32, %c0_i32_0, %c0_i32_1 : i32, i32, i32
  }
  func.func @transform_2(%arg0: i32) -> (i32, i32, i32, i32) {
    %c0_i32 = arith.constant 0 : i32
    %c0_i32_0 = arith.constant 0 : i32
    %c0_i32_1 = arith.constant 0 : i32
    %c0_i32_2 = arith.constant 0 : i32
    return %arg0, %c0_i32, %c0_i32_0, %c0_i32_1 : i32, i32, i32, i32
  }
}

module attributes {stable_mosaic.version = 11 : i64} {
  func.func @_ln_kernel(%arg0: i32, %arg1: memref<32x32xf32, #tpu.memory_space<vmem>>, %arg2: memref<1x32xf32, #tpu.memory_space<vmem>>, %arg3: memref<1x32xf32, #tpu.memory_space<vmem>>, %arg4: memref<32x32xf32, #tpu.memory_space<vmem>>) attributes {dimension_semantics = [#tpu.dimension_semantics<parallel>], iteration_bounds = array<i64: 1>, scalar_prefetch = 0 : i64, scratch_operands = 0 : i64, tpu.core_type = #tpu.core_type<tc>, window_params = [{transform_indices = @transform_0, window_bounds = array<i64: 32, 32>}, {pipeline_mode = #tpu.pipeline_mode<synchronous>, transform_indices = @transform_1, window_bounds = array<i64: 1, 32>}, {pipeline_mode = #tpu.pipeline_mode<synchronous>, transform_indices = @transform_2, window_bounds = array<i64: 1, 32>}, {transform_indices = @transform_3, window_bounds = array<i64: 32, 32>}]} {
    %c0 = arith.constant 0 : index
    %c0_0 = arith.constant 0 : index
    %0 = vector.load %arg1[%c0, %c0_0] : memref<32x32xf32, #tpu.memory_space<vmem>>, vector<32x32xf32>
    %cst = arith.constant dense<0.000000e+00> : vector<32xf32>
    %1 = vector.multi_reduction <add>, %0, %cst [1] : vector<32x32xf32> to vector<32xf32>
    %2 = vector.shape_cast %1 : vector<32xf32> to vector<32x1xf32>
    %cst_1 = arith.constant 3.200000e+01 : f32
    %3 = vector.broadcast %cst_1 : f32 to vector<32x1xf32>
    %4 = arith.divf %2, %3 : vector<32x1xf32>
    %5 = vector.broadcast %4 : vector<32x1xf32> to vector<32x32xf32>
    %6 = arith.subf %0, %5 : vector<32x32xf32>
    %7 = vector.broadcast %4 : vector<32x1xf32> to vector<32x32xf32>
    %8 = arith.subf %0, %7 : vector<32x32xf32>
    %9 = arith.mulf %6, %8 : vector<32x32xf32>
    %cst_2 = arith.constant dense<0.000000e+00> : vector<32xf32>
    %10 = vector.multi_reduction <add>, %9, %cst_2 [1] : vector<32x32xf32> to vector<32xf32>
    %11 = vector.shape_cast %10 : vector<32xf32> to vector<32x1xf32>
    %cst_3 = arith.constant 3.200000e+01 : f32
    %12 = vector.broadcast %cst_3 : f32 to vector<32x1xf32>
    %13 = arith.divf %11, %12 : vector<32x1xf32>
    %14 = vector.broadcast %4 : vector<32x1xf32> to vector<32x32xf32>
    %15 = arith.subf %0, %14 : vector<32x32xf32>
    %cst_4 = arith.constant 9.99999997E-7 : f32
    %16 = vector.broadcast %cst_4 : f32 to vector<32x1xf32>
    %17 = arith.addf %13, %16 : vector<32x1xf32>
    %18 = math.rsqrt %17 : vector<32x1xf32>
    %19 = vector.broadcast %18 : vector<32x1xf32> to vector<32x32xf32>
    %20 = arith.mulf %15, %19 : vector<32x32xf32>
    %c0_5 = arith.constant 0 : index
    %c0_6 = arith.constant 0 : index
    %21 = vector.load %arg2[%c0_5, %c0_6] : memref<1x32xf32, #tpu.memory_space<vmem>>, vector<1x32xf32>
    %22 = vector.broadcast %21 : vector<1x32xf32> to vector<32x32xf32>
    %23 = arith.mulf %20, %22 : vector<32x32xf32>
    %c0_7 = arith.constant 0 : index
    %c0_8 = arith.constant 0 : index
    %24 = vector.load %arg3[%c0_7, %c0_8] : memref<1x32xf32, #tpu.memory_space<vmem>>, vector<1x32xf32>
    %25 = vector.broadcast %24 : vector<1x32xf32> to vector<32x32xf32>
    %26 = arith.addf %23, %25 : vector<32x32xf32>
    %c0_9 = arith.constant 0 : index
    %c0_10 = arith.constant 0 : index
    %27 = vector.load %arg4[%c0_9, %c0_10] : memref<32x32xf32, #tpu.memory_space<vmem>>, vector<32x32xf32>
    tpu.vector_store %arg4[%c0_9, %c0_10], %26 {strides = array<i32>} : memref<32x32xf32, #tpu.memory_space<vmem>>, vector<32x32xf32>,
    return
  }
  func.func @transform_0(%arg0: i32) -> (i32, i32) {
    %c0_i32 = arith.constant 0 : i32
    %c0_i32_0 = arith.constant 0 : i32
    return %arg0, %c0_i32 : i32, i32
  }
  func.func @transform_1(%arg0: i32) -> (i32, i32) {
    %c0_i32 = arith.constant 0 : i32
    %c0_i32_0 = arith.constant 0 : i32
    %c0_i32_1 = arith.constant 0 : i32
    return %c0_i32, %c0_i32_0 : i32, i32
  }
  func.func @transform_2(%arg0: i32) -> (i32, i32) {
    %c0_i32 = arith.constant 0 : i32
    %c0_i32_0 = arith.constant 0 : i32
    %c0_i32_1 = arith.constant 0 : i32
    return %c0_i32, %c0_i32_0 : i32, i32
  }
  func.func @transform_3(%arg0: i32) -> (i32, i32) {
    %c0_i32 = arith.constant 0 : i32
    %c0_i32_0 = arith.constant 0 : i32
    return %arg0, %c0_i32 : i32, i32
  }
}

</mosaic_0001>

<llo_original>
// kernel: _lambda_.34
$region0: #{_lambda_.34}
  #allocation0 [shape = 'u32[]', space=smem, size = 0x4, offset = 0x4, fixed_abs, tag = 'smem constant byte address 0x4 - core index']
  #allocation1 [shape = 'u32[144,128]{1,0:T(1,128)}', space=vmem, size = 0x12000, scoped, tag = 'internal scratch']
  %s0 = inlined_call_operand.vmem [shape: f32[32,32], index: 0, kind: input, shape index: {}]
  %s1 = inlined_call_operand.vmem [shape: f32[1,32], index: 1, kind: input, shape index: {}]
  %s2 = inlined_call_operand.vmem [shape: f32[1,32], index: 2, kind: input, shape index: {}]
  %s3 = inlined_call_operand.vmem [shape: f32[32,32], index: 3, kind: output, shape index: {}]
  %s4 = sld [smem:[#allocation0]]
  $region22: #{_lambda_.34} parent=0
    _
  %s6 = ssub.s32 1, %s4
  %s7 = scalar_select 0, %s6, %s4
  // Predicated region
  $region2: #{_lambda_.34} parent=0 // pred_check
    _
  $region3: #{_lambda_.34} parent=0 // pred_check_branch
    %9 = sbr.rel (0) target = $region5
  $region4: #{_lambda_.34} parent=0 // pred_region
    _
  $region5: #{_lambda_.34} parent=0 // pred_fallthru
    _
  // Predicated region
  $region6: #{_lambda_.34} parent=0 // pred_check
    _
  $region7: #{_lambda_.34} parent=0 // pred_check_branch
    %11 = sbr.rel (0) target = $region9
  $region8: #{_lambda_.34} parent=0 // pred_region
    _
  $region9: #{_lambda_.34} parent=0 // pred_fallthru
    _
  // Predicated region
  $region10: #{_lambda_.34} parent=0 // pred_check
    _
  $region11: #{_lambda_.34} parent=0 // pred_check_branch
    %13 = sbr.rel (0) target = $region13
  $region12: #{_lambda_.34} parent=0 // pred_region
    _
  $region13: #{_lambda_.34} parent=0 // pred_fallthru
    _
  %v14 = vld [vmem:[%s0] sm:$0xff]
  %v15 = vld [vmem:[%s0 + $0x8] sm:$0xff]
  %v16 = vld [vmem:[%s0 + $0x10] sm:$0xff]
  %v17 = vld [vmem:[%s0 + $0x18] sm:$0xff]
  %vm18 = vcmask 261120
  %v19 = vsel %vm18, %v14, 0.0
  %20 = vadd.xlane.f32.xlu0 %v19
  %v21 = vpop.xlane.xlu0 %20
  %v22 = vsel %vm18, %v15, 0.0
  %23 = vadd.xlane.f32.xlu0 %v22
  %v24 = vpop.xlane.xlu0 %23
  %v25 = vsel %vm18, %v16, 0.0
  %26 = vadd.xlane.f32.xlu0 %v25
  %v27 = vpop.xlane.xlu0 %26
  %v28 = vsel %vm18, %v17, 0.0
  %29 = vadd.xlane.f32.xlu0 %v28
  %v30 = vpop.xlane.xlu0 %29
  %v31 = vrcp.pop 32.0
  %v32 = vmul.f32 %v21, %v31
  %v33 = vmul.f32 %v24, %v31
  %v34 = vmul.f32 %v27, %v31
  %v35 = vmul.f32 %v30, %v31
  %v36 = vsub.f32 %v14, %v32
  %v37 = vsub.f32 %v15, %v33
  %v38 = vsub.f32 %v16, %v34
  %v39 = vsub.f32 %v17, %v35
  %v40 = vmul.f32 %v36, %v36
  %v41 = vmul.f32 %v37, %v37
  %v42 = vmul.f32 %v38, %v38
  %v43 = vmul.f32 %v39, %v39
  %v44 = vsel %vm18, %v40, 0.0
  %45 = vadd.xlane.f32.xlu0 %v44
  %v46 = vpop.xlane.xlu0 %45
  %v47 = vsel %vm18, %v41, 0.0
  %48 = vadd.xlane.f32.xlu0 %v47
  %v49 = vpop.xlane.xlu0 %48
  %v50 = vsel %vm18, %v42, 0.0
  %51 = vadd.xlane.f32.xlu0 %v50
  %v52 = vpop.xlane.xlu0 %51
  %v53 = vsel %vm18, %v43, 0.0
  %54 = vadd.xlane.f32.xlu0 %v53
  %v55 = vpop.xlane.xlu0 %54
  %v56 = vmul.f32 %v46, %v31
  %v57 = vmul.f32 %v49, %v31
  %v58 = vmul.f32 %v52, %v31
  %v59 = vmul.f32 %v55, %v31
  %v60 = vadd.f32 %v56, 1e-05
  %v61 = vadd.f32 %v57, 1e-05
  %v62 = vadd.f32 %v58, 1e-05
  %v63 = vadd.f32 %v59, 1e-05
  %v64 = vrsqrt.pop %v60
  %v65 = vrsqrt.pop %v61
  %v66 = vrsqrt.pop %v62
  %v67 = vrsqrt.pop %v63
  %v68 = vmul.f32 %v36, %v64
  %v69 = vmul.f32 %v37, %v65
  %v70 = vmul.f32 %v38, %v66
  %v71 = vmul.f32 %v39, %v67
  %v72 = vld [vmem:[%s1] sm:$0x1]
  %v74 = vlaneseq
  %v75 = vshrl.u32 %v74, 7
  %v76 = vsub.s32 0, %v75
  %v77 = vrot.slane %v72, %v76
  %v79 = vmul.f32 %v68, %v77
  %v80 = vmul.f32 %v69, %v77
  %v81 = vmul.f32 %v70, %v77
  %v82 = vmul.f32 %v71, %v77
  %v83 = vld [vmem:[%s2] sm:$0x1]
  %v85 = vlaneseq
  %v86 = vshrl.u32 %v85, 7
  %v87 = vsub.s32 0, %v86
  %v88 = vrot.slane %v83, %v87
  %v90 = vadd.f32 %v79, %v88
  %v91 = vadd.f32 %v80, %v88
  %v92 = vadd.f32 %v81, %v88
  %v93 = vadd.f32 %v82, %v88
  %94 = vst.msk [vmem:[%s3] sm:$0xff] %vm18, %v90
  %95 = vst.msk [vmem:[%s3 + $0x8] sm:$0xff] %vm18, %v91
  %96 = vst.msk [vmem:[%s3 + $0x10] sm:$0xff] %vm18, %v92
  %97 = vst.msk [vmem:[%s3 + $0x18] sm:$0xff] %vm18, %v93
  // Predicated region
  $region14: #{_lambda_.34} parent=0 // pred_check
    _
  $region15: #{_lambda_.34} parent=0 // pred_check_branch
    %99 = sbr.rel (0) target = $region17
  $region16: #{_lambda_.34} parent=0 // pred_region
    _
  $region17: #{_lambda_.34} parent=0 // pred_fallthru
    _
  // Predicated region
  $region18: #{_lambda_.34} parent=0 // pred_check
    _
  $region19: #{_lambda_.34} parent=0 // pred_check_branch
    %101 = sbr.rel (0) target = $region21
  $region20: #{_lambda_.34} parent=0 // pred_region
    _
  $region21: #{_lambda_.34} parent=0 // pred_fallthru
    _

// kernel: _lambda_.33
$region0: #{_lambda_.33}
  #allocation0 [shape = 'u32[]', space=smem, size = 0x4, offset = 0x4, fixed_abs, tag = 'smem constant byte address 0x4 - core index']
  #allocation1 [shape = 'u32[144,128]{1,0:T(1,128)}', space=vmem, size = 0x12000, scoped, tag = 'internal scratch']
  #allocation2 [shape = 'f32[32,32]{1,0:T(8,128)}', space=vmem, size = 0x4000, scoped, tag = 'scratch operand']
  %s0 = inlined_call_operand.vmem [shape: f32[32,768], index: 0, kind: input, shape index: {}]
  %s1 = inlined_call_operand.vmem [shape: bf16[768,32], index: 1, kind: input, shape index: {}]
  %s2 = inlined_call_operand.vmem [shape: f32[1,32], index: 2, kind: input, shape index: {}]
  %s3 = inlined_call_operand.vmem [shape: f32[32,32], index: 3, kind: output, shape index: {}]
  %s4 = sld [smem:[#allocation0]]
  $region76: #{_lambda_.33} parent=0
    _
  %s6 = ssub.s32 1, %s4
  %s7 = scalar_select 0, %s6, %s4
  $region1: #{_lambda_.33} parent=0
    #allocation3 [shape = 'u8[98304]{0}', space=vmem, size = 0x18000, scoped, tag = 'input window, operand 0']
    loop: start=0, step=1, limit=4
    $region2: #{_lambda_.33} parent=1 // loop_pre_header
      _
    $region3: #{_lambda_.33} parent=1 // loop_header
      %s9 = sphi 0, %s13
      %p10 = scmp.ge.s32.totalorder %s9, 4
      %s16 = sphi 0, %s35
      %s17 = sphi 0, %s31
      %s18 = sphi 0, %s27
      %s19 = sphi 0, %s16
      %s20 = sphi 0, %s17
      %s21 = sphi 0, %s18
      %s22 = sphi 0, %s19
      %s23 = sphi 0, %s20
      %s24 = sphi 0, %s21
      %s40 = sphi 0, %s42
      %s43 = sphi 0, %s40
      %s44 = sphi 0, %s43
      %s60 = sphi 0, %s44
      %s68 = sphi 0, %s70
      %s71 = sphi 0, %s68
      %s72 = sphi 0, %s71
      %s88 = sphi 0, %s72
      %s94 = sphi 0, %s96
      %s97 = sphi 0, %s94
      %s98 = sphi 0, %s97
      %s114 = sphi 0, %s98
      %s122 = sphi 0, %s124
      %s125 = sphi 0, %s122
      %s126 = sphi 0, %s125
      %s142 = sphi 0, %s126
    $region4: #{_lambda_.33} parent=1 // loop_header_branch
      %12 = sbr.rel (%p10) target = $region8
    $region5: #{_lambda_.33} parent=1 // loop_body
      %s14 = ssub.s32 %s9, 1
      %s15 = ssub.s32 %s9, 2
      %s25 = sadd.s32 1, %s18
      %p26 = scmp.ge.s32.totalorder %s25, 2
      %s27 = scalar_select %p26, 0, %s25
      %s28 = sadd.s32 1, %s17
      %s29 = scalar_select %p26, %s28, %s17
      %p30 = scmp.ge.s32.totalorder %s29, 1
      %s31 = scalar_select %p30, 0, %s29
      %s32 = sadd.s32 1, %s16
      %s33 = scalar_select %p30, %s32, %s16
      %p34 = scmp.ge.s32.totalorder %s33, 1
      %s35 = scalar_select %p34, 0, %s33
      %s36 = ssub.s32 %s16, %s35
      %s37 = ssub.s32 %s18, %s27
      %s38 = sor.u32 %s36, %s37
      %p39 = scmp.eq.s32.totalorder %s38, 0
      %s41 = sadd.s32 %s40, 1
      %s42 = scalar_select %p39, %s40, %s41
      %p45 = pneg %p39
      %p46 = scmp.eq.s32.totalorder %s9, 1
      %p47 = por %p45, %p46
      %p48 = scmp.ne.s32.totalorder %s40, %s43
      %p49 = scmp.eq.s32.totalorder %s9, 0
      %p50 = por %p48, %p49
      %p51 = scmp.ne.s32.totalorder %s40, %s43
      %p52 = scmp.eq.s32.totalorder %s14, 1
      %p53 = por %p51, %p52
      %p54 = scmp.ne.s32.totalorder %s43, %s44
      %p55 = scmp.eq.s32.totalorder %s14, 0
      %p56 = por %p54, %p55
      %p57 = scmp.ne.s32.totalorder %s43, %s44
      %p58 = scmp.eq.s32.totalorder %s15, 1
      %p59 = por %p57, %p58
      %p61 = scmp.ne.s32.totalorder %s44, %s60
      %p62 = scmp.eq.s32.totalorder %s15, 0
      %p63 = por %p61, %p62
      %s64 = ssub.s32 %s18, %s27
      %s65 = ssub.s32 %s17, %s31
      %s66 = sor.u32 %s64, %s65
      %p67 = scmp.eq.s32.totalorder %s66, 0
      %s69 = sadd.s32 %s68, 1
      %s70 = scalar_select %p67, %s68, %s69
      %p73 = pneg %p67
      %p74 = scmp.eq.s32.totalorder %s9, 1
      %p75 = por %p73, %p74
      %p76 = scmp.ne.s32.totalorder %s68, %s71
      %p77 = scmp.eq.s32.totalorder %s9, 0
      %p78 = por %p76, %p77
      %p79 = scmp.ne.s32.totalorder %s68, %s71
      %p80 = scmp.eq.s32.totalorder %s14, 1
      %p81 = por %p79, %p80
      %p82 = scmp.ne.s32.totalorder %s71, %s72
      %p83 = scmp.eq.s32.totalorder %s14, 0
      %p84 = por %p82, %p83
      %p85 = scmp.ne.s32.totalorder %s71, %s72
      %p86 = scmp.eq.s32.totalorder %s15, 1
      %p87 = por %p85, %p86
      %p89 = scmp.ne.s32.totalorder %s72, %s88
      %p90 = scmp.eq.s32.totalorder %s15, 0
      %p91 = por %p89, %p90
      %s92 = ssub.s32 %s17, %s31
      %p93 = scmp.eq.s32.totalorder %s92, 0
      %s95 = sadd.s32 %s94, 1
      %s96 = scalar_select %p93, %s94, %s95
      %p99 = pneg %p93
      %p100 = scmp.eq.s32.totalorder %s9, 1
      %p101 = por %p99, %p100
      %p102 = scmp.ne.s32.totalorder %s94, %s97
      %p103 = scmp.eq.s32.totalorder %s9, 0
      %p104 = por %p102, %p103
      %p105 = scmp.ne.s32.totalorder %s94, %s97
      %p106 = scmp.eq.s32.totalorder %s14, 1
      %p107 = por %p105, %p106
      %p108 = scmp.ne.s32.totalorder %s97, %s98
      %p109 = scmp.eq.s32.totalorder %s14, 0
      %p110 = por %p108, %p109
      %p111 = scmp.ne.s32.totalorder %s97, %s98
      %p112 = scmp.eq.s32.totalorder %s15, 1
      %p113 = por %p111, %p112
      %p115 = scmp.ne.s32.totalorder %s98, %s114
      %p116 = scmp.eq.s32.totalorder %s15, 0
      %p117 = por %p115, %p116
      %s118 = ssub.s32 %s16, %s35
      %s119 = ssub.s32 %s17, %s31
      %s120 = sor.u32 %s118, %s119
      %p121 = scmp.eq.s32.totalorder %s120, 0
      %s123 = sadd.s32 %s122, 1
      %s124 = scalar_select %p121, %s122, %s123
      %p127 = pneg %p121
      %p128 = scmp.eq.s32.totalorder %s9, 1
      %p129 = por %p127, %p128
      %p130 = scmp.ne.s32.totalorder %s122, %s125
      %p131 = scmp.eq.s32.totalorder %s9, 0
      %p132 = por %p130, %p131
      %p133 = scmp.ne.s32.totalorder %s122, %s125
      %p134 = scmp.eq.s32.totalorder %s14, 1
      %p135 = por %p133, %p134
      %p136 = scmp.ne.s32.totalorder %s125, %s126
      %p137 = scmp.eq.s32.totalorder %s14, 0
      %p138 = por %p136, %p137
      %p139 = scmp.ne.s32.totalorder %s125, %s126
      %p140 = scmp.eq.s32.totalorder %s15, 1
      %p141 = por %p139, %p140
      %p143 = scmp.ne.s32.totalorder %s126, %s142
      %p144 = scmp.eq.s32.totalorder %s15, 0
      %p145 = por %p143, %p144
      %p146 = scmp.le.s32.totalorder 1, %s9
      %p147 = scmp.lt.s32.totalorder %s9, 3
      %p148 = pnand %p146, %p147
      %p149 = pneg %p148
      // Predicated region
      $region9: #{_lambda_.33} parent=5 // pred_check
        _
      $region10: #{_lambda_.33} parent=5 // pred_check_branch
        %151 = sbr.rel (%p148) target = $region12
      $region11: #{_lambda_.33} parent=5 // pred_region
        %s152 = ssub.s32 %s9, 1
        // Predicated region
        $region13: #{_lambda_.33} parent=11 // pred_check
          %p153 = pneg %p110
        $region14: #{_lambda_.33} parent=11 // pred_check_branch
          %155 = sbr.rel (%p153) target = $region16
        $region15: #{_lambda_.33} parent=11 // pred_region
          %p156 = scmp.lt.s32.totalorder %s20, 0
          %s157 = scalar_select %p156, %s20, 0
          %s158 = scalar_lea.vmem %s2, %s157
        $region16: #{_lambda_.33} parent=11 // pred_fallthru
          _
      $region12: #{_lambda_.33} parent=5 // pred_fallthru
        _
      %p159 = scmp.lt.s32.totalorder %s9, 2
      // Predicated region
      $region17: #{_lambda_.33} parent=5 // pred_check
        %p160 = pneg %p159
      $region18: #{_lambda_.33} parent=5 // pred_check_branch
        %162 = sbr.rel (%p160) target = $region20
      $region19: #{_lambda_.33} parent=5 // pred_region
        // Predicated region
        $region21: #{_lambda_.33} parent=19 // pred_check
          %p163 = pneg %p50
        $region22: #{_lambda_.33} parent=19 // pred_check_branch
          %165 = sbr.rel (%p163) target = $region24
        $region23: #{_lambda_.33} parent=19 // pred_region
          %s166 = sand.u32 %s40, 1
          %s167 = sand.u32 %s40, 1
          %s168 = smul.addr %s167, 96
          %s169 = scalar_lea.vmem [#allocation3], %s168
          %s170 = smul.u32 4, %s16
          %s171 = smul.u32 3, %s18
          %s172 = smul.addr %s170, 6
          %s173 = sadd.s32 %s171, %s172
          %s174 = smul.addr %s173, 8
          %s175 = scalar_lea.vmem %s0, %s174
          // Predicated region
          $region25: #{_lambda_.33} parent=23 // pred_check
            _
          $region26: #{_lambda_.33} parent=23 // pred_check_branch
            %177 = sbr.rel (0) target = $region28
          $region27: #{_lambda_.33} parent=23 // pred_region
            // Predicated region
            $region29: #{_lambda_.33} parent=27 // pred_check
              _
            $region30: #{_lambda_.33} parent=27 // pred_check_branch
              %179 = sbr.rel (0) target = $region32
            $region31: #{_lambda_.33} parent=27 // pred_region
              loop: start=0, step=1, limit=1
              $region33: #{_lambda_.33} parent=31 // loop_pre_header
                _
              $region34: #{_lambda_.33} parent=31 // loop_header
                %s181 = sphi 0, %s185
                %p182 = scmp.ge.s32.totalorder %s181, 1
                %s186 = sphi %s175, %s175
                %s187 = sphi %s169, %s169
              $region35: #{_lambda_.33} parent=31 // loop_header_branch
                %184 = sbr.rel (%p182) target = $region39
              $region36: #{_lambda_.33} parent=31 // loop_body
                %v188 = vld [vmem:[%s186] sm:$0xff]
                %189 = vst [vmem:[%s187] sm:$0xff] %v188
                %v190 = vld [vmem:[%s186 + $0x8] sm:$0xff]
                %191 = vst [vmem:[%s187 + $0x8] sm:$0xff] %v190
                %v192 = vld [vmem:[%s186 + $0x10] sm:$0xff]
                %193 = vst [vmem:[%s187 + $0x10] sm:$0xff] %v192
                %v194 = vld [vmem:[%s186 + $0x30] sm:$0xff]
                %195 = vst [vmem:[%s187 + $0x18] sm:$0xff] %v194
                %v196 = vld [vmem:[%s186 + $0x38] sm:$0xff]
                %197 = vst [vmem:[%s187 + $0x20] sm:$0xff] %v196
                %v198 = vld [vmem:[%s186 + $0x40] sm:$0xff]
                %199 = vst [vmem:[%s187 + $0x28] sm:$0xff] %v198
                %v200 = vld [vmem:[%s186 + $0x60] sm:$0xff]
                %201 = vst [vmem:[%s187 + $0x30] sm:$0xff] %v200
                %v202 = vld [vmem:[%s186 + $0x68] sm:$0xff]
                %203 = vst [vmem:[%s187 + $0x38] sm:$0xff] %v202
                %v204 = vld [vmem:[%s186 + $0x70] sm:$0xff]
                %205 = vst [vmem:[%s187 + $0x40] sm:$0xff] %v204
                %v206 = vld [vmem:[%s186 + $0x90] sm:$0xff]
                %207 = vst [vmem:[%s187 + $0x48] sm:$0xff] %v206
                %v208 = vld [vmem:[%s186 + $0x98] sm:$0xff]
                %209 = vst [vmem:[%s187 + $0x50] sm:$0xff] %v208
                %v210 = vld [vmem:[%s186 + $0xa0] sm:$0xff]
                %211 = vst [vmem:[%s187 + $0x58] sm:$0xff] %v210
              $region37: #{_lambda_.33} parent=31 // loop_footer
                %s185 = sadd.s32 1, %s181
              $region38: #{_lambda_.33} parent=31 // loop_footer_branch
                %180 = sbr.rel target = $region34
              $region39: #{_lambda_.33} parent=31 // loop_exit
                _
            $region32: #{_lambda_.33} parent=27 // pred_fallthru
              _
            // Predicated region
            $region40: #{_lambda_.33} parent=27 // pred_check
              _
            $region41: #{_lambda_.33} parent=27 // pred_check_branch
              %213 = sbr.rel target = $region43
            $region42: #{_lambda_.33} parent=27 // pred_region
              _
            $region43: #{_lambda_.33} parent=27 // pred_fallthru
              _
          $region28: #{_lambda_.33} parent=23 // pred_fallthru
            _
          %214 = vnop
        $region24: #{_lambda_.33} parent=19 // pred_fallthru
          _
        // Predicated region
        $region44: #{_lambda_.33} parent=19 // pred_check
          %p215 = pneg %p78
        $region45: #{_lambda_.33} parent=19 // pred_check_branch
          %217 = sbr.rel (%p215) target = $region47
        $region46: #{_lambda_.33} parent=19 // pred_region
          %s218 = smul.u32 48, %s18
          %p219 = scmp.lt.s32.totalorder %s218, 95
          %s220 = scalar_select %p219, %s218, 95
          %p221 = scmp.lt.s32.totalorder %s17, 0
          %s222 = scalar_select %p221, %s17, 0
          %s223 = sadd.s32 %s222, %s220
          %s224 = smul.addr %s223, 4
          %s225 = scalar_lea.vmem %s1, %s224
          %s226 = smul.u32 48, %s18
        $region47: #{_lambda_.33} parent=19 // pred_fallthru
          _
      $region20: #{_lambda_.33} parent=5 // pred_fallthru
        _
      %p227 = scmp.le.s32.totalorder 1, %s9
      %p228 = scmp.lt.s32.totalorder %s9, 3
      %p229 = pnand %p227, %p228
      %p230 = pneg %p229
      // Predicated region
      $region48: #{_lambda_.33} parent=5 // pred_check
        _
      $region49: #{_lambda_.33} parent=5 // pred_check_branch
        %232 = sbr.rel (%p229) target = $region51
      $region50: #{_lambda_.33} parent=5 // pred_region
        %s233 = ssub.s32 %s9, 1
        %s234 = sand.u32 %s43, 1
        %s235 = sand.u32 %s43, 1
        %s236 = smul.addr %s235, 96
        %s237 = scalar_lea.vmem [#allocation3], %s236
        // Predicated region
        $region52: #{_lambda_.33} parent=50 // pred_check
          %p238 = pneg %p56
        $region53: #{_lambda_.33} parent=50 // pred_check_branch
          %240 = sbr.rel (%p238) target = $region55
        $region54: #{_lambda_.33} parent=50 // pred_region
          _
        $region55: #{_lambda_.33} parent=50 // pred_fallthru
          _
        %s241 = sand.u32 %s43, 1
        %s242 = sand.u32 %s43, 1
        %s243 = smul.addr %s242, 96
        %s244 = scalar_lea.vmem [#allocation3], %s243
        %p245 = pneg %p56
        %p246 = pneg %p53
        %s247 = smul.u32 48, %s21
        %p248 = scmp.lt.s32.totalorder %s247, 95
        %s249 = scalar_select %p248, %s247, 95
        %p250 = scmp.lt.s32.totalorder %s20, 0
        %s251 = scalar_select %p250, %s20, 0
        %s252 = sadd.s32 %s251, %s249
        %s253 = smul.addr %s252, 4
        %s254 = scalar_lea.vmem %s1, %s253
        %p255 = pneg %p84
        %p256 = pneg %p81
        %p257 = scmp.lt.s32.totalorder %s20, 0
        %s258 = scalar_select %p257, %s20, 0
        %s259 = scalar_lea.vmem %s2, %s258
        %p260 = pneg %p110
        %p261 = pneg %p107
        %p262 = pneg %p138
        %p263 = pneg %p135
        %s264 = smul.u32 4, %s19
        %p265 = scmp.lt.s32.totalorder %s264, 3
        %s266 = scalar_select %p265, %s264, 3
        %p267 = scmp.lt.s32.totalorder %s20, 0
        %s268 = scalar_select %p267, %s20, 0
        %s269 = sadd.s32 %s268, %s266
        %s270 = smul.addr %s269, 8
        %s271 = scalar_lea.vmem %s3, %s270
        %s272 = smul.u32 4, %s19
        %s273 = smul.u32 3, %s21
        %s274 = smul.u32 48, %s21
        %p275 = scmp.lt.s32.totalorder %s274, 95
        %s276 = scalar_select %p275, %s274, 95
        %p277 = scmp.lt.s32.totalorder %s20, 0
        %s278 = scalar_select %p277, %s20, 0
        %s279 = sadd.s32 %s278, %s276
        %s280 = smul.addr %s279, 4
        %s281 = scalar_lea.vmem %s1, %s280
        %s282 = smul.u32 48, %s21
        %p283 = scmp.lt.s32.totalorder %s20, 0
        %s284 = scalar_select %p283, %s20, 0
        %s285 = scalar_lea.vmem %s2, %s284
        %s286 = smul.u32 4, %s19
        %p287 = scmp.lt.s32.totalorder %s286, 3
        %s288 = scalar_select %p287, %s286, 3
        %p289 = scmp.lt.s32.totalorder %s20, 0
        %s290 = scalar_select %p289, %s20, 0
        %s291 = sadd.s32 %s290, %s288
        %s292 = smul.addr %s291, 8
        %s293 = scalar_lea.vmem %s3, %s292
        %s294 = smul.u32 4, %s19
        %p296 = scmp.eq.s32.totalorder %s21, 0
        // Predicated region
        $region56: #{_lambda_.33} parent=50 // pred_check
          %p297 = pneg %p296
        $region57: #{_lambda_.33} parent=50 // pred_check_branch
          %299 = sbr.rel (%p297) target = $region59
        $region58: #{_lambda_.33} parent=50 // pred_region
          %vm300 = vcmask 261120
          %301 = vst.msk [vmem:[#allocation2] sm:$0xff] %vm300, 0.0
          %302 = vst.msk [vmem:[#allocation2 + $0x8] sm:$0xff] %vm300, 0.0
          %303 = vst.msk [vmem:[#allocation2 + $0x10] sm:$0xff] %vm300, 0.0
          %304 = vst.msk [vmem:[#allocation2 + $0x18] sm:$0xff] %vm300, 0.0
        $region59: #{_lambda_.33} parent=50 // pred_fallthru
          _
        %v305 = vld [vmem:[#allocation2] sm:$0xff]
        %v306 = vld [vmem:[#allocation2 + $0x8] sm:$0xff]
        %v307 = vld [vmem:[#allocation2 + $0x10] sm:$0xff]
        %v308 = vld [vmem:[#allocation2 + $0x18] sm:$0xff]
        %v309 = vld [vmem:[%s237] sm:$0xff]
        %v310 = vld [vmem:[%s237 + $0x8] sm:$0xff]
        %v311 = vld [vmem:[%s237 + $0x10] sm:$0xff]
        %v312 = vld [vmem:[%s237 + $0x18] sm:$0xff]
        %v313 = vld [vmem:[%s237 + $0x20] sm:$0xff]
        %v314 = vld [vmem:[%s237 + $0x28] sm:$0xff]
        %v315 = vld [vmem:[%s237 + $0x30] sm:$0xff]
        %v316 = vld [vmem:[%s237 + $0x38] sm:$0xff]
        %v317 = vld [vmem:[%s237 + $0x40] sm:$0xff]
        %v318 = vld [vmem:[%s237 + $0x48] sm:$0xff]
        %v319 = vld [vmem:[%s237 + $0x50] sm:$0xff]
        %v320 = vld [vmem:[%s237 + $0x58] sm:$0xff]
        %v321 = vpack.c.bf16 %v312, %v309
        %v322 = vpack.c.bf16 %v313, %v310
        %v323 = vpack.c.bf16 %v314, %v311
        %v324 = vpack.c.bf16 %v318, %v315
        %v325 = vpack.c.bf16 %v319, %v316
        %v326 = vpack.c.bf16 %v320, %v317
        %v327 = vld [vmem:[%s281] sm:$0xf]
        %v328 = vld [vmem:[%s281 + $0x4] sm:$0xf]
        %v329 = vld [vmem:[%s281 + $0x8] sm:$0xf]
        %v330 = vld [vmem:[%s281 + $0xc] sm:$0xf]
        %v331 = vld [vmem:[%s281 + $0x10] sm:$0xf]
        %v332 = vld [vmem:[%s281 + $0x14] sm:$0xf]
        %v333 = vld [vmem:[%s281 + $0x18] sm:$0xf]
        %v334 = vld [vmem:[%s281 + $0x1c] sm:$0xf]
        %v335 = vld [vmem:[%s281 + $0x20] sm:$0xf]
        %v336 = vld [vmem:[%s281 + $0x24] sm:$0xf]
        %v337 = vld [vmem:[%s281 + $0x28] sm:$0xf]
        %v338 = vld [vmem:[%s281 + $0x2c] sm:$0xf]
        %v339 = vld [vmem:[%s281 + $0x30] sm:$0xf]
        %v340 = vld [vmem:[%s281 + $0x34] sm:$0xf]
        %v341 = vld [vmem:[%s281 + $0x38] sm:$0xf]
        %v342 = vld [vmem:[%s281 + $0x3c] sm:$0xf]
        %v343 = vld [vmem:[%s281 + $0x40] sm:$0xf]
        %v344 = vld [vmem:[%s281 + $0x44] sm:$0xf]
        %v345 = vld [vmem:[%s281 + $0x48] sm:$0xf]
        %v346 = vld [vmem:[%s281 + $0x4c] sm:$0xf]
        %v347 = vld [vmem:[%s281 + $0x50] sm:$0xf]
        %v348 = vld [vmem:[%s281 + $0x54] sm:$0xf]
        %v349 = vld [vmem:[%s281 + $0x58] sm:$0xf]
        %v350 = vld [vmem:[%s281 + $0x5c] sm:$0xf]
        %v351 = vld [vmem:[%s281 + $0x60] sm:$0xf]
        %v352 = vld [vmem:[%s281 + $0x64] sm:$0xf]
        %v353 = vld [vmem:[%s281 + $0x68] sm:$0xf]
        %v354 = vld [vmem:[%s281 + $0x6c] sm:$0xf]
        %v355 = vld [vmem:[%s281 + $0x70] sm:$0xf]
        %v356 = vld [vmem:[%s281 + $0x74] sm:$0xf]
        %v357 = vld [vmem:[%s281 + $0x78] sm:$0xf]
        %v358 = vld [vmem:[%s281 + $0x7c] sm:$0xf]
        %v359 = vld [vmem:[%s281 + $0x80] sm:$0xf]
        %v360 = vld [vmem:[%s281 + $0x84] sm:$0xf]
        %v361 = vld [vmem:[%s281 + $0x88] sm:$0xf]
        %v362 = vld [vmem:[%s281 + $0x8c] sm:$0xf]
        %v363 = vld [vmem:[%s281 + $0x90] sm:$0xf]
        %v364 = vld [vmem:[%s281 + $0x94] sm:$0xf]
        %v365 = vld [vmem:[%s281 + $0x98] sm:$0xf]
        %v366 = vld [vmem:[%s281 + $0x9c] sm:$0xf]
        %v367 = vld [vmem:[%s281 + $0xa0] sm:$0xf]
        %v368 = vld [vmem:[%s281 + $0xa4] sm:$0xf]
        %v369 = vld [vmem:[%s281 + $0xa8] sm:$0xf]
        %v370 = vld [vmem:[%s281 + $0xac] sm:$0xf]
        %v371 = vld [vmem:[%s281 + $0xb0] sm:$0xf]
        %v372 = vld [vmem:[%s281 + $0xb4] sm:$0xf]
        %v373 = vld [vmem:[%s281 + $0xb8] sm:$0xf]
        %v374 = vld [vmem:[%s281 + $0xbc] sm:$0xf]
        %v423 = vunpack.c.l.b16 %v327
        %v424 = vunpack.c.l.b16 %v328
        %v425 = vunpack.c.l.b16 %v329
        %v426 = vunpack.c.l.b16 %v330
        %v427 = vunpack.c.l.b16 %v331
        %v428 = vunpack.c.l.b16 %v332
        %v429 = vunpack.c.l.b16 %v333
        %v430 = vunpack.c.l.b16 %v334
        %v431 = vunpack.c.l.b16 %v335
        %v432 = vunpack.c.l.b16 %v336
        %v433 = vunpack.c.l.b16 %v337
        %v434 = vunpack.c.l.b16 %v338
        %v435 = vunpack.c.l.b16 %v339
        %v436 = vunpack.c.l.b16 %v340
        %v437 = vunpack.c.l.b16 %v341
        %v438 = vunpack.c.l.b16 %v342
        %v439 = vunpack.c.l.b16 %v343
        %v440 = vunpack.c.l.b16 %v344
        %v441 = vunpack.c.l.b16 %v345
        %v442 = vunpack.c.l.b16 %v346
        %v443 = vunpack.c.l.b16 %v347
        %v444 = vunpack.c.l.b16 %v348
        %v445 = vunpack.c.l.b16 %v349
        %v446 = vunpack.c.l.b16 %v350
        %v447 = vunpack.c.l.b16 %v351
        %v448 = vunpack.c.l.b16 %v352
        %v449 = vunpack.c.l.b16 %v353
        %v450 = vunpack.c.l.b16 %v354
        %v451 = vunpack.c.l.b16 %v355
        %v452 = vunpack.c.l.b16 %v356
        %v453 = vunpack.c.l.b16 %v357
        %v454 = vunpack.c.l.b16 %v358
        %v455 = vunpack.c.l.b16 %v359
        %v456 = vunpack.c.l.b16 %v360
        %v457 = vunpack.c.l.b16 %v361
        %v458 = vunpack.c.l.b16 %v362
        %v459 = vunpack.c.l.b16 %v363
        %v460 = vunpack.c.l.b16 %v364
        %v461 = vunpack.c.l.b16 %v365
        %v462 = vunpack.c.l.b16 %v366
        %v463 = vunpack.c.l.b16 %v367
        %v464 = vunpack.c.l.b16 %v368
        %v465 = vunpack.c.l.b16 %v369
        %v466 = vunpack.c.l.b16 %v370
        %v467 = vunpack.c.l.b16 %v371
        %v468 = vunpack.c.l.b16 %v372
        %v469 = vunpack.c.l.b16 %v373
        %v470 = vunpack.c.l.b16 %v374
        %v471 = vpack.c.b16 %v424, %v423
        %v472 = vpack.c.b16 %v426, %v425
        %v473 = vpack.c.b16 %v428, %v427
        %v474 = vpack.c.b16 %v430, %v429
        %v475 = vpack.c.b16 %v432, %v431
        %v476 = vpack.c.b16 %v434, %v433
        %v477 = vpack.c.b16 %v436, %v435
        %v478 = vpack.c.b16 %v438, %v437
        %v479 = vpack.c.b16 %v440, %v439
        %v480 = vpack.c.b16 %v442, %v441
        %v481 = vpack.c.b16 %v444, %v443
        %v482 = vpack.c.b16 %v446, %v445
        %v483 = vpack.c.b16 %v448, %v447
        %v484 = vpack.c.b16 %v450, %v449
        %v485 = vpack.c.b16 %v452, %v451
        %v486 = vpack.c.b16 %v454, %v453
        %v487 = vpack.c.b16 %v456, %v455
        %v488 = vpack.c.b16 %v458, %v457
        %v489 = vpack.c.b16 %v460, %v459
        %v490 = vpack.c.b16 %v462, %v461
        %v491 = vpack.c.b16 %v464, %v463
        %v492 = vpack.c.b16 %v466, %v465
        %v493 = vpack.c.b16 %v468, %v467
        %v494 = vpack.c.b16 %v470, %v469
        %519 = vmatprep.subr.bf16.mxu0 0
        %520 = vmatpush1.bf16.msra.mxu0 %v471
        %521 = vmatprep.subr.bf16.mxu0 0
        %522 = vmatpush1.bf16.msra.mxu0 %v472
        %523 = vmatprep.subr.bf16.mxu0 0
        %524 = vmatpush1.bf16.msra.mxu0 %v473
        %525 = vmatprep.subr.bf16.mxu0 0
        %526 = vmatpush1.bf16.msra.mxu0 %v474
        %527 = vmatprep.subr.bf16.mxu0 0
        %528 = vmatpush1.bf16.msra.mxu0 %v475
        %529 = vmatprep.subr.bf16.mxu0 0
        %530 = vmatpush1.bf16.msra.mxu0 %v476
        %531 = vmatprep.subr.bf16.mxu0 0
        %532 = vmatpush1.bf16.msra.mxu0 %v477
        %533 = vmatprep.subr.bf16.mxu0 0
        %534 = vmatpush1.bf16.msra.mxu0 %v478
        %535 = vmatprep.subr.bf16.mxu0 0
        %536 = vmatpush1.bf16.msra.mxu0 %v479
        %537 = vmatprep.subr.bf16.mxu0 0
        %538 = vmatpush1.bf16.msra.mxu0 %v480
        %539 = vmatprep.subr.bf16.mxu0 0
        %540 = vmatpush1.bf16.msra.mxu0 %v481
        %541 = vmatprep.subr.bf16.mxu0 0
        %542 = vmatpush1.bf16.msra.mxu0 %v482
        %543 = vmatprep.subr.bf16.mxu0 0
        %544 = vmatpush1.bf16.msra.mxu0 %v483
        %545 = vmatprep.subr.bf16.mxu0 0
        %546 = vmatpush1.bf16.msra.mxu0 %v484
        %547 = vmatprep.subr.bf16.mxu0 0
        %548 = vmatpush1.bf16.msra.mxu0 %v485
        %549 = vmatprep.subr.bf16.mxu0 0
        %550 = vmatpush1.bf16.msra.mxu0 %v486
        %551 = vmatprep.mubr.bf16.mxu0 %v322
        %552 = vmatmul.mubr.bf16.gmra.mrb[0].mxu0 %v321
        %v553 = vpop.f32.mrb[0].mxu0
        %v554 = vadd.f32 0.0, %v553
        %v555 = vpop.f32.mrb[0].mxu0
        %v556 = vpop.f32.mrb[0].mxu0
        %v557 = vadd.f32 0.0, %v556
        %v558 = vpop.f32.mrb[0].mxu0
        %559 = vmatprep.mubr.bf16.mxu0 %v325
        %560 = vmatmul.mubr.bf16.gmra.mrb[0].mxu0 %v324
        %v561 = vpop.f32.mrb[0].mxu0
        %v562 = vadd.f32 0.0, %v561
        %v563 = vpop.f32.mrb[0].mxu0
        %v564 = vpop.f32.mrb[0].mxu0
        %v565 = vadd.f32 0.0, %v564
        %v566 = vpop.f32.mrb[0].mxu0
        %567 = vdwg.mxu0
        %568 = vmatprep.subr.bf16.mxu0 0
        %569 = vmatpush1.bf16.msra.mxu0 %v487
        %570 = vmatprep.subr.bf16.mxu0 0
        %571 = vmatpush1.bf16.msra.mxu0 %v488
        %572 = vmatprep.subr.bf16.mxu0 0
        %573 = vmatpush1.bf16.msra.mxu0 %v489
        %574 = vmatprep.subr.bf16.mxu0 0
        %575 = vmatpush1.bf16.msra.mxu0 %v490
        %576 = vmatprep.subr.bf16.mxu0 0
        %577 = vmatpush1.bf16.msra.mxu0 %v491
        %578 = vmatprep.subr.bf16.mxu0 0
        %579 = vmatpush1.bf16.msra.mxu0 %v492
        %580 = vmatprep.subr.bf16.mxu0 0
        %581 = vmatpush1.bf16.msra.mxu0 %v493
        %582 = vmatprep.subr.bf16.mxu0 0
        %583 = vmatpush1.bf16.msra.mxu0 %v494
        %584 = vmatprep.subr.bf16.mxu0 0
        %585 = vmatpush1.bf16.msra.mxu0 0
        %586 = vmatprep.subr.bf16.mxu0 0
        %587 = vmatpush1.bf16.msra.mxu0 0
        %588 = vmatprep.subr.bf16.mxu0 0
        %589 = vmatpush1.bf16.msra.mxu0 0
        %590 = vmatprep.subr.bf16.mxu0 0
        %591 = vmatpush1.bf16.msra.mxu0 0
        %592 = vmatprep.subr.bf16.mxu0 0
        %593 = vmatpush1.bf16.msra.mxu0 0
        %594 = vmatprep.subr.bf16.mxu0 0
        %595 = vmatpush1.bf16.msra.mxu0 0
        %596 = vmatprep.subr.bf16.mxu0 0
        %597 = vmatpush1.bf16.msra.mxu0 0
        %598 = vmatprep.subr.bf16.mxu0 0
        %599 = vmatpush1.bf16.msra.mxu0 0
        %600 = vmatprep.mubr.bf16.mxu0 0
        %601 = vmatmul.mubr.bf16.gmra.mrb[0].mxu0 %v323
        %v602 = vpop.f32.mrb[0].mxu0
        %v603 = vadd.f32 %v554, %v602
        %v604 = vpop.f32.mrb[0].mxu0
        %v605 = vpop.f32.mrb[0].mxu0
        %v606 = vadd.f32 %v557, %v605
        %v607 = vpop.f32.mrb[0].mxu0
        %608 = vmatprep.mubr.bf16.mxu0 0
        %609 = vmatmul.mubr.bf16.gmra.mrb[0].mxu0 %v326
        %v610 = vpop.f32.mrb[0].mxu0
        %v611 = vadd.f32 %v562, %v610
        %v612 = vpop.f32.mrb[0].mxu0
        %v613 = vpop.f32.mrb[0].mxu0
        %v614 = vadd.f32 %v565, %v613
        %v615 = vpop.f32.mrb[0].mxu0
        %616 = vdwg.mxu0
        %v617 = vadd.f32 %v305, %v603
        %v618 = vadd.f32 %v306, %v606
        %v619 = vadd.f32 %v307, %v611
        %v620 = vadd.f32 %v308, %v614
        %vm621 = vcmask 261120
        %622 = vst.msk [vmem:[#allocation2] sm:$0xff] %vm621, %v617
        %623 = vst.msk [vmem:[#allocation2 + $0x8] sm:$0xff] %vm621, %v618
        %624 = vst.msk [vmem:[#allocation2 + $0x10] sm:$0xff] %vm621, %v619
        %625 = vst.msk [vmem:[#allocation2 + $0x18] sm:$0xff] %vm621, %v620
        %p626 = scmp.eq.s32.totalorder %s21, 1
        // Predicated region
        $region60: #{_lambda_.33} parent=50 // pred_check
          %p627 = pneg %p626
        $region61: #{_lambda_.33} parent=50 // pred_check_branch
          %629 = sbr.rel (%p627) target = $region63
        $region62: #{_lambda_.33} parent=50 // pred_region
          %v630 = vld [vmem:[#allocation2] sm:$0xff]
          %v631 = vld [vmem:[#allocation2 + $0x8] sm:$0xff]
          %v632 = vld [vmem:[#allocation2 + $0x10] sm:$0xff]
          %v633 = vld [vmem:[#allocation2 + $0x18] sm:$0xff]
          %v634 = vld [vmem:[%s285] sm:$0x1]
          %v636 = vlaneseq
          %v637 = vshrl.u32 %v636, 7
          %v638 = vsub.s32 0, %v637
          %v639 = vrot.slane %v634, %v638
          %v641 = vadd.f32 %v630, %v639
          %v642 = vadd.f32 %v631, %v639
          %v643 = vadd.f32 %v632, %v639
          %v644 = vadd.f32 %v633, %v639
          %645 = vst.msk [vmem:[%s293] sm:$0xff] %vm621, %v641
          %646 = vst.msk [vmem:[%s293 + $0x8] sm:$0xff] %vm621, %v642
          %647 = vst.msk [vmem:[%s293 + $0x10] sm:$0xff] %vm621, %v643
          %648 = vst.msk [vmem:[%s293 + $0x18] sm:$0xff] %vm621, %v644
        $region63: #{_lambda_.33} parent=50 // pred_fallthru
          _
        %s649 = smul.u32 4, %s19
        %p650 = scmp.lt.s32.totalorder %s649, 3
        %s651 = scalar_select %p650, %s649, 3
        %p652 = scmp.lt.s32.totalorder %s20, 0
        %s653 = scalar_select %p652, %s20, 0
        %s654 = sadd.s32 %s653, %s651
        %s655 = smul.addr %s654, 8
        %s656 = scalar_lea.vmem %s3, %s655
        // Predicated region
        $region64: #{_lambda_.33} parent=50 // pred_check
          %p657 = pneg %p135
        $region65: #{_lambda_.33} parent=50 // pred_check_branch
          %659 = sbr.rel (%p657) target = $region67
        $region66: #{_lambda_.33} parent=50 // pred_region
          %s660 = smul.u32 4, %s19
        $region67: #{_lambda_.33} parent=50 // pred_fallthru
          _
        // Predicated region
        $region68: #{_lambda_.33} parent=50 // pred_check
          %p661 = pneg %p135
        $region69: #{_lambda_.33} parent=50 // pred_check_branch
          %663 = sbr.rel (%p661) target = $region71
        $region70: #{_lambda_.33} parent=50 // pred_region
          %s664 = smul.u32 4, %s19
          %p665 = scmp.lt.s32.totalorder %s664, 3
          %s666 = scalar_select %p665, %s664, 3
          %p667 = scmp.lt.s32.totalorder %s20, 0
          %s668 = scalar_select %p667, %s20, 0
          %s669 = sadd.s32 %s668, %s666
          %s670 = smul.addr %s669, 8
          %s671 = scalar_lea.vmem %s3, %s670
        $region71: #{_lambda_.33} parent=50 // pred_fallthru
          _
      $region51: #{_lambda_.33} parent=5 // pred_fallthru
        _
      %p672 = scmp.le.s32.totalorder 2, %s9
      // Predicated region
      $region72: #{_lambda_.33} parent=5 // pred_check
        %p673 = pneg %p672
      $region73: #{_lambda_.33} parent=5 // pred_check_branch
        %675 = sbr.rel (%p673) target = $region75
      $region74: #{_lambda_.33} parent=5 // pred_region
        %s676 = ssub.s32 %s9, 2
      $region75: #{_lambda_.33} parent=5 // pred_fallthru
        _
    $region6: #{_lambda_.33} parent=1 // loop_footer
      %s13 = sadd.s32 1, %s9
    $region7: #{_lambda_.33} parent=1 // loop_footer_branch
      %8 = sbr.rel target = $region3
    $region8: #{_lambda_.33} parent=1 // loop_exit
      _

// kernel: _lambda_.35
$region0: #{_lambda_.35}
  #allocation0 [shape = 'u32[]', space=smem, size = 0x4, offset = 0x4, fixed_abs, tag = 'smem constant byte address 0x4 - core index']
  #allocation1 [shape = 'u32[144,128]{1,0:T(1,128)}', space=vmem, size = 0x12000, scoped, tag = 'internal scratch']
  #allocation2 [shape = 'f32[32,96]{1,0:T(8,128)}', space=vmem, size = 0x4000, scoped, tag = 'scratch operand']
  %s0 = inlined_call_operand.vmem [shape: f32[32,32], index: 0, kind: input, shape index: {}]
  %s1 = inlined_call_operand.vmem [shape: bf16[32,96], index: 1, kind: input, shape index: {}]
  %s2 = inlined_call_operand.vmem [shape: f32[1,96], index: 2, kind: input, shape index: {}]
  %s3 = inlined_call_operand.vmem [shape: f32[32,96], index: 3, kind: output, shape index: {}]
  %s4 = sld [smem:[#allocation0]]
  $region30: #{_lambda_.35} parent=0
    _
  %s6 = ssub.s32 1, %s4
  %s7 = scalar_select 0, %s6, %s4
  // Predicated region
  $region2: #{_lambda_.35} parent=0 // pred_check
    _
  $region3: #{_lambda_.35} parent=0 // pred_check_branch
    %9 = sbr.rel (0) target = $region5
  $region4: #{_lambda_.35} parent=0 // pred_region
    _
  $region5: #{_lambda_.35} parent=0 // pred_fallthru
    _
  // Predicated region
  $region6: #{_lambda_.35} parent=0 // pred_check
    _
  $region7: #{_lambda_.35} parent=0 // pred_check_branch
    %11 = sbr.rel (0) target = $region9
  $region8: #{_lambda_.35} parent=0 // pred_region
    _
  $region9: #{_lambda_.35} parent=0 // pred_fallthru
    _
  // Predicated region
  $region10: #{_lambda_.35} parent=0 // pred_check
    _
  $region11: #{_lambda_.35} parent=0 // pred_check_branch
    %13 = sbr.rel (0) target = $region13
  $region12: #{_lambda_.35} parent=0 // pred_region
    _
  $region13: #{_lambda_.35} parent=0 // pred_fallthru
    _
  %p15 = scmp.eq.s32.totalorder 0, 0
  // Predicated region
  $region14: #{_lambda_.35} parent=0 // pred_check
    %p16 = pneg %p15
  $region15: #{_lambda_.35} parent=0 // pred_check_branch
    %18 = sbr.rel (%p16) target = $region17
  $region16: #{_lambda_.35} parent=0 // pred_region
    %vm19 = vcmask 785408
    %20 = vst.msk [vmem:[#allocation2] sm:$0xff] %vm19, 0.0
    %21 = vst.msk [vmem:[#allocation2 + $0x8] sm:$0xff] %vm19, 0.0
    %22 = vst.msk [vmem:[#allocation2 + $0x10] sm:$0xff] %vm19, 0.0
    %23 = vst.msk [vmem:[#allocation2 + $0x18] sm:$0xff] %vm19, 0.0
  $region17: #{_lambda_.35} parent=0 // pred_fallthru
    _
  %v24 = vld [vmem:[#allocation2] sm:$0xff]
  %v25 = vld [vmem:[#allocation2 + $0x8] sm:$0xff]
  %v26 = vld [vmem:[#allocation2 + $0x10] sm:$0xff]
  %v27 = vld [vmem:[#allocation2 + $0x18] sm:$0xff]
  %v28 = vld [vmem:[%s0] sm:$0xff]
  %v29 = vld [vmem:[%s0 + $0x8] sm:$0xff]
  %v30 = vld [vmem:[%s0 + $0x10] sm:$0xff]
  %v31 = vld [vmem:[%s0 + $0x18] sm:$0xff]
  %v32 = vpack.c.bf16 %v29, %v28
  %v33 = vpack.c.bf16 %v31, %v30
  %v34 = vld [vmem:[%s1] sm:$0xf]
  %v35 = vld [vmem:[%s1 + $0x4] sm:$0xf]
  %v36 = vld [vmem:[%s1 + $0x8] sm:$0xf]
  %v37 = vld [vmem:[%s1 + $0xc] sm:$0xf]
  %v42 = vunpack.c.l.b16 %v34
  %v43 = vunpack.c.l.b16 %v35
  %v44 = vunpack.c.l.b16 %v36
  %v45 = vunpack.c.l.b16 %v37
  %v46 = vpack.c.b16 %v43, %v42
  %v47 = vpack.c.b16 %v45, %v44
  %vm50 = vcmask 261120
  %v52 = vsel %vm50, %v32, 0
  %v55 = vsel %vm50, %v33, 0
  %57 = vmatprep.subr.bf16.mxu0 0
  %58 = vmatpush1.bf16.msra.mxu0 %v46
  %59 = vmatprep.subr.bf16.mxu0 0
  %60 = vmatpush1.bf16.msra.mxu0 %v47
  %61 = vmatprep.subr.bf16.mxu0 0
  %62 = vmatpush1.bf16.msra.mxu0 0
  %63 = vmatprep.subr.bf16.mxu0 0
  %64 = vmatpush1.bf16.msra.mxu0 0
  %65 = vmatprep.subr.bf16.mxu0 0
  %66 = vmatpush1.bf16.msra.mxu0 0
  %67 = vmatprep.subr.bf16.mxu0 0
  %68 = vmatpush1.bf16.msra.mxu0 0
  %69 = vmatprep.subr.bf16.mxu0 0
  %70 = vmatpush1.bf16.msra.mxu0 0
  %71 = vmatprep.subr.bf16.mxu0 0
  %72 = vmatpush1.bf16.msra.mxu0 0
  %73 = vmatprep.subr.bf16.mxu0 0
  %74 = vmatpush1.bf16.msra.mxu0 0
  %75 = vmatprep.subr.bf16.mxu0 0
  %76 = vmatpush1.bf16.msra.mxu0 0
  %77 = vmatprep.subr.bf16.mxu0 0
  %78 = vmatpush1.bf16.msra.mxu0 0
  %79 = vmatprep.subr.bf16.mxu0 0
  %80 = vmatpush1.bf16.msra.mxu0 0
  %81 = vmatprep.subr.bf16.mxu0 0
  %82 = vmatpush1.bf16.msra.mxu0 0
  %83 = vmatprep.subr.bf16.mxu0 0
  %84 = vmatpush1.bf16.msra.mxu0 0
  %85 = vmatprep.subr.bf16.mxu0 0
  %86 = vmatpush1.bf16.msra.mxu0 0
  %87 = vmatprep.subr.bf16.mxu0 0
  %88 = vmatpush1.bf16.msra.mxu0 0
  %89 = vmatprep.mubr.bf16.mxu0 0
  %90 = vmatmul.mubr.bf16.gmra.mrb[0].mxu0 %v52
  %v91 = vpop.f32.mrb[0].mxu0
  %v92 = vadd.f32 0.0, %v91
  %v93 = vpop.f32.mrb[0].mxu0
  %v94 = vpop.f32.mrb[0].mxu0
  %v95 = vadd.f32 0.0, %v94
  %v96 = vpop.f32.mrb[0].mxu0
  %97 = vmatprep.mubr.bf16.mxu0 0
  %98 = vmatmul.mubr.bf16.gmra.mrb[0].mxu0 %v55
  %v99 = vpop.f32.mrb[0].mxu0
  %v100 = vadd.f32 0.0, %v99
  %v101 = vpop.f32.mrb[0].mxu0
  %v102 = vpop.f32.mrb[0].mxu0
  %v103 = vadd.f32 0.0, %v102
  %v104 = vpop.f32.mrb[0].mxu0
  %105 = vdwg.mxu0
  %v106 = vadd.f32 %v24, %v92
  %v107 = vadd.f32 %v25, %v95
  %v108 = vadd.f32 %v26, %v100
  %v109 = vadd.f32 %v27, %v103
  %vm110 = vcmask 785408
  %111 = vst.msk [vmem:[#allocation2] sm:$0xff] %vm110, %v106
  %112 = vst.msk [vmem:[#allocation2 + $0x8] sm:$0xff] %vm110, %v107
  %113 = vst.msk [vmem:[#allocation2 + $0x10] sm:$0xff] %vm110, %v108
  %114 = vst.msk [vmem:[#allocation2 + $0x18] sm:$0xff] %vm110, %v109
  // Predicated region
  $region18: #{_lambda_.35} parent=0 // pred_check
    %p115 = pneg %p15
  $region19: #{_lambda_.35} parent=0 // pred_check_branch
    %117 = sbr.rel (%p115) target = $region21
  $region20: #{_lambda_.35} parent=0 // pred_region
    %v118 = vld [vmem:[#allocation2] sm:$0xff]
    %v119 = vld [vmem:[#allocation2 + $0x8] sm:$0xff]
    %v120 = vld [vmem:[#allocation2 + $0x10] sm:$0xff]
    %v121 = vld [vmem:[#allocation2 + $0x18] sm:$0xff]
    %v122 = vld [vmem:[%s2] sm:$0x1]
    %v124 = vlaneseq
    %v125 = vshrl.u32 %v124, 7
    %v126 = vsub.s32 0, %v125
    %v127 = vrot.slane %v122, %v126
    %v129 = vadd.f32 %v118, %v127
    %v130 = vadd.f32 %v119, %v127
    %v131 = vadd.f32 %v120, %v127
    %v132 = vadd.f32 %v121, %v127
    %133 = vst.msk [vmem:[%s3] sm:$0xff] %vm110, %v129
    %134 = vst.msk [vmem:[%s3 + $0x8] sm:$0xff] %vm110, %v130
    %135 = vst.msk [vmem:[%s3 + $0x10] sm:$0xff] %vm110, %v131
    %136 = vst.msk [vmem:[%s3 + $0x18] sm:$0xff] %vm110, %v132
  $region21: #{_lambda_.35} parent=0 // pred_fallthru
    _
  // Predicated region
  $region22: #{_lambda_.35} parent=0 // pred_check
    _
  $region23: #{_lambda_.35} parent=0 // pred_check_branch
    %138 = sbr.rel (0) target = $region25
  $region24: #{_lambda_.35} parent=0 // pred_region
    _
  $region25: #{_lambda_.35} parent=0 // pred_fallthru
    _
  // Predicated region
  $region26: #{_lambda_.35} parent=0 // pred_check
    _
  $region27: #{_lambda_.35} parent=0 // pred_check_branch
    %140 = sbr.rel (0) target = $region29
  $region28: #{_lambda_.35} parent=0 // pred_region
    _
  $region29: #{_lambda_.35} parent=0 // pred_fallthru
    _

// kernel: _lambda_.37
$region0: #{_lambda_.37}
  #allocation0 [shape = 'u32[]', space=smem, size = 0x4, offset = 0x4, fixed_abs, tag = 'smem constant byte address 0x4 - core index']
  #allocation1 [shape = 'u32[144,128]{1,0:T(1,128)}', space=vmem, size = 0x12000, scoped, tag = 'internal scratch']
  #allocation2 [shape = 'f32[32,32]{1,0:T(8,128)}', space=vmem, size = 0x4000, scoped, tag = 'scratch operand']
  %s0 = inlined_call_operand.vmem [shape: f32[32,32], index: 0, kind: input, shape index: {}]
  %s1 = inlined_call_operand.vmem [shape: bf16[32,32], index: 1, kind: input, shape index: {}]
  %s2 = inlined_call_operand.vmem [shape: f32[1,32], index: 2, kind: input, shape index: {}]
  %s3 = inlined_call_operand.vmem [shape: f32[32,32], index: 3, kind: input, shape index: {}]
  %s4 = inlined_call_operand.vmem [shape: f32[32,32], index: 4, kind: output, shape index: {}]
  %s5 = sld [smem:[#allocation0]]
  $region34: #{_lambda_.37} parent=0
    _
  %s7 = ssub.s32 1, %s5
  %s8 = scalar_select 0, %s7, %s5
  // Predicated region
  $region2: #{_lambda_.37} parent=0 // pred_check
    _
  $region3: #{_lambda_.37} parent=0 // pred_check_branch
    %10 = sbr.rel (0) target = $region5
  $region4: #{_lambda_.37} parent=0 // pred_region
    _
  $region5: #{_lambda_.37} parent=0 // pred_fallthru
    _
  // Predicated region
  $region6: #{_lambda_.37} parent=0 // pred_check
    _
  $region7: #{_lambda_.37} parent=0 // pred_check_branch
    %12 = sbr.rel (0) target = $region9
  $region8: #{_lambda_.37} parent=0 // pred_region
    _
  $region9: #{_lambda_.37} parent=0 // pred_fallthru
    _
  // Predicated region
  $region10: #{_lambda_.37} parent=0 // pred_check
    _
  $region11: #{_lambda_.37} parent=0 // pred_check_branch
    %14 = sbr.rel (0) target = $region13
  $region12: #{_lambda_.37} parent=0 // pred_region
    _
  $region13: #{_lambda_.37} parent=0 // pred_fallthru
    _
  // Predicated region
  $region14: #{_lambda_.37} parent=0 // pred_check
    _
  $region15: #{_lambda_.37} parent=0 // pred_check_branch
    %16 = sbr.rel (0) target = $region17
  $region16: #{_lambda_.37} parent=0 // pred_region
    _
  $region17: #{_lambda_.37} parent=0 // pred_fallthru
    _
  %p18 = scmp.eq.s32.totalorder 0, 0
  // Predicated region
  $region18: #{_lambda_.37} parent=0 // pred_check
    %p19 = pneg %p18
  $region19: #{_lambda_.37} parent=0 // pred_check_branch
    %21 = sbr.rel (%p19) target = $region21
  $region20: #{_lambda_.37} parent=0 // pred_region
    %vm22 = vcmask 261120
    %23 = vst.msk [vmem:[#allocation2] sm:$0xff] %vm22, 0.0
    %24 = vst.msk [vmem:[#allocation2 + $0x8] sm:$0xff] %vm22, 0.0
    %25 = vst.msk [vmem:[#allocation2 + $0x10] sm:$0xff] %vm22, 0.0
    %26 = vst.msk [vmem:[#allocation2 + $0x18] sm:$0xff] %vm22, 0.0
  $region21: #{_lambda_.37} parent=0 // pred_fallthru
    _
  %v27 = vld [vmem:[#allocation2] sm:$0xff]
  %v28 = vld [vmem:[#allocation2 + $0x8] sm:$0xff]
  %v29 = vld [vmem:[#allocation2 + $0x10] sm:$0xff]
  %v30 = vld [vmem:[#allocation2 + $0x18] sm:$0xff]
  %v31 = vld [vmem:[%s0] sm:$0xff]
  %v32 = vld [vmem:[%s0 + $0x8] sm:$0xff]
  %v33 = vld [vmem:[%s0 + $0x10] sm:$0xff]
  %v34 = vld [vmem:[%s0 + $0x18] sm:$0xff]
  %v35 = vpack.c.bf16 %v32, %v31
  %v36 = vpack.c.bf16 %v34, %v33
  %v37 = vld [vmem:[%s1] sm:$0xf]
  %v38 = vld [vmem:[%s1 + $0x4] sm:$0xf]
  %v39 = vld [vmem:[%s1 + $0x8] sm:$0xf]
  %v40 = vld [vmem:[%s1 + $0xc] sm:$0xf]
  %v45 = vunpack.c.l.b16 %v37
  %v46 = vunpack.c.l.b16 %v38
  %v47 = vunpack.c.l.b16 %v39
  %v48 = vunpack.c.l.b16 %v40
  %v49 = vpack.c.b16 %v46, %v45
  %v50 = vpack.c.b16 %v48, %v47
  %vm53 = vcmask 261120
  %v55 = vsel %vm53, %v35, 0
  %v58 = vsel %vm53, %v36, 0
  %60 = vmatprep.subr.bf16.mxu0 0
  %61 = vmatpush1.bf16.msra.mxu0 %v49
  %62 = vmatprep.subr.bf16.mxu0 0
  %63 = vmatpush1.bf16.msra.mxu0 %v50
  %64 = vmatprep.subr.bf16.mxu0 0
  %65 = vmatpush1.bf16.msra.mxu0 0
  %66 = vmatprep.subr.bf16.mxu0 0
  %67 = vmatpush1.bf16.msra.mxu0 0
  %68 = vmatprep.subr.bf16.mxu0 0
  %69 = vmatpush1.bf16.msra.mxu0 0
  %70 = vmatprep.subr.bf16.mxu0 0
  %71 = vmatpush1.bf16.msra.mxu0 0
  %72 = vmatprep.subr.bf16.mxu0 0
  %73 = vmatpush1.bf16.msra.mxu0 0
  %74 = vmatprep.subr.bf16.mxu0 0
  %75 = vmatpush1.bf16.msra.mxu0 0
  %76 = vmatprep.subr.bf16.mxu0 0
  %77 = vmatpush1.bf16.msra.mxu0 0
  %78 = vmatprep.subr.bf16.mxu0 0
  %79 = vmatpush1.bf16.msra.mxu0 0
  %80 = vmatprep.subr.bf16.mxu0 0
  %81 = vmatpush1.bf16.msra.mxu0 0
  %82 = vmatprep.subr.bf16.mxu0 0
  %83 = vmatpush1.bf16.msra.mxu0 0
  %84 = vmatprep.subr.bf16.mxu0 0
  %85 = vmatpush1.bf16.msra.mxu0 0
  %86 = vmatprep.subr.bf16.mxu0 0
  %87 = vmatpush1.bf16.msra.mxu0 0
  %88 = vmatprep.subr.bf16.mxu0 0
  %89 = vmatpush1.bf16.msra.mxu0 0
  %90 = vmatprep.subr.bf16.mxu0 0
  %91 = vmatpush1.bf16.msra.mxu0 0
  %92 = vmatprep.mubr.bf16.mxu0 0
  %93 = vmatmul.mubr.bf16.gmra.mrb[0].mxu0 %v55
  %v94 = vpop.f32.mrb[0].mxu0
  %v95 = vadd.f32 0.0, %v94
  %v96 = vpop.f32.mrb[0].mxu0
  %v97 = vpop.f32.mrb[0].mxu0
  %v98 = vadd.f32 0.0, %v97
  %v99 = vpop.f32.mrb[0].mxu0
  %100 = vmatprep.mubr.bf16.mxu0 0
  %101 = vmatmul.mubr.bf16.gmra.mrb[0].mxu0 %v58
  %v102 = vpop.f32.mrb[0].mxu0
  %v103 = vadd.f32 0.0, %v102
  %v104 = vpop.f32.mrb[0].mxu0
  %v105 = vpop.f32.mrb[0].mxu0
  %v106 = vadd.f32 0.0, %v105
  %v107 = vpop.f32.mrb[0].mxu0
  %108 = vdwg.mxu0
  %v109 = vadd.f32 %v27, %v95
  %v110 = vadd.f32 %v28, %v98
  %v111 = vadd.f32 %v29, %v103
  %v112 = vadd.f32 %v30, %v106
  %113 = vst.msk [vmem:[#allocation2] sm:$0xff] %vm53, %v109
  %114 = vst.msk [vmem:[#allocation2 + $0x8] sm:$0xff] %vm53, %v110
  %115 = vst.msk [vmem:[#allocation2 + $0x10] sm:$0xff] %vm53, %v111
  %116 = vst.msk [vmem:[#allocation2 + $0x18] sm:$0xff] %vm53, %v112
  // Predicated region
  $region22: #{_lambda_.37} parent=0 // pred_check
    %p117 = pneg %p18
  $region23: #{_lambda_.37} parent=0 // pred_check_branch
    %119 = sbr.rel (%p117) target = $region25
  $region24: #{_lambda_.37} parent=0 // pred_region
    %v120 = vld [vmem:[#allocation2] sm:$0xff]
    %v121 = vld [vmem:[#allocation2 + $0x8] sm:$0xff]
    %v122 = vld [vmem:[#allocation2 + $0x10] sm:$0xff]
    %v123 = vld [vmem:[#allocation2 + $0x18] sm:$0xff]
    %v124 = vld [vmem:[%s2] sm:$0x1]
    %v126 = vlaneseq
    %v127 = vshrl.u32 %v126, 7
    %v128 = vsub.s32 0, %v127
    %v129 = vrot.slane %v124, %v128
    %v131 = vadd.f32 %v120, %v129
    %v132 = vadd.f32 %v121, %v129
    %v133 = vadd.f32 %v122, %v129
    %v134 = vadd.f32 %v123, %v129
    %v135 = vld [vmem:[%s3] sm:$0xff]
    %v136 = vld [vmem:[%s3 + $0x8] sm:$0xff]
    %v137 = vld [vmem:[%s3 + $0x10] sm:$0xff]
    %v138 = vld [vmem:[%s3 + $0x18] sm:$0xff]
    %v139 = vadd.f32 %v131, %v135
    %v140 = vadd.f32 %v132, %v136
    %v141 = vadd.f32 %v133, %v137
    %v142 = vadd.f32 %v134, %v138
    %143 = vst.msk [vmem:[%s4] sm:$0xff] %vm53, %v139
    %144 = vst.msk [vmem:[%s4 + $0x8] sm:$0xff] %vm53, %v140
    %145 = vst.msk [vmem:[%s4 + $0x10] sm:$0xff] %vm53, %v141
    %146 = vst.msk [vmem:[%s4 + $0x18] sm:$0xff] %vm53, %v142
  $region25: #{_lambda_.37} parent=0 // pred_fallthru
    _
  // Predicated region
  $region26: #{_lambda_.37} parent=0 // pred_check
    _
  $region27: #{_lambda_.37} parent=0 // pred_check_branch
    %148 = sbr.rel (0) target = $region29
  $region28: #{_lambda_.37} parent=0 // pred_region
    _
  $region29: #{_lambda_.37} parent=0 // pred_fallthru
    _
  // Predicated region
  $region30: #{_lambda_.37} parent=0 // pred_check
    _
  $region31: #{_lambda_.37} parent=0 // pred_check_branch
    %150 = sbr.rel (0) target = $region33
  $region32: #{_lambda_.37} parent=0 // pred_region
    _
  $region33: #{_lambda_.37} parent=0 // pred_fallthru
    _

// kernel: _lambda_.39
$region0: #{_lambda_.39}
  #allocation0 [shape = 'u32[]', space=smem, size = 0x4, offset = 0x4, fixed_abs, tag = 'smem constant byte address 0x4 - core index']
  #allocation1 [shape = 'u32[144,128]{1,0:T(1,128)}', space=vmem, size = 0x12000, scoped, tag = 'internal scratch']
  #allocation2 [shape = 'f32[32,128]{1,0:T(8,128)}', space=vmem, size = 0x4000, scoped, tag = 'scratch operand']
  %s0 = inlined_call_operand.vmem [shape: f32[32,32], index: 0, kind: input, shape index: {}]
  %s1 = inlined_call_operand.vmem [shape: bf16[32,128], index: 1, kind: input, shape index: {}]
  %s2 = inlined_call_operand.hbm [shape: f32[1,128], index: 2, kind: input, shape index: {}]
  %s3 = inlined_call_operand.vmem [shape: f32[32,128], index: 3, kind: output, shape index: {}]
  %s4 = sld [smem:[#allocation0]]
  $region34: #{_lambda_.39} parent=0
    _
  %s6 = ssub.s32 1, %s4
  %s7 = scalar_select 0, %s6, %s4
  $region1: #{_lambda_.39} parent=0
    #allocation3 [shape = 'u8[512]{0}', space=vmem, size = 0x400, scoped, tag = 'input window, operand 2, single buffered']
    #allocation4 [shape = 's32[1]{0}', space=sflag, size = 0x4, scoped, tag = 'scoped memory for _lambda_.39']
    %8 = vsyncpa [#allocation4], 0
    // Predicated region
    $region2: #{_lambda_.39} parent=1 // pred_check
      _
    $region3: #{_lambda_.39} parent=1 // pred_check_branch
      %10 = sbr.rel (0) target = $region5
    $region4: #{_lambda_.39} parent=1 // pred_region
      _
    $region5: #{_lambda_.39} parent=1 // pred_fallthru
      _
    // Predicated region
    $region6: #{_lambda_.39} parent=1 // pred_check
      _
    $region7: #{_lambda_.39} parent=1 // pred_check_branch
      %12 = sbr.rel (0) target = $region9
    $region8: #{_lambda_.39} parent=1 // pred_region
      _
    $region9: #{_lambda_.39} parent=1 // pred_fallthru
      _
    // Predicated region
    $region10: #{_lambda_.39} parent=1 // pred_check
      _
    $region11: #{_lambda_.39} parent=1 // pred_check_branch
      %14 = sbr.rel (0) target = $region13
    $region12: #{_lambda_.39} parent=1 // pred_region
      %s16 = ssub.s32 16, 16
      %17 = vsyncadd [#allocation4], %s16
      %s19 = sshll.u32 [#allocation3], 4
      %s20 = int_to_ptr.vmem [resolvable:$true] %s19
      %22 = dma.hbm_to_vmem [thread:$0]  %s2, 16, %s20, [#allocation4]
    $region13: #{_lambda_.39} parent=1 // pred_fallthru
      _
    // Predicated region
    $region14: #{_lambda_.39} parent=1 // pred_check
      _
    $region15: #{_lambda_.39} parent=1 // pred_check_branch
      %24 = sbr.rel (0) target = $region17
    $region16: #{_lambda_.39} parent=1 // pred_region
      %25 = dma.done [#allocation4], 16
    $region17: #{_lambda_.39} parent=1 // pred_fallthru
      _
    %p27 = scmp.eq.s32.totalorder 0, 0
    // Predicated region
    $region18: #{_lambda_.39} parent=1 // pred_check
      %p28 = pneg %p27
    $region19: #{_lambda_.39} parent=1 // pred_check_branch
      %30 = sbr.rel (%p28) target = $region21
    $region20: #{_lambda_.39} parent=1 // pred_region
      %31 = vst [vmem:[#allocation2] sm:$0xff] 0.0
      %32 = vst [vmem:[#allocation2 + $0x8] sm:$0xff] 0.0
      %33 = vst [vmem:[#allocation2 + $0x10] sm:$0xff] 0.0
      %34 = vst [vmem:[#allocation2 + $0x18] sm:$0xff] 0.0
    $region21: #{_lambda_.39} parent=1 // pred_fallthru
      _
    %v35 = vld [vmem:[#allocation2] sm:$0xff]
    %v36 = vld [vmem:[#allocation2 + $0x8] sm:$0xff]
    %v37 = vld [vmem:[#allocation2 + $0x10] sm:$0xff]
    %v38 = vld [vmem:[#allocation2 + $0x18] sm:$0xff]
    %v39 = vld [vmem:[%s0] sm:$0xff]
    %v40 = vld [vmem:[%s0 + $0x8] sm:$0xff]
    %v41 = vld [vmem:[%s0 + $0x10] sm:$0xff]
    %v42 = vld [vmem:[%s0 + $0x18] sm:$0xff]
    %v43 = vpack.c.bf16 %v40, %v39
    %v44 = vpack.c.bf16 %v42, %v41
    %v45 = vld [vmem:[%s1] sm:$0xf]
    %v46 = vld [vmem:[%s1 + $0x4] sm:$0xf]
    %v47 = vld [vmem:[%s1 + $0x8] sm:$0xf]
    %v48 = vld [vmem:[%s1 + $0xc] sm:$0xf]
    %v53 = vunpack.c.l.b16 %v45
    %v54 = vunpack.c.l.b16 %v46
    %v55 = vunpack.c.l.b16 %v47
    %v56 = vunpack.c.l.b16 %v48
    %v57 = vpack.c.b16 %v54, %v53
    %v58 = vpack.c.b16 %v56, %v55
    %vm61 = vcmask 261120
    %v63 = vsel %vm61, %v43, 0
    %v66 = vsel %vm61, %v44, 0
    %68 = vmatprep.subr.bf16.mxu0 0
    %69 = vmatpush1.bf16.msra.mxu0 %v57
    %70 = vmatprep.subr.bf16.mxu0 0
    %71 = vmatpush1.bf16.msra.mxu0 %v58
    %72 = vmatprep.subr.bf16.mxu0 0
    %73 = vmatpush1.bf16.msra.mxu0 0
    %74 = vmatprep.subr.bf16.mxu0 0
    %75 = vmatpush1.bf16.msra.mxu0 0
    %76 = vmatprep.subr.bf16.mxu0 0
    %77 = vmatpush1.bf16.msra.mxu0 0
    %78 = vmatprep.subr.bf16.mxu0 0
    %79 = vmatpush1.bf16.msra.mxu0 0
    %80 = vmatprep.subr.bf16.mxu0 0
    %81 = vmatpush1.bf16.msra.mxu0 0
    %82 = vmatprep.subr.bf16.mxu0 0
    %83 = vmatpush1.bf16.msra.mxu0 0
    %84 = vmatprep.subr.bf16.mxu0 0
    %85 = vmatpush1.bf16.msra.mxu0 0
    %86 = vmatprep.subr.bf16.mxu0 0
    %87 = vmatpush1.bf16.msra.mxu0 0
    %88 = vmatprep.subr.bf16.mxu0 0
    %89 = vmatpush1.bf16.msra.mxu0 0
    %90 = vmatprep.subr.bf16.mxu0 0
    %91 = vmatpush1.bf16.msra.mxu0 0
    %92 = vmatprep.subr.bf16.mxu0 0
    %93 = vmatpush1.bf16.msra.mxu0 0
    %94 = vmatprep.subr.bf16.mxu0 0
    %95 = vmatpush1.bf16.msra.mxu0 0
    %96 = vmatprep.subr.bf16.mxu0 0
    %97 = vmatpush1.bf16.msra.mxu0 0
    %98 = vmatprep.subr.bf16.mxu0 0
    %99 = vmatpush1.bf16.msra.mxu0 0
    %100 = vmatprep.mubr.bf16.mxu0 0
    %101 = vmatmul.mubr.bf16.gmra.mrb[0].mxu0 %v63
    %v102 = vpop.f32.mrb[0].mxu0
    %v103 = vadd.f32 0.0, %v102
    %v104 = vpop.f32.mrb[0].mxu0
    %v105 = vpop.f32.mrb[0].mxu0
    %v106 = vadd.f32 0.0, %v105
    %v107 = vpop.f32.mrb[0].mxu0
    %108 = vmatprep.mubr.bf16.mxu0 0
    %109 = vmatmul.mubr.bf16.gmra.mrb[0].mxu0 %v66
    %v110 = vpop.f32.mrb[0].mxu0
    %v111 = vadd.f32 0.0, %v110
    %v112 = vpop.f32.mrb[0].mxu0
    %v113 = vpop.f32.mrb[0].mxu0
    %v114 = vadd.f32 0.0, %v113
    %v115 = vpop.f32.mrb[0].mxu0
    %116 = vdwg.mxu0
    %v117 = vadd.f32 %v35, %v103
    %v118 = vadd.f32 %v36, %v106
    %v119 = vadd.f32 %v37, %v111
    %v120 = vadd.f32 %v38, %v114
    %121 = vst [vmem:[#allocation2] sm:$0xff] %v117
    %122 = vst [vmem:[#allocation2 + $0x8] sm:$0xff] %v118
    %123 = vst [vmem:[#allocation2 + $0x10] sm:$0xff] %v119
    %124 = vst [vmem:[#allocation2 + $0x18] sm:$0xff] %v120
    // Predicated region
    $region22: #{_lambda_.39} parent=1 // pred_check
      %p125 = pneg %p27
    $region23: #{_lambda_.39} parent=1 // pred_check_branch
      %127 = sbr.rel (%p125) target = $region25
    $region24: #{_lambda_.39} parent=1 // pred_region
      %v128 = vld [vmem:[#allocation2] sm:$0xff]
      %v129 = vld [vmem:[#allocation2 + $0x8] sm:$0xff]
      %v130 = vld [vmem:[#allocation2 + $0x10] sm:$0xff]
      %v131 = vld [vmem:[#allocation2 + $0x18] sm:$0xff]
      %v132 = vld [vmem:[#allocation3] sm:$0x1]
      %v134 = vlaneseq
      %v135 = vshrl.u32 %v134, 7
      %v136 = vsub.s32 0, %v135
      %v137 = vrot.slane %v132, %v136
      %v139 = vadd.f32 %v128, %v137
      %v140 = vadd.f32 %v129, %v137
      %v141 = vadd.f32 %v130, %v137
      %v142 = vadd.f32 %v131, %v137
      %v143 = vmul.f32 %v139, 0.5
      %v144 = vmul.f32 %v140, 0.5
      %v145 = vmul.f32 %v141, 0.5
      %v146 = vmul.f32 %v142, 0.5
      %v147 = vmul.f32 %v139, 0.044715
      %v148 = vmul.f32 %v140, 0.044715
      %v149 = vmul.f32 %v141, 0.044715
      %v150 = vmul.f32 %v142, 0.044715
      %v151 = vmul.f32 %v147, %v139
      %v152 = vmul.f32 %v148, %v140
      %v153 = vmul.f32 %v149, %v141
      %v154 = vmul.f32 %v150, %v142
      %v155 = vmul.f32 %v151, %v139
      %v156 = vmul.f32 %v152, %v140
      %v157 = vmul.f32 %v153, %v141
      %v158 = vmul.f32 %v154, %v142
      %v159 = vadd.f32 %v139, %v155
      %v160 = vadd.f32 %v140, %v156
      %v161 = vadd.f32 %v141, %v157
      %v162 = vadd.f32 %v142, %v158
      %v163 = vmul.f32 %v159, 0.7978846
      %v164 = vmul.f32 %v160, 0.7978846
      %v165 = vmul.f32 %v161, 0.7978846
      %v166 = vmul.f32 %v162, 0.7978846
      %v167 = vtanh.pop %v163
      %v168 = vtanh.pop %v164
      %v169 = vtanh.pop %v165
      %v170 = vtanh.pop %v166
      %v171 = vadd.f32 %v167, 1.0
      %v172 = vadd.f32 %v168, 1.0
      %v173 = vadd.f32 %v169, 1.0
      %v174 = vadd.f32 %v170, 1.0
      %v175 = vmul.f32 %v143, %v171
      %v176 = vmul.f32 %v144, %v172
      %v177 = vmul.f32 %v145, %v173
      %v178 = vmul.f32 %v146, %v174
      %179 = vst [vmem:[%s3] sm:$0xff] %v175
      %180 = vst [vmem:[%s3 + $0x8] sm:$0xff] %v176
      %181 = vst [vmem:[%s3 + $0x10] sm:$0xff] %v177
      %182 = vst [vmem:[%s3 + $0x18] sm:$0xff] %v178
    $region25: #{_lambda_.39} parent=1 // pred_fallthru
      _
    // Predicated region
    $region26: #{_lambda_.39} parent=1 // pred_check
      _
    $region27: #{_lambda_.39} parent=1 // pred_check_branch
      %184 = sbr.rel (0) target = $region29
    $region28: #{_lambda_.39} parent=1 // pred_region
      _
    $region29: #{_lambda_.39} parent=1 // pred_fallthru
      _
    // Predicated region
    $region30: #{_lambda_.39} parent=1 // pred_check
      _
    $region31: #{_lambda_.39} parent=1 // pred_check_branch
      %186 = sbr.rel (0) target = $region33
    $region32: #{_lambda_.39} parent=1 // pred_region
      _
    $region33: #{_lambda_.39} parent=1 // pred_fallthru
      _
    %187 = vsyncpa [#allocation4], 1

// kernel: _lambda_.36
$region0: #{_lambda_.36}
  #allocation0 [shape = 'u32[]', space=smem, size = 0x4, offset = 0x4, fixed_abs, tag = 'smem constant byte address 0x4 - core index']
  #allocation1 [shape = 'u32[144,128]{1,0:T(1,128)}', space=vmem, size = 0x12000, scoped, tag = 'internal scratch']
  #allocation2 [shape = 'f32[4,16,1]{2,1,0:T(8,128)}', space=vmem, size = 0x8000, scoped, tag = 'scratch operand']
  #allocation3 [shape = 'f32[4,16,1]{2,1,0:T(8,128)}', space=vmem, size = 0x8000, scoped, tag = 'scratch operand']
  #allocation4 [shape = 'f32[4,16,8]{2,1,0:T(8,128)}', space=vmem, size = 0x8000, scoped, tag = 'scratch operand']
  %s0 = inlined_call_operand.vmem [shape: f32[8,16,8], index: 0, kind: input, shape index: {}]
  %s1 = inlined_call_operand.vmem [shape: f32[8,16,8], index: 1, kind: input, shape index: {}]
  %s2 = inlined_call_operand.vmem [shape: f32[8,16,8], index: 2, kind: input, shape index: {}]
  %s3 = inlined_call_operand.vmem [shape: f32[8,16,8], index: 3, kind: output, shape index: {}]
  %s4 = sld [smem:[#allocation0]]
  $region53: #{_lambda_.36} parent=0
    _
  %s6 = ssub.s32 1, %s4
  %s7 = scalar_select 0, %s6, %s4
  loop: start=0, step=1, limit=4
  $region2: #{_lambda_.36} parent=0 // loop_pre_header
    _
  $region3: #{_lambda_.36} parent=0 // loop_header
    %s9 = sphi 0, %s13
    %p10 = scmp.ge.s32.totalorder %s9, 4
    %s16 = sphi 0, %s35
    %s17 = sphi 0, %s31
    %s18 = sphi 0, %s27
    %s19 = sphi 0, %s16
    %s20 = sphi 0, %s17
    %s21 = sphi 0, %s18
    %s22 = sphi 0, %s19
    %s23 = sphi 0, %s20
    %s24 = sphi 0, %s21
    %s40 = sphi 0, %s42
    %s43 = sphi 0, %s40
    %s44 = sphi 0, %s43
    %s60 = sphi 0, %s44
    %s68 = sphi 0, %s70
    %s71 = sphi 0, %s68
    %s72 = sphi 0, %s71
    %s88 = sphi 0, %s72
    %s96 = sphi 0, %s98
    %s99 = sphi 0, %s96
    %s100 = sphi 0, %s99
    %s116 = sphi 0, %s100
    %s124 = sphi 0, %s126
    %s127 = sphi 0, %s124
    %s128 = sphi 0, %s127
    %s144 = sphi 0, %s128
  $region4: #{_lambda_.36} parent=0 // loop_header_branch
    %12 = sbr.rel (%p10) target = $region8
  $region5: #{_lambda_.36} parent=0 // loop_body
    %s14 = ssub.s32 %s9, 1
    %s15 = ssub.s32 %s9, 2
    %s25 = sadd.s32 1, %s18
    %p26 = scmp.ge.s32.totalorder %s25, 1
    %s27 = scalar_select %p26, 0, %s25
    %s28 = sadd.s32 1, %s17
    %s29 = scalar_select %p26, %s28, %s17
    %p30 = scmp.ge.s32.totalorder %s29, 1
    %s31 = scalar_select %p30, 0, %s29
    %s32 = sadd.s32 1, %s16
    %s33 = scalar_select %p30, %s32, %s16
    %p34 = scmp.ge.s32.totalorder %s33, 2
    %s35 = scalar_select %p34, 0, %s33
    %s36 = ssub.s32 %s16, %s35
    %s37 = ssub.s32 %s17, %s31
    %s38 = sor.u32 %s36, %s37
    %p39 = scmp.eq.s32.totalorder %s38, 0
    %s41 = sadd.s32 %s40, 1
    %s42 = scalar_select %p39, %s40, %s41
    %p45 = pneg %p39
    %p46 = scmp.eq.s32.totalorder %s9, 1
    %p47 = por %p45, %p46
    %p48 = scmp.ne.s32.totalorder %s40, %s43
    %p49 = scmp.eq.s32.totalorder %s9, 0
    %p50 = por %p48, %p49
    %p51 = scmp.ne.s32.totalorder %s40, %s43
    %p52 = scmp.eq.s32.totalorder %s14, 1
    %p53 = por %p51, %p52
    %p54 = scmp.ne.s32.totalorder %s43, %s44
    %p55 = scmp.eq.s32.totalorder %s14, 0
    %p56 = por %p54, %p55
    %p57 = scmp.ne.s32.totalorder %s43, %s44
    %p58 = scmp.eq.s32.totalorder %s15, 1
    %p59 = por %p57, %p58
    %p61 = scmp.ne.s32.totalorder %s44, %s60
    %p62 = scmp.eq.s32.totalorder %s15, 0
    %p63 = por %p61, %p62
    %s64 = ssub.s32 %s16, %s35
    %s65 = ssub.s32 %s18, %s27
    %s66 = sor.u32 %s64, %s65
    %p67 = scmp.eq.s32.totalorder %s66, 0
    %s69 = sadd.s32 %s68, 1
    %s70 = scalar_select %p67, %s68, %s69
    %p73 = pneg %p67
    %p74 = scmp.eq.s32.totalorder %s9, 1
    %p75 = por %p73, %p74
    %p76 = scmp.ne.s32.totalorder %s68, %s71
    %p77 = scmp.eq.s32.totalorder %s9, 0
    %p78 = por %p76, %p77
    %p79 = scmp.ne.s32.totalorder %s68, %s71
    %p80 = scmp.eq.s32.totalorder %s14, 1
    %p81 = por %p79, %p80
    %p82 = scmp.ne.s32.totalorder %s71, %s72
    %p83 = scmp.eq.s32.totalorder %s14, 0
    %p84 = por %p82, %p83
    %p85 = scmp.ne.s32.totalorder %s71, %s72
    %p86 = scmp.eq.s32.totalorder %s15, 1
    %p87 = por %p85, %p86
    %p89 = scmp.ne.s32.totalorder %s72, %s88
    %p90 = scmp.eq.s32.totalorder %s15, 0
    %p91 = por %p89, %p90
    %s92 = ssub.s32 %s16, %s35
    %s93 = ssub.s32 %s18, %s27
    %s94 = sor.u32 %s92, %s93
    %p95 = scmp.eq.s32.totalorder %s94, 0
    %s97 = sadd.s32 %s96, 1
    %s98 = scalar_select %p95, %s96, %s97
    %p101 = pneg %p95
    %p102 = scmp.eq.s32.totalorder %s9, 1
    %p103 = por %p101, %p102
    %p104 = scmp.ne.s32.totalorder %s96, %s99
    %p105 = scmp.eq.s32.totalorder %s9, 0
    %p106 = por %p104, %p105
    %p107 = scmp.ne.s32.totalorder %s96, %s99
    %p108 = scmp.eq.s32.totalorder %s14, 1
    %p109 = por %p107, %p108
    %p110 = scmp.ne.s32.totalorder %s99, %s100
    %p111 = scmp.eq.s32.totalorder %s14, 0
    %p112 = por %p110, %p111
    %p113 = scmp.ne.s32.totalorder %s99, %s100
    %p114 = scmp.eq.s32.totalorder %s15, 1
    %p115 = por %p113, %p114
    %p117 = scmp.ne.s32.totalorder %s100, %s116
    %p118 = scmp.eq.s32.totalorder %s15, 0
    %p119 = por %p117, %p118
    %s120 = ssub.s32 %s16, %s35
    %s121 = ssub.s32 %s17, %s31
    %s122 = sor.u32 %s120, %s121
    %p123 = scmp.eq.s32.totalorder %s122, 0
    %s125 = sadd.s32 %s124, 1
    %s126 = scalar_select %p123, %s124, %s125
    %p129 = pneg %p123
    %p130 = scmp.eq.s32.totalorder %s9, 1
    %p131 = por %p129, %p130
    %p132 = scmp.ne.s32.totalorder %s124, %s127
    %p133 = scmp.eq.s32.totalorder %s9, 0
    %p134 = por %p132, %p133
    %p135 = scmp.ne.s32.totalorder %s124, %s127
    %p136 = scmp.eq.s32.totalorder %s14, 1
    %p137 = por %p135, %p136
    %p138 = scmp.ne.s32.totalorder %s127, %s128
    %p139 = scmp.eq.s32.totalorder %s14, 0
    %p140 = por %p138, %p139
    %p141 = scmp.ne.s32.totalorder %s127, %s128
    %p142 = scmp.eq.s32.totalorder %s15, 1
    %p143 = por %p141, %p142
    %p145 = scmp.ne.s32.totalorder %s128, %s144
    %p146 = scmp.eq.s32.totalorder %s15, 0
    %p147 = por %p145, %p146
    %p148 = scmp.le.s32.totalorder 1, %s9
    %p149 = scmp.lt.s32.totalorder %s9, 3
    %p150 = pnand %p148, %p149
    %p151 = pneg %p150
    // Predicated region
    $region9: #{_lambda_.36} parent=5 // pred_check
      _
    $region10: #{_lambda_.36} parent=5 // pred_check_branch
      %153 = sbr.rel (%p150) target = $region12
    $region11: #{_lambda_.36} parent=5 // pred_region
      %s154 = ssub.s32 %s9, 1
    $region12: #{_lambda_.36} parent=5 // pred_fallthru
      _
    %p155 = scmp.lt.s32.totalorder %s9, 2
    // Predicated region
    $region13: #{_lambda_.36} parent=5 // pred_check
      %p156 = pneg %p155
    $region14: #{_lambda_.36} parent=5 // pred_check_branch
      %158 = sbr.rel (%p156) target = $region16
    $region15: #{_lambda_.36} parent=5 // pred_region
      // Predicated region
      $region17: #{_lambda_.36} parent=15 // pred_check
        %p159 = pneg %p50
      $region18: #{_lambda_.36} parent=15 // pred_check_branch
        %161 = sbr.rel (%p159) target = $region20
      $region19: #{_lambda_.36} parent=15 // pred_region
        %s162 = smul.u32 4, %s16
        %s163 = smul.u32 2, %s17
        %p164 = scmp.lt.s32.totalorder %s162, 7
        %s165 = scalar_select %p164, %s162, 7
        %p166 = scmp.lt.s32.totalorder %s163, 1
        %s167 = scalar_select %p166, %s163, 1
        %s168 = smul.addr %s165, 2
        %s169 = sadd.s32 %s167, %s168
        %s170 = smul.addr %s169, 8
        %s171 = scalar_lea.vmem %s0, %s170
        %s172 = smul.u32 4, %s16
        %s173 = smul.u32 2, %s17
      $region20: #{_lambda_.36} parent=15 // pred_fallthru
        _
      // Predicated region
      $region21: #{_lambda_.36} parent=15 // pred_check
        %p174 = pneg %p78
      $region22: #{_lambda_.36} parent=15 // pred_check_branch
        %176 = sbr.rel (%p174) target = $region24
      $region23: #{_lambda_.36} parent=15 // pred_region
        %s177 = smul.u32 4, %s16
        %s178 = smul.u32 2, %s18
        %p179 = scmp.lt.s32.totalorder %s177, 7
        %s180 = scalar_select %p179, %s177, 7
        %p181 = scmp.lt.s32.totalorder %s178, 1
        %s182 = scalar_select %p181, %s178, 1
        %s183 = smul.addr %s180, 2
        %s184 = sadd.s32 %s182, %s183
        %s185 = smul.addr %s184, 8
        %s186 = scalar_lea.vmem %s1, %s185
        %s187 = smul.u32 4, %s16
        %s188 = smul.u32 2, %s18
      $region24: #{_lambda_.36} parent=15 // pred_fallthru
        _
      // Predicated region
      $region25: #{_lambda_.36} parent=15 // pred_check
        %p189 = pneg %p106
      $region26: #{_lambda_.36} parent=15 // pred_check_branch
        %191 = sbr.rel (%p189) target = $region28
      $region27: #{_lambda_.36} parent=15 // pred_region
        %s192 = smul.u32 4, %s16
        %s193 = smul.u32 2, %s18
        %p194 = scmp.lt.s32.totalorder %s192, 7
        %s195 = scalar_select %p194, %s192, 7
        %p196 = scmp.lt.s32.totalorder %s193, 1
        %s197 = scalar_select %p196, %s193, 1
        %s198 = smul.addr %s195, 2
        %s199 = sadd.s32 %s197, %s198
        %s200 = smul.addr %s199, 8
        %s201 = scalar_lea.vmem %s2, %s200
        %s202 = smul.u32 4, %s16
        %s203 = smul.u32 2, %s18
      $region28: #{_lambda_.36} parent=15 // pred_fallthru
        _
    $region16: #{_lambda_.36} parent=5 // pred_fallthru
      _
    %p204 = scmp.le.s32.totalorder 1, %s9
    %p205 = scmp.lt.s32.totalorder %s9, 3
    %p206 = pnand %p204, %p205
    %p207 = pneg %p206
    // Predicated region
    $region29: #{_lambda_.36} parent=5 // pred_check
      _
    $region30: #{_lambda_.36} parent=5 // pred_check_branch
      %209 = sbr.rel (%p206) target = $region32
    $region31: #{_lambda_.36} parent=5 // pred_region
      %s210 = ssub.s32 %s9, 1
      %s211 = smul.u32 4, %s19
      %s212 = smul.u32 2, %s20
      %p213 = scmp.lt.s32.totalorder %s211, 7
      %s214 = scalar_select %p213, %s211, 7
      %p215 = scmp.lt.s32.totalorder %s212, 1
      %s216 = scalar_select %p215, %s212, 1
      %s217 = smul.addr %s214, 2
      %s218 = sadd.s32 %s216, %s217
      %s219 = smul.addr %s218, 8
      %s220 = scalar_lea.vmem %s0, %s219
      %p221 = pneg %p56
      %p222 = pneg %p53
      %s223 = smul.u32 4, %s19
      %s224 = smul.u32 2, %s21
      %p225 = scmp.lt.s32.totalorder %s223, 7
      %s226 = scalar_select %p225, %s223, 7
      %p227 = scmp.lt.s32.totalorder %s224, 1
      %s228 = scalar_select %p227, %s224, 1
      %s229 = smul.addr %s226, 2
      %s230 = sadd.s32 %s228, %s229
      %s231 = smul.addr %s230, 8
      %s232 = scalar_lea.vmem %s1, %s231
      %p233 = pneg %p84
      %p234 = pneg %p81
      %s235 = smul.u32 4, %s19
      %s236 = smul.u32 2, %s21
      %p237 = scmp.lt.s32.totalorder %s235, 7
      %s238 = scalar_select %p237, %s235, 7
      %p239 = scmp.lt.s32.totalorder %s236, 1
      %s240 = scalar_select %p239, %s236, 1
      %s241 = smul.addr %s238, 2
      %s242 = sadd.s32 %s240, %s241
      %s243 = smul.addr %s242, 8
      %s244 = scalar_lea.vmem %s2, %s243
      %p245 = pneg %p112
      %p246 = pneg %p109
      %p247 = pneg %p140
      %p248 = pneg %p137
      %s249 = smul.u32 4, %s19
      %s250 = smul.u32 2, %s20
      %p251 = scmp.lt.s32.totalorder %s249, 7
      %s252 = scalar_select %p251, %s249, 7
      %p253 = scmp.lt.s32.totalorder %s250, 1
      %s254 = scalar_select %p253, %s250, 1
      %s255 = smul.addr %s252, 2
      %s256 = sadd.s32 %s254, %s255
      %s257 = smul.addr %s256, 8
      %s258 = scalar_lea.vmem %s3, %s257
      %s259 = smul.u32 4, %s19
      %s260 = smul.u32 2, %s20
      %p261 = scmp.lt.s32.totalorder %s259, 7
      %s262 = scalar_select %p261, %s259, 7
      %p263 = scmp.lt.s32.totalorder %s260, 1
      %s264 = scalar_select %p263, %s260, 1
      %s265 = smul.addr %s262, 2
      %s266 = sadd.s32 %s264, %s265
      %s267 = smul.addr %s266, 8
      %s268 = scalar_lea.vmem %s0, %s267
      %s269 = smul.u32 4, %s19
      %s270 = smul.u32 2, %s20
      %s271 = smul.u32 4, %s19
      %s272 = smul.u32 2, %s21
      %p273 = scmp.lt.s32.totalorder %s271, 7
      %s274 = scalar_select %p273, %s271, 7
      %p275 = scmp.lt.s32.totalorder %s272, 1
      %s276 = scalar_select %p275, %s272, 1
      %s277 = smul.addr %s274, 2
      %s278 = sadd.s32 %s276, %s277
      %s279 = smul.addr %s278, 8
      %s280 = scalar_lea.vmem %s1, %s279
      %s281 = smul.u32 4, %s19
      %s282 = smul.u32 2, %s21
      %s283 = smul.u32 4, %s19
      %s284 = smul.u32 2, %s21
      %p285 = scmp.lt.s32.totalorder %s283, 7
      %s286 = scalar_select %p285, %s283, 7
      %p287 = scmp.lt.s32.totalorder %s284, 1
      %s288 = scalar_select %p287, %s284, 1
      %s289 = smul.addr %s286, 2
      %s290 = sadd.s32 %s288, %s289
      %s291 = smul.addr %s290, 8
      %s292 = scalar_lea.vmem %s2, %s291
      %s293 = smul.u32 4, %s19
      %s294 = smul.u32 2, %s21
      %s295 = smul.u32 4, %s19
      %s296 = smul.u32 2, %s20
      %p297 = scmp.lt.s32.totalorder %s295, 7
      %s298 = scalar_select %p297, %s295, 7
      %p299 = scmp.lt.s32.totalorder %s296, 1
      %s300 = scalar_select %p299, %s296, 1
      %s301 = smul.addr %s298, 2
      %s302 = sadd.s32 %s300, %s301
      %s303 = smul.addr %s302, 8
      %s304 = scalar_lea.vmem %s3, %s303
      %s305 = smul.u32 4, %s19
      %s306 = smul.u32 2, %s20
      %p308 = scmp.eq.s32.totalorder %s21, 0
      // Predicated region
      $region33: #{_lambda_.36} parent=31 // pred_check
        %p309 = pneg %p308
      $region34: #{_lambda_.36} parent=31 // pred_check_branch
        %311 = sbr.rel (%p309) target = $region36
      $region35: #{_lambda_.36} parent=31 // pred_region
        %vm312 = vcmask 7168
        %313 = vst.msk [vmem:[#allocation2] sm:$0xff] %vm312, -inf
        %314 = vst.msk [vmem:[#allocation2 + $0x8] sm:$0xff] %vm312, -inf
        %315 = vst.msk [vmem:[#allocation2 + $0x10] sm:$0xff] %vm312, -inf
        %316 = vst.msk [vmem:[#allocation2 + $0x18] sm:$0xff] %vm312, -inf
        %317 = vst.msk [vmem:[#allocation2 + $0x20] sm:$0xff] %vm312, -inf
        %318 = vst.msk [vmem:[#allocation2 + $0x28] sm:$0xff] %vm312, -inf
        %319 = vst.msk [vmem:[#allocation2 + $0x30] sm:$0xff] %vm312, -inf
        %320 = vst.msk [vmem:[#allocation2 + $0x38] sm:$0xff] %vm312, -inf
        %321 = vst.msk [vmem:[#allocation3] sm:$0xff] %vm312, 0.0
        %322 = vst.msk [vmem:[#allocation3 + $0x8] sm:$0xff] %vm312, 0.0
        %323 = vst.msk [vmem:[#allocation3 + $0x10] sm:$0xff] %vm312, 0.0
        %324 = vst.msk [vmem:[#allocation3 + $0x18] sm:$0xff] %vm312, 0.0
        %325 = vst.msk [vmem:[#allocation3 + $0x20] sm:$0xff] %vm312, 0.0
        %326 = vst.msk [vmem:[#allocation3 + $0x28] sm:$0xff] %vm312, 0.0
        %327 = vst.msk [vmem:[#allocation3 + $0x30] sm:$0xff] %vm312, 0.0
        %328 = vst.msk [vmem:[#allocation3 + $0x38] sm:$0xff] %vm312, 0.0
        %vm329 = vcmask 64512
        %330 = vst.msk [vmem:[#allocation4] sm:$0xff] %vm329, 0.0
        %331 = vst.msk [vmem:[#allocation4 + $0x8] sm:$0xff] %vm329, 0.0
        %332 = vst.msk [vmem:[#allocation4 + $0x10] sm:$0xff] %vm329, 0.0
        %333 = vst.msk [vmem:[#allocation4 + $0x18] sm:$0xff] %vm329, 0.0
        %334 = vst.msk [vmem:[#allocation4 + $0x20] sm:$0xff] %vm329, 0.0
        %335 = vst.msk [vmem:[#allocation4 + $0x28] sm:$0xff] %vm329, 0.0
        %336 = vst.msk [vmem:[#allocation4 + $0x30] sm:$0xff] %vm329, 0.0
        %337 = vst.msk [vmem:[#allocation4 + $0x38] sm:$0xff] %vm329, 0.0
      $region36: #{_lambda_.36} parent=31 // pred_fallthru
        _
      %v338 = vld [vmem:[%s268] sm:$0xff]
      %v339 = vld [vmem:[%s268 + $0x8] sm:$0xff]
      %v340 = vld [vmem:[%s268 + $0x10] sm:$0xff]
      %v341 = vld [vmem:[%s268 + $0x18] sm:$0xff]
      %v342 = vld [vmem:[%s268 + $0x20] sm:$0xff]
      %v343 = vld [vmem:[%s268 + $0x28] sm:$0xff]
      %v344 = vld [vmem:[%s268 + $0x30] sm:$0xff]
      %v345 = vld [vmem:[%s268 + $0x38] sm:$0xff]
      %v346 = vmul.f32 %v338, 0.35355338
      %v347 = vmul.f32 %v339, 0.35355338
      %v348 = vmul.f32 %v340, 0.35355338
      %v349 = vmul.f32 %v341, 0.35355338
      %v350 = vmul.f32 %v342, 0.35355338
      %v351 = vmul.f32 %v343, 0.35355338
      %v352 = vmul.f32 %v344, 0.35355338
      %v353 = vmul.f32 %v345, 0.35355338
      %v354 = vpack.c.bf16 %v347, %v346
      %v355 = vpack.c.bf16 %v349, %v348
      %v356 = vpack.c.bf16 %v351, %v350
      %v357 = vpack.c.bf16 %v353, %v352
      %v358 = vld [vmem:[%s280] sm:$0xff]
      %v359 = vld [vmem:[%s280 + $0x8] sm:$0xff]
      %v360 = vld [vmem:[%s280 + $0x10] sm:$0xff]
      %v361 = vld [vmem:[%s280 + $0x18] sm:$0xff]
      %v362 = vld [vmem:[%s280 + $0x20] sm:$0xff]
      %v363 = vld [vmem:[%s280 + $0x28] sm:$0xff]
      %v364 = vld [vmem:[%s280 + $0x30] sm:$0xff]
      %v365 = vld [vmem:[%s280 + $0x38] sm:$0xff]
      %v366 = vpack.c.bf16 %v359, %v358
      %v367 = vpack.c.bf16 %v361, %v360
      %v368 = vpack.c.bf16 %v363, %v362
      %v369 = vpack.c.bf16 %v365, %v364
      %v370 = vld [vmem:[%s292] sm:$0xff]
      %v371 = vld [vmem:[%s292 + $0x8] sm:$0xff]
      %v372 = vld [vmem:[%s292 + $0x10] sm:$0xff]
      %v373 = vld [vmem:[%s292 + $0x18] sm:$0xff]
      %v374 = vld [vmem:[%s292 + $0x20] sm:$0xff]
      %v375 = vld [vmem:[%s292 + $0x28] sm:$0xff]
      %v376 = vld [vmem:[%s292 + $0x30] sm:$0xff]
      %v377 = vld [vmem:[%s292 + $0x38] sm:$0xff]
      %v378 = vpack.c.bf16 %v371, %v370
      %v379 = vpack.c.bf16 %v373, %v372
      %v380 = vpack.c.bf16 %v375, %v374
      %v381 = vpack.c.bf16 %v377, %v376
      %vm382 = vcmask 64512
      %v384 = vsel %vm382, %v354, 0
      %v387 = vsel %vm382, %v366, 0
      %389 = vmatprep.subr.bf16.mxu0 0
      %390 = vmatpush1.bf16.xpose.msra.mxu0 %v387
      %391 = vmatprep.subr.bf16.mxu0 0
      %392 = vmatpush1.bf16.xpose.msra.mxu0 0
      %393 = vmatprep.subr.bf16.mxu0 0
      %394 = vmatpush1.bf16.xpose.msra.mxu0 0
      %395 = vmatprep.subr.bf16.mxu0 0
      %396 = vmatpush1.bf16.xpose.msra.mxu0 0
      %397 = vmatprep.subr.bf16.mxu0 0
      %398 = vmatpush1.bf16.xpose.msra.mxu0 0
      %399 = vmatprep.subr.bf16.mxu0 0
      %400 = vmatpush1.bf16.xpose.msra.mxu0 0
      %401 = vmatprep.subr.bf16.mxu0 0
      %402 = vmatpush1.bf16.xpose.msra.mxu0 0
      %403 = vmatprep.subr.bf16.mxu0 0
      %404 = vmatpush1.bf16.xpose.msra.mxu0 0
      %405 = vmatprep.subr.bf16.mxu0 0
      %406 = vmatpush1.bf16.xpose.msra.mxu0 0
      %407 = vmatprep.subr.bf16.mxu0 0
      %408 = vmatpush1.bf16.xpose.msra.mxu0 0
      %409 = vmatprep.subr.bf16.mxu0 0
      %410 = vmatpush1.bf16.xpose.msra.mxu0 0
      %411 = vmatprep.subr.bf16.mxu0 0
      %412 = vmatpush1.bf16.xpose.msra.mxu0 0
      %413 = vmatprep.subr.bf16.mxu0 0
      %414 = vmatpush1.bf16.xpose.msra.mxu0 0
      %415 = vmatprep.subr.bf16.mxu0 0
      %416 = vmatpush1.bf16.xpose.msra.mxu0 0
      %417 = vmatprep.subr.bf16.mxu0 0
      %418 = vmatpush1.bf16.xpose.msra.mxu0 0
      %419 = vmatprep.subr.bf16.mxu0 0
      %420 = vmatpush1.bf16.xpose.msra.mxu0 0
      %421 = vmatprep.mubr.bf16.mxu0 0
      %422 = vmatmul.mubr.bf16.gmra.mrb[0].mxu0 %v384
      %v423 = vpop.f32.mrb[0].mxu0
      %v424 = vadd.f32 0.0, %v423
      %v425 = vpop.f32.mrb[0].mxu0
      %v426 = vpop.f32.mrb[0].mxu0
      %v427 = vadd.f32 0.0, %v426
      %v428 = vpop.f32.mrb[0].mxu0
      %429 = vdwg.mxu0
      %v431 = vsel %vm382, %v355, 0
      %v434 = vsel %vm382, %v367, 0
      %436 = vmatprep.subr.bf16.mxu0 0
      %437 = vmatpush1.bf16.xpose.msra.mxu0 %v434
      %438 = vmatprep.subr.bf16.mxu0 0
      %439 = vmatpush1.bf16.xpose.msra.mxu0 0
      %440 = vmatprep.subr.bf16.mxu0 0
      %441 = vmatpush1.bf16.xpose.msra.mxu0 0
      %442 = vmatprep.subr.bf16.mxu0 0
      %443 = vmatpush1.bf16.xpose.msra.mxu0 0
      %444 = vmatprep.subr.bf16.mxu0 0
      %445 = vmatpush1.bf16.xpose.msra.mxu0 0
      %446 = vmatprep.subr.bf16.mxu0 0
      %447 = vmatpush1.bf16.xpose.msra.mxu0 0
      %448 = vmatprep.subr.bf16.mxu0 0
      %449 = vmatpush1.bf16.xpose.msra.mxu0 0
      %450 = vmatprep.subr.bf16.mxu0 0
      %451 = vmatpush1.bf16.xpose.msra.mxu0 0
      %452 = vmatprep.subr.bf16.mxu0 0
      %453 = vmatpush1.bf16.xpose.msra.mxu0 0
      %454 = vmatprep.subr.bf16.mxu0 0
      %455 = vmatpush1.bf16.xpose.msra.mxu0 0
      %456 = vmatprep.subr.bf16.mxu0 0
      %457 = vmatpush1.bf16.xpose.msra.mxu0 0
      %458 = vmatprep.subr.bf16.mxu0 0
      %459 = vmatpush1.bf16.xpose.msra.mxu0 0
      %460 = vmatprep.subr.bf16.mxu0 0
      %461 = vmatpush1.bf16.xpose.msra.mxu0 0
      %462 = vmatprep.subr.bf16.mxu0 0
      %463 = vmatpush1.bf16.xpose.msra.mxu0 0
      %464 = vmatprep.subr.bf16.mxu0 0
      %465 = vmatpush1.bf16.xpose.msra.mxu0 0
      %466 = vmatprep.subr.bf16.mxu0 0
      %467 = vmatpush1.bf16.xpose.msra.mxu0 0
      %468 = vmatprep.mubr.bf16.mxu0 0
      %469 = vmatmul.mubr.bf16.gmra.mrb[0].mxu0 %v431
      %v470 = vpop.f32.mrb[0].mxu0
      %v471 = vadd.f32 0.0, %v470
      %v472 = vpop.f32.mrb[0].mxu0
      %v473 = vpop.f32.mrb[0].mxu0
      %v474 = vadd.f32 0.0, %v473
      %v475 = vpop.f32.mrb[0].mxu0
      %476 = vdwg.mxu0
      %v478 = vsel %vm382, %v356, 0
      %v481 = vsel %vm382, %v368, 0
      %483 = vmatprep.subr.bf16.mxu0 0
      %484 = vmatpush1.bf16.xpose.msra.mxu0 %v481
      %485 = vmatprep.subr.bf16.mxu0 0
      %486 = vmatpush1.bf16.xpose.msra.mxu0 0
      %487 = vmatprep.subr.bf16.mxu0 0
      %488 = vmatpush1.bf16.xpose.msra.mxu0 0
      %489 = vmatprep.subr.bf16.mxu0 0
      %490 = vmatpush1.bf16.xpose.msra.mxu0 0
      %491 = vmatprep.subr.bf16.mxu0 0
      %492 = vmatpush1.bf16.xpose.msra.mxu0 0
      %493 = vmatprep.subr.bf16.mxu0 0
      %494 = vmatpush1.bf16.xpose.msra.mxu0 0
      %495 = vmatprep.subr.bf16.mxu0 0
      %496 = vmatpush1.bf16.xpose.msra.mxu0 0
      %497 = vmatprep.subr.bf16.mxu0 0
      %498 = vmatpush1.bf16.xpose.msra.mxu0 0
      %499 = vmatprep.subr.bf16.mxu0 0
      %500 = vmatpush1.bf16.xpose.msra.mxu0 0
      %501 = vmatprep.subr.bf16.mxu0 0
      %502 = vmatpush1.bf16.xpose.msra.mxu0 0
      %503 = vmatprep.subr.bf16.mxu0 0
      %504 = vmatpush1.bf16.xpose.msra.mxu0 0
      %505 = vmatprep.subr.bf16.mxu0 0
      %506 = vmatpush1.bf16.xpose.msra.mxu0 0
      %507 = vmatprep.subr.bf16.mxu0 0
      %508 = vmatpush1.bf16.xpose.msra.mxu0 0
      %509 = vmatprep.subr.bf16.mxu0 0
      %510 = vmatpush1.bf16.xpose.msra.mxu0 0
      %511 = vmatprep.subr.bf16.mxu0 0
      %512 = vmatpush1.bf16.xpose.msra.mxu0 0
      %513 = vmatprep.subr.bf16.mxu0 0
      %514 = vmatpush1.bf16.xpose.msra.mxu0 0
      %515 = vmatprep.mubr.bf16.mxu0 0
      %516 = vmatmul.mubr.bf16.gmra.mrb[0].mxu0 %v478
      %v517 = vpop.f32.mrb[0].mxu0
      %v518 = vadd.f32 0.0, %v517
      %v519 = vpop.f32.mrb[0].mxu0
      %v520 = vpop.f32.mrb[0].mxu0
      %v521 = vadd.f32 0.0, %v520
      %v522 = vpop.f32.mrb[0].mxu0
      %523 = vdwg.mxu0
      %v525 = vsel %vm382, %v357, 0
      %v528 = vsel %vm382, %v369, 0
      %530 = vmatprep.subr.bf16.mxu0 0
      %531 = vmatpush1.bf16.xpose.msra.mxu0 %v528
      %532 = vmatprep.subr.bf16.mxu0 0
      %533 = vmatpush1.bf16.xpose.msra.mxu0 0
      %534 = vmatprep.subr.bf16.mxu0 0
      %535 = vmatpush1.bf16.xpose.msra.mxu0 0
      %536 = vmatprep.subr.bf16.mxu0 0
      %537 = vmatpush1.bf16.xpose.msra.mxu0 0
      %538 = vmatprep.subr.bf16.mxu0 0
      %539 = vmatpush1.bf16.xpose.msra.mxu0 0
      %540 = vmatprep.subr.bf16.mxu0 0
      %541 = vmatpush1.bf16.xpose.msra.mxu0 0
      %542 = vmatprep.subr.bf16.mxu0 0
      %543 = vmatpush1.bf16.xpose.msra.mxu0 0
      %544 = vmatprep.subr.bf16.mxu0 0
      %545 = vmatpush1.bf16.xpose.msra.mxu0 0
      %546 = vmatprep.subr.bf16.mxu0 0
      %547 = vmatpush1.bf16.xpose.msra.mxu0 0
      %548 = vmatprep.subr.bf16.mxu0 0
      %549 = vmatpush1.bf16.xpose.msra.mxu0 0
      %550 = vmatprep.subr.bf16.mxu0 0
      %551 = vmatpush1.bf16.xpose.msra.mxu0 0
      %552 = vmatprep.subr.bf16.mxu0 0
      %553 = vmatpush1.bf16.xpose.msra.mxu0 0
      %554 = vmatprep.subr.bf16.mxu0 0
      %555 = vmatpush1.bf16.xpose.msra.mxu0 0
      %556 = vmatprep.subr.bf16.mxu0 0
      %557 = vmatpush1.bf16.xpose.msra.mxu0 0
      %558 = vmatprep.subr.bf16.mxu0 0
      %559 = vmatpush1.bf16.xpose.msra.mxu0 0
      %560 = vmatprep.subr.bf16.mxu0 0
      %561 = vmatpush1.bf16.xpose.msra.mxu0 0
      %562 = vmatprep.mubr.bf16.mxu0 0
      %563 = vmatmul.mubr.bf16.gmra.mrb[0].mxu0 %v525
      %v564 = vpop.f32.mrb[0].mxu0
      %v565 = vadd.f32 0.0, %v564
      %v566 = vpop.f32.mrb[0].mxu0
      %v567 = vpop.f32.mrb[0].mxu0
      %v568 = vadd.f32 0.0, %v567
      %v569 = vpop.f32.mrb[0].mxu0
      %570 = vdwg.mxu0
      %v571 = vld [vmem:[#allocation2] sm:$0xff]
      %v572 = vld [vmem:[#allocation2 + $0x8] sm:$0xff]
      %v573 = vld [vmem:[#allocation2 + $0x10] sm:$0xff]
      %v574 = vld [vmem:[#allocation2 + $0x18] sm:$0xff]
      %v575 = vld [vmem:[#allocation2 + $0x20] sm:$0xff]
      %v576 = vld [vmem:[#allocation2 + $0x28] sm:$0xff]
      %v577 = vld [vmem:[#allocation2 + $0x30] sm:$0xff]
      %v578 = vld [vmem:[#allocation2 + $0x38] sm:$0xff]
      %vm579 = vcmask 130048
      %v580 = vsel %vm579, %v424, -inf
      %581 = vmax.xlane.f32.xlu0 %v580
      %v582 = vpop.xlane.xlu0 %581
      %v583 = vsel %vm579, %v427, -inf
      %584 = vmax.xlane.f32.xlu0 %v583
      %v585 = vpop.xlane.xlu0 %584
      %v586 = vsel %vm579, %v471, -inf
      %587 = vmax.xlane.f32.xlu0 %v586
      %v588 = vpop.xlane.xlu0 %587
      %v589 = vsel %vm579, %v474, -inf
      %590 = vmax.xlane.f32.xlu0 %v589
      %v591 = vpop.xlane.xlu0 %590
      %v592 = vsel %vm579, %v518, -inf
      %593 = vmax.xlane.f32.xlu0 %v592
      %v594 = vpop.xlane.xlu0 %593
      %v595 = vsel %vm579, %v521, -inf
      %596 = vmax.xlane.f32.xlu0 %v595
      %v597 = vpop.xlane.xlu0 %596
      %v598 = vsel %vm579, %v565, -inf
      %599 = vmax.xlane.f32.xlu0 %v598
      %v600 = vpop.xlane.xlu0 %599
      %v601 = vsel %vm579, %v568, -inf
      %602 = vmax.xlane.f32.xlu0 %v601
      %v603 = vpop.xlane.xlu0 %602
      %v604 = vmax.f32 %v571, %v582
      %v605 = vmax.f32 %v572, %v585
      %v606 = vmax.f32 %v573, %v588
      %v607 = vmax.f32 %v574, %v591
      %v608 = vmax.f32 %v575, %v594
      %v609 = vmax.f32 %v576, %v597
      %v610 = vmax.f32 %v577, %v600
      %v611 = vmax.f32 %v578, %v603
      %v612 = vsub.f32 %v571, %v604
      %v613 = vsub.f32 %v572, %v605
      %v614 = vsub.f32 %v573, %v606
      %v615 = vsub.f32 %v574, %v607
      %v616 = vsub.f32 %v575, %v608
      %v617 = vsub.f32 %v576, %v609
      %v618 = vsub.f32 %v577, %v610
      %v619 = vsub.f32 %v578, %v611
      %v620 = vmul.f32 %v612, 1.442695
      %v621 = vpow.pop %v620
      %v622 = vmul.f32 %v613, 1.442695
      %v623 = vpow.pop %v622
      %v624 = vmul.f32 %v614, 1.442695
      %v625 = vpow.pop %v624
      %v626 = vmul.f32 %v615, 1.442695
      %v627 = vpow.pop %v626
      %v628 = vmul.f32 %v616, 1.442695
      %v629 = vpow.pop %v628
      %v630 = vmul.f32 %v617, 1.442695
      %v631 = vpow.pop %v630
      %v632 = vmul.f32 %v618, 1.442695
      %v633 = vpow.pop %v632
      %v634 = vmul.f32 %v619, 1.442695
      %v635 = vpow.pop %v634
      %637 = vset.pattern.permute.xlu0 0
      %638 = vperm.xlu0 %637, %v604
      %v639 = vpop.permute.xlu0 %638
      %642 = vset.pattern.permute.xlu0 0
      %643 = vperm.xlu0 %642, %v605
      %v644 = vpop.permute.xlu0 %643
      %647 = vset.pattern.permute.xlu0 0
      %648 = vperm.xlu0 %647, %v606
      %v649 = vpop.permute.xlu0 %648
      %652 = vset.pattern.permute.xlu0 0
      %653 = vperm.xlu0 %652, %v607
      %v654 = vpop.permute.xlu0 %653
      %657 = vset.pattern.permute.xlu0 0
      %658 = vperm.xlu0 %657, %v608
      %v659 = vpop.permute.xlu0 %658
      %662 = vset.pattern.permute.xlu0 0
      %663 = vperm.xlu0 %662, %v609
      %v664 = vpop.permute.xlu0 %663
      %667 = vset.pattern.permute.xlu0 0
      %668 = vperm.xlu0 %667, %v610
      %v669 = vpop.permute.xlu0 %668
      %672 = vset.pattern.permute.xlu0 0
      %673 = vperm.xlu0 %672, %v611
      %v674 = vpop.permute.xlu0 %673
      %v676 = vsub.f32 %v424, %v639
      %v677 = vsub.f32 %v427, %v644
      %v678 = vsub.f32 %v471, %v649
      %v679 = vsub.f32 %v474, %v654
      %v680 = vsub.f32 %v518, %v659
      %v681 = vsub.f32 %v521, %v664
      %v682 = vsub.f32 %v565, %v669
      %v683 = vsub.f32 %v568, %v674
      %v684 = vmul.f32 %v676, 1.442695
      %v685 = vpow.pop %v684
      %v686 = vmul.f32 %v677, 1.442695
      %v687 = vpow.pop %v686
      %v688 = vmul.f32 %v678, 1.442695
      %v689 = vpow.pop %v688
      %v690 = vmul.f32 %v679, 1.442695
      %v691 = vpow.pop %v690
      %v692 = vmul.f32 %v680, 1.442695
      %v693 = vpow.pop %v692
      %v694 = vmul.f32 %v681, 1.442695
      %v695 = vpow.pop %v694
      %v696 = vmul.f32 %v682, 1.442695
      %v697 = vpow.pop %v696
      %v698 = vmul.f32 %v683, 1.442695
      %v699 = vpow.pop %v698
      %v700 = vld [vmem:[#allocation3] sm:$0xff]
      %v701 = vld [vmem:[#allocation3 + $0x8] sm:$0xff]
      %v702 = vld [vmem:[#allocation3 + $0x10] sm:$0xff]
      %v703 = vld [vmem:[#allocation3 + $0x18] sm:$0xff]
      %v704 = vld [vmem:[#allocation3 + $0x20] sm:$0xff]
      %v705 = vld [vmem:[#allocation3 + $0x28] sm:$0xff]
      %v706 = vld [vmem:[#allocation3 + $0x30] sm:$0xff]
      %v707 = vld [vmem:[#allocation3 + $0x38] sm:$0xff]
      %v708 = vmul.f32 %v621, %v700
      %v709 = vmul.f32 %v623, %v701
      %v710 = vmul.f32 %v625, %v702
      %v711 = vmul.f32 %v627, %v703
      %v712 = vmul.f32 %v629, %v704
      %v713 = vmul.f32 %v631, %v705
      %v714 = vmul.f32 %v633, %v706
      %v715 = vmul.f32 %v635, %v707
      %v716 = vsel %vm579, %v685, 0.0
      %717 = vadd.xlane.f32.xlu0 %v716
      %v718 = vpop.xlane.xlu0 %717
      %v719 = vsel %vm579, %v687, 0.0
      %720 = vadd.xlane.f32.xlu0 %v719
      %v721 = vpop.xlane.xlu0 %720
      %v722 = vsel %vm579, %v689, 0.0
      %723 = vadd.xlane.f32.xlu0 %v722
      %v724 = vpop.xlane.xlu0 %723
      %v725 = vsel %vm579, %v691, 0.0
      %726 = vadd.xlane.f32.xlu0 %v725
      %v727 = vpop.xlane.xlu0 %726
      %v728 = vsel %vm579, %v693, 0.0
      %729 = vadd.xlane.f32.xlu0 %v728
      %v730 = vpop.xlane.xlu0 %729
      %v731 = vsel %vm579, %v695, 0.0
      %732 = vadd.xlane.f32.xlu0 %v731
      %v733 = vpop.xlane.xlu0 %732
      %v734 = vsel %vm579, %v697, 0.0
      %735 = vadd.xlane.f32.xlu0 %v734
      %v736 = vpop.xlane.xlu0 %735
      %v737 = vsel %vm579, %v699, 0.0
      %738 = vadd.xlane.f32.xlu0 %v737
      %v739 = vpop.xlane.xlu0 %738
      %v740 = vadd.f32 %v708, %v718
      %v741 = vadd.f32 %v709, %v721
      %v742 = vadd.f32 %v710, %v724
      %v743 = vadd.f32 %v711, %v727
      %v744 = vadd.f32 %v712, %v730
      %v745 = vadd.f32 %v713, %v733
      %v746 = vadd.f32 %v714, %v736
      %v747 = vadd.f32 %v715, %v739
      %vm748 = vcmask 7168
      %749 = vst.msk [vmem:[#allocation3] sm:$0xff] %vm748, %v740
      %750 = vst.msk [vmem:[#allocation3 + $0x8] sm:$0xff] %vm748, %v741
      %751 = vst.msk [vmem:[#allocation3 + $0x10] sm:$0xff] %vm748, %v742
      %752 = vst.msk [vmem:[#allocation3 + $0x18] sm:$0xff] %vm748, %v743
      %753 = vst.msk [vmem:[#allocation3 + $0x20] sm:$0xff] %vm748, %v744
      %754 = vst.msk [vmem:[#allocation3 + $0x28] sm:$0xff] %vm748, %v745
      %755 = vst.msk [vmem:[#allocation3 + $0x30] sm:$0xff] %vm748, %v746
      %756 = vst.msk [vmem:[#allocation3 + $0x38] sm:$0xff] %vm748, %v747
      %v757 = vld [vmem:[#allocation4] sm:$0xff]
      %v758 = vld [vmem:[#allocation4 + $0x8] sm:$0xff]
      %v759 = vld [vmem:[#allocation4 + $0x10] sm:$0xff]
      %v760 = vld [vmem:[#allocation4 + $0x18] sm:$0xff]
      %v761 = vld [vmem:[#allocation4 + $0x20] sm:$0xff]
      %v762 = vld [vmem:[#allocation4 + $0x28] sm:$0xff]
      %v763 = vld [vmem:[#allocation4 + $0x30] sm:$0xff]
      %v764 = vld [vmem:[#allocation4 + $0x38] sm:$0xff]
      %766 = vset.pattern.permute.xlu0 0
      %767 = vperm.xlu0 %766, %v621
      %v768 = vpop.permute.xlu0 %767
      %771 = vset.pattern.permute.xlu0 0
      %772 = vperm.xlu0 %771, %v623
      %v773 = vpop.permute.xlu0 %772
      %776 = vset.pattern.permute.xlu0 0
      %777 = vperm.xlu0 %776, %v625
      %v778 = vpop.permute.xlu0 %777
      %781 = vset.pattern.permute.xlu0 0
      %782 = vperm.xlu0 %781, %v627
      %v783 = vpop.permute.xlu0 %782
      %786 = vset.pattern.permute.xlu0 0
      %787 = vperm.xlu0 %786, %v629
      %v788 = vpop.permute.xlu0 %787
      %791 = vset.pattern.permute.xlu0 0
      %792 = vperm.xlu0 %791, %v631
      %v793 = vpop.permute.xlu0 %792
      %796 = vset.pattern.permute.xlu0 0
      %797 = vperm.xlu0 %796, %v633
      %v798 = vpop.permute.xlu0 %797
      %801 = vset.pattern.permute.xlu0 0
      %802 = vperm.xlu0 %801, %v635
      %v803 = vpop.permute.xlu0 %802
      %v805 = vmul.f32 %v768, %v757
      %v806 = vmul.f32 %v773, %v758
      %v807 = vmul.f32 %v778, %v759
      %v808 = vmul.f32 %v783, %v760
      %v809 = vmul.f32 %v788, %v761
      %v810 = vmul.f32 %v793, %v762
      %v811 = vmul.f32 %v798, %v763
      %v812 = vmul.f32 %v803, %v764
      %v813 = vpack.c.bf16 %v687, %v685
      %v814 = vpack.c.bf16 %v691, %v689
      %v815 = vpack.c.bf16 %v695, %v693
      %v816 = vpack.c.bf16 %v699, %v697
      %v818 = vsel %vm579, %v813, 0
      %820 = vmatprep.subr.bf16.mxu0 0
      %821 = vmatpush1.bf16.msra.mxu0 %v378
      %822 = vmatprep.subr.bf16.mxu0 0
      %823 = vmatpush1.bf16.msra.mxu0 0
      %824 = vmatprep.subr.bf16.mxu0 0
      %825 = vmatpush1.bf16.msra.mxu0 0
      %826 = vmatprep.subr.bf16.mxu0 0
      %827 = vmatpush1.bf16.msra.mxu0 0
      %828 = vmatprep.subr.bf16.mxu0 0
      %829 = vmatpush1.bf16.msra.mxu0 0
      %830 = vmatprep.subr.bf16.mxu0 0
      %831 = vmatpush1.bf16.msra.mxu0 0
      %832 = vmatprep.subr.bf16.mxu0 0
      %833 = vmatpush1.bf16.msra.mxu0 0
      %834 = vmatprep.subr.bf16.mxu0 0
      %835 = vmatpush1.bf16.msra.mxu0 0
      %836 = vmatprep.subr.bf16.mxu0 0
      %837 = vmatpush1.bf16.msra.mxu0 0
      %838 = vmatprep.subr.bf16.mxu0 0
      %839 = vmatpush1.bf16.msra.mxu0 0
      %840 = vmatprep.subr.bf16.mxu0 0
      %841 = vmatpush1.bf16.msra.mxu0 0
      %842 = vmatprep.subr.bf16.mxu0 0
      %843 = vmatpush1.bf16.msra.mxu0 0
      %844 = vmatprep.subr.bf16.mxu0 0
      %845 = vmatpush1.bf16.msra.mxu0 0
      %846 = vmatprep.subr.bf16.mxu0 0
      %847 = vmatpush1.bf16.msra.mxu0 0
      %848 = vmatprep.subr.bf16.mxu0 0
      %849 = vmatpush1.bf16.msra.mxu0 0
      %850 = vmatprep.subr.bf16.mxu0 0
      %851 = vmatpush1.bf16.msra.mxu0 0
      %852 = vmatprep.mubr.bf16.mxu0 0
      %853 = vmatmul.mubr.bf16.gmra.mrb[0].mxu0 %v818
      %v854 = vpop.f32.mrb[0].mxu0
      %v855 = vadd.f32 0.0, %v854
      %v856 = vpop.f32.mrb[0].mxu0
      %v857 = vpop.f32.mrb[0].mxu0
      %v858 = vadd.f32 0.0, %v857
      %v859 = vpop.f32.mrb[0].mxu0
      %860 = vdwg.mxu0
      %v862 = vsel %vm579, %v814, 0
      %864 = vmatprep.subr.bf16.mxu0 0
      %865 = vmatpush1.bf16.msra.mxu0 %v379
      %866 = vmatprep.subr.bf16.mxu0 0
      %867 = vmatpush1.bf16.msra.mxu0 0
      %868 = vmatprep.subr.bf16.mxu0 0
      %869 = vmatpush1.bf16.msra.mxu0 0
      %870 = vmatprep.subr.bf16.mxu0 0
      %871 = vmatpush1.bf16.msra.mxu0 0
      %872 = vmatprep.subr.bf16.mxu0 0
      %873 = vmatpush1.bf16.msra.mxu0 0
      %874 = vmatprep.subr.bf16.mxu0 0
      %875 = vmatpush1.bf16.msra.mxu0 0
      %876 = vmatprep.subr.bf16.mxu0 0
      %877 = vmatpush1.bf16.msra.mxu0 0
      %878 = vmatprep.subr.bf16.mxu0 0
      %879 = vmatpush1.bf16.msra.mxu0 0
      %880 = vmatprep.subr.bf16.mxu0 0
      %881 = vmatpush1.bf16.msra.mxu0 0
      %882 = vmatprep.subr.bf16.mxu0 0
      %883 = vmatpush1.bf16.msra.mxu0 0
      %884 = vmatprep.subr.bf16.mxu0 0
      %885 = vmatpush1.bf16.msra.mxu0 0
      %886 = vmatprep.subr.bf16.mxu0 0
      %887 = vmatpush1.bf16.msra.mxu0 0
      %888 = vmatprep.subr.bf16.mxu0 0
      %889 = vmatpush1.bf16.msra.mxu0 0
      %890 = vmatprep.subr.bf16.mxu0 0
      %891 = vmatpush1.bf16.msra.mxu0 0
      %892 = vmatprep.subr.bf16.mxu0 0
      %893 = vmatpush1.bf16.msra.mxu0 0
      %894 = vmatprep.subr.bf16.mxu0 0
      %895 = vmatpush1.bf16.msra.mxu0 0
      %896 = vmatprep.mubr.bf16.mxu0 0
      %897 = vmatmul.mubr.bf16.gmra.mrb[0].mxu0 %v862
      %v898 = vpop.f32.mrb[0].mxu0
      %v899 = vadd.f32 0.0, %v898
      %v900 = vpop.f32.mrb[0].mxu0
      %v901 = vpop.f32.mrb[0].mxu0
      %v902 = vadd.f32 0.0, %v901
      %v903 = vpop.f32.mrb[0].mxu0
      %904 = vdwg.mxu0
      %v906 = vsel %vm579, %v815, 0
      %908 = vmatprep.subr.bf16.mxu0 0
      %909 = vmatpush1.bf16.msra.mxu0 %v380
      %910 = vmatprep.subr.bf16.mxu0 0
      %911 = vmatpush1.bf16.msra.mxu0 0
      %912 = vmatprep.subr.bf16.mxu0 0
      %913 = vmatpush1.bf16.msra.mxu0 0
      %914 = vmatprep.subr.bf16.mxu0 0
      %915 = vmatpush1.bf16.msra.mxu0 0
      %916 = vmatprep.subr.bf16.mxu0 0
      %917 = vmatpush1.bf16.msra.mxu0 0
      %918 = vmatprep.subr.bf16.mxu0 0
      %919 = vmatpush1.bf16.msra.mxu0 0
      %920 = vmatprep.subr.bf16.mxu0 0
      %921 = vmatpush1.bf16.msra.mxu0 0
      %922 = vmatprep.subr.bf16.mxu0 0
      %923 = vmatpush1.bf16.msra.mxu0 0
      %924 = vmatprep.subr.bf16.mxu0 0
      %925 = vmatpush1.bf16.msra.mxu0 0
      %926 = vmatprep.subr.bf16.mxu0 0
      %927 = vmatpush1.bf16.msra.mxu0 0
      %928 = vmatprep.subr.bf16.mxu0 0
      %929 = vmatpush1.bf16.msra.mxu0 0
      %930 = vmatprep.subr.bf16.mxu0 0
      %931 = vmatpush1.bf16.msra.mxu0 0
      %932 = vmatprep.subr.bf16.mxu0 0
      %933 = vmatpush1.bf16.msra.mxu0 0
      %934 = vmatprep.subr.bf16.mxu0 0
      %935 = vmatpush1.bf16.msra.mxu0 0
      %936 = vmatprep.subr.bf16.mxu0 0
      %937 = vmatpush1.bf16.msra.mxu0 0
      %938 = vmatprep.subr.bf16.mxu0 0
      %939 = vmatpush1.bf16.msra.mxu0 0
      %940 = vmatprep.mubr.bf16.mxu0 0
      %941 = vmatmul.mubr.bf16.gmra.mrb[0].mxu0 %v906
      %v942 = vpop.f32.mrb[0].mxu0
      %v943 = vadd.f32 0.0, %v942
      %v944 = vpop.f32.mrb[0].mxu0
      %v945 = vpop.f32.mrb[0].mxu0
      %v946 = vadd.f32 0.0, %v945
      %v947 = vpop.f32.mrb[0].mxu0
      %948 = vdwg.mxu0
      %v950 = vsel %vm579, %v816, 0
      %952 = vmatprep.subr.bf16.mxu0 0
      %953 = vmatpush1.bf16.msra.mxu0 %v381
      %954 = vmatprep.subr.bf16.mxu0 0
      %955 = vmatpush1.bf16.msra.mxu0 0
      %956 = vmatprep.subr.bf16.mxu0 0
      %957 = vmatpush1.bf16.msra.mxu0 0
      %958 = vmatprep.subr.bf16.mxu0 0
      %959 = vmatpush1.bf16.msra.mxu0 0
      %960 = vmatprep.subr.bf16.mxu0 0
      %961 = vmatpush1.bf16.msra.mxu0 0
      %962 = vmatprep.subr.bf16.mxu0 0
      %963 = vmatpush1.bf16.msra.mxu0 0
      %964 = vmatprep.subr.bf16.mxu0 0
      %965 = vmatpush1.bf16.msra.mxu0 0
      %966 = vmatprep.subr.bf16.mxu0 0
      %967 = vmatpush1.bf16.msra.mxu0 0
      %968 = vmatprep.subr.bf16.mxu0 0
      %969 = vmatpush1.bf16.msra.mxu0 0
      %970 = vmatprep.subr.bf16.mxu0 0
      %971 = vmatpush1.bf16.msra.mxu0 0
      %972 = vmatprep.subr.bf16.mxu0 0
      %973 = vmatpush1.bf16.msra.mxu0 0
      %974 = vmatprep.subr.bf16.mxu0 0
      %975 = vmatpush1.bf16.msra.mxu0 0
      %976 = vmatprep.subr.bf16.mxu0 0
      %977 = vmatpush1.bf16.msra.mxu0 0
      %978 = vmatprep.subr.bf16.mxu0 0
      %979 = vmatpush1.bf16.msra.mxu0 0
      %980 = vmatprep.subr.bf16.mxu0 0
      %981 = vmatpush1.bf16.msra.mxu0 0
      %982 = vmatprep.subr.bf16.mxu0 0
      %983 = vmatpush1.bf16.msra.mxu0 0
      %984 = vmatprep.mubr.bf16.mxu0 0
      %985 = vmatmul.mubr.bf16.gmra.mrb[0].mxu0 %v950
      %v986 = vpop.f32.mrb[0].mxu0
      %v987 = vadd.f32 0.0, %v986
      %v988 = vpop.f32.mrb[0].mxu0
      %v989 = vpop.f32.mrb[0].mxu0
      %v990 = vadd.f32 0.0, %v989
      %v991 = vpop.f32.mrb[0].mxu0
      %992 = vdwg.mxu0
      %v993 = vadd.f32 %v805, %v855
      %v994 = vadd.f32 %v806, %v858
      %v995 = vadd.f32 %v807, %v899
      %v996 = vadd.f32 %v808, %v902
      %v997 = vadd.f32 %v809, %v943
      %v998 = vadd.f32 %v810, %v946
      %v999 = vadd.f32 %v811, %v987
      %v1000 = vadd.f32 %v812, %v990
      %1001 = vst.msk [vmem:[#allocation4] sm:$0xff] %vm382, %v993
      %1002 = vst.msk [vmem:[#allocation4 + $0x8] sm:$0xff] %vm382, %v994
      %1003 = vst.msk [vmem:[#allocation4 + $0x10] sm:$0xff] %vm382, %v995
      %1004 = vst.msk [vmem:[#allocation4 + $0x18] sm:$0xff] %vm382, %v996
      %1005 = vst.msk [vmem:[#allocation4 + $0x20] sm:$0xff] %vm382, %v997
      %1006 = vst.msk [vmem:[#allocation4 + $0x28] sm:$0xff] %vm382, %v998
      %1007 = vst.msk [vmem:[#allocation4 + $0x30] sm:$0xff] %vm382, %v999
      %1008 = vst.msk [vmem:[#allocation4 + $0x38] sm:$0xff] %vm382, %v1000
      %1009 = vst.msk [vmem:[#allocation2] sm:$0xff] %vm748, %v604
      %1010 = vst.msk [vmem:[#allocation2 + $0x8] sm:$0xff] %vm748, %v605
      %1011 = vst.msk [vmem:[#allocation2 + $0x10] sm:$0xff] %vm748, %v606
      %1012 = vst.msk [vmem:[#allocation2 + $0x18] sm:$0xff] %vm748, %v607
      %1013 = vst.msk [vmem:[#allocation2 + $0x20] sm:$0xff] %vm748, %v608
      %1014 = vst.msk [vmem:[#allocation2 + $0x28] sm:$0xff] %vm748, %v609
      %1015 = vst.msk [vmem:[#allocation2 + $0x30] sm:$0xff] %vm748, %v610
      %1016 = vst.msk [vmem:[#allocation2 + $0x38] sm:$0xff] %vm748, %v611
      // Predicated region
      $region37: #{_lambda_.36} parent=31 // pred_check
        %p1017 = pneg %p308
      $region38: #{_lambda_.36} parent=31 // pred_check_branch
        %1019 = sbr.rel (%p1017) target = $region40
      $region39: #{_lambda_.36} parent=31 // pred_region
        %v1020 = vld [vmem:[#allocation3] sm:$0xff]
        %v1021 = vld [vmem:[#allocation3 + $0x8] sm:$0xff]
        %v1022 = vld [vmem:[#allocation3 + $0x10] sm:$0xff]
        %v1023 = vld [vmem:[#allocation3 + $0x18] sm:$0xff]
        %v1024 = vld [vmem:[#allocation3 + $0x20] sm:$0xff]
        %v1025 = vld [vmem:[#allocation3 + $0x28] sm:$0xff]
        %v1026 = vld [vmem:[#allocation3 + $0x30] sm:$0xff]
        %v1027 = vld [vmem:[#allocation3 + $0x38] sm:$0xff]
        %v1028 = vrcp.pop %v1020
        %v1029 = vrcp.pop %v1021
        %v1030 = vrcp.pop %v1022
        %v1031 = vrcp.pop %v1023
        %v1032 = vrcp.pop %v1024
        %v1033 = vrcp.pop %v1025
        %v1034 = vrcp.pop %v1026
        %v1035 = vrcp.pop %v1027
        %v1036 = vld [vmem:[#allocation4] sm:$0xff]
        %v1037 = vld [vmem:[#allocation4 + $0x8] sm:$0xff]
        %v1038 = vld [vmem:[#allocation4 + $0x10] sm:$0xff]
        %v1039 = vld [vmem:[#allocation4 + $0x18] sm:$0xff]
        %v1040 = vld [vmem:[#allocation4 + $0x20] sm:$0xff]
        %v1041 = vld [vmem:[#allocation4 + $0x28] sm:$0xff]
        %v1042 = vld [vmem:[#allocation4 + $0x30] sm:$0xff]
        %v1043 = vld [vmem:[#allocation4 + $0x38] sm:$0xff]
        %1045 = vset.pattern.permute.xlu0 0
        %1046 = vperm.xlu0 %1045, %v1028
        %v1047 = vpop.permute.xlu0 %1046
        %1050 = vset.pattern.permute.xlu0 0
        %1051 = vperm.xlu0 %1050, %v1029
        %v1052 = vpop.permute.xlu0 %1051
        %1055 = vset.pattern.permute.xlu0 0
        %1056 = vperm.xlu0 %1055, %v1030
        %v1057 = vpop.permute.xlu0 %1056
        %1060 = vset.pattern.permute.xlu0 0
        %1061 = vperm.xlu0 %1060, %v1031
        %v1062 = vpop.permute.xlu0 %1061
        %1065 = vset.pattern.permute.xlu0 0
        %1066 = vperm.xlu0 %1065, %v1032
        %v1067 = vpop.permute.xlu0 %1066
        %1070 = vset.pattern.permute.xlu0 0
        %1071 = vperm.xlu0 %1070, %v1033
        %v1072 = vpop.permute.xlu0 %1071
        %1075 = vset.pattern.permute.xlu0 0
        %1076 = vperm.xlu0 %1075, %v1034
        %v1077 = vpop.permute.xlu0 %1076
        %1080 = vset.pattern.permute.xlu0 0
        %1081 = vperm.xlu0 %1080, %v1035
        %v1082 = vpop.permute.xlu0 %1081
        %v1084 = vmul.f32 %v1036, %v1047
        %v1085 = vmul.f32 %v1037, %v1052
        %v1086 = vmul.f32 %v1038, %v1057
        %v1087 = vmul.f32 %v1039, %v1062
        %v1088 = vmul.f32 %v1040, %v1067
        %v1089 = vmul.f32 %v1041, %v1072
        %v1090 = vmul.f32 %v1042, %v1077
        %v1091 = vmul.f32 %v1043, %v1082
        %1092 = vst.msk [vmem:[%s304] sm:$0xff] %vm382, %v1084
        %1093 = vst.msk [vmem:[%s304 + $0x8] sm:$0xff] %vm382, %v1085
        %1094 = vst.msk [vmem:[%s304 + $0x10] sm:$0xff] %vm382, %v1086
        %1095 = vst.msk [vmem:[%s304 + $0x18] sm:$0xff] %vm382, %v1087
        %1096 = vst.msk [vmem:[%s304 + $0x20] sm:$0xff] %vm382, %v1088
        %1097 = vst.msk [vmem:[%s304 + $0x28] sm:$0xff] %vm382, %v1089
        %1098 = vst.msk [vmem:[%s304 + $0x30] sm:$0xff] %vm382, %v1090
        %1099 = vst.msk [vmem:[%s304 + $0x38] sm:$0xff] %vm382, %v1091
      $region40: #{_lambda_.36} parent=31 // pred_fallthru
        _
      %s1100 = smul.u32 4, %s19
      %s1101 = smul.u32 2, %s20
      %p1102 = scmp.lt.s32.totalorder %s1100, 7
      %s1103 = scalar_select %p1102, %s1100, 7
      %p1104 = scmp.lt.s32.totalorder %s1101, 1
      %s1105 = scalar_select %p1104, %s1101, 1
      %s1106 = smul.addr %s1103, 2
      %s1107 = sadd.s32 %s1105, %s1106
      %s1108 = smul.addr %s1107, 8
      %s1109 = scalar_lea.vmem %s3, %s1108
      // Predicated region
      $region41: #{_lambda_.36} parent=31 // pred_check
        %p1110 = pneg %p137
      $region42: #{_lambda_.36} parent=31 // pred_check_branch
        %1112 = sbr.rel (%p1110) target = $region44
      $region43: #{_lambda_.36} parent=31 // pred_region
        %s1113 = smul.u32 4, %s19
        %s1114 = smul.u32 2, %s20
      $region44: #{_lambda_.36} parent=31 // pred_fallthru
        _
    $region32: #{_lambda_.36} parent=5 // pred_fallthru
      _
    %p1115 = scmp.le.s32.totalorder 2, %s9
    // Predicated region
    $region45: #{_lambda_.36} parent=5 // pred_check
      %p1116 = pneg %p1115
    $region46: #{_lambda_.36} parent=5 // pred_check_branch
      %1118 = sbr.rel (%p1116) target = $region48
    $region47: #{_lambda_.36} parent=5 // pred_region
      %s1119 = ssub.s32 %s9, 2
      // Predicated region
      $region49: #{_lambda_.36} parent=47 // pred_check
        %p1120 = pneg %p143
      $region50: #{_lambda_.36} parent=47 // pred_check_branch
        %1122 = sbr.rel (%p1120) target = $region52
      $region51: #{_lambda_.36} parent=47 // pred_region
        %s1123 = smul.u32 4, %s22
        %s1124 = smul.u32 2, %s23
        %p1125 = scmp.lt.s32.totalorder %s1123, 7
        %s1126 = scalar_select %p1125, %s1123, 7
        %p1127 = scmp.lt.s32.totalorder %s1124, 1
        %s1128 = scalar_select %p1127, %s1124, 1
        %s1129 = smul.addr %s1126, 2
        %s1130 = sadd.s32 %s1128, %s1129
        %s1131 = smul.addr %s1130, 8
        %s1132 = scalar_lea.vmem %s3, %s1131
      $region52: #{_lambda_.36} parent=47 // pred_fallthru
        _
    $region48: #{_lambda_.36} parent=5 // pred_fallthru
      _
  $region6: #{_lambda_.36} parent=0 // loop_footer
    %s13 = sadd.s32 1, %s9
  $region7: #{_lambda_.36} parent=0 // loop_footer_branch
    %8 = sbr.rel target = $region3
  $region8: #{_lambda_.36} parent=0 // loop_exit
    _

// kernel: _lambda_.40
$region0: #{_lambda_.40}
  #allocation0 [shape = 'u32[]', space=smem, size = 0x4, offset = 0x4, fixed_abs, tag = 'smem constant byte address 0x4 - core index']
  #allocation1 [shape = 'u32[144,128]{1,0:T(1,128)}', space=vmem, size = 0x12000, scoped, tag = 'internal scratch']
  #allocation2 [shape = 'f32[32,32]{1,0:T(8,128)}', space=vmem, size = 0x4000, scoped, tag = 'scratch operand']
  %s0 = inlined_call_operand.vmem [shape: f32[32,128], index: 0, kind: input, shape index: {}]
  %s1 = inlined_call_operand.vmem [shape: bf16[128,32], index: 1, kind: input, shape index: {}]
  %s2 = inlined_call_operand.vmem [shape: f32[1,32], index: 2, kind: input, shape index: {}]
  %s3 = inlined_call_operand.vmem [shape: f32[32,32], index: 3, kind: input, shape index: {}]
  %s4 = inlined_call_operand.vmem [shape: f32[32,32], index: 4, kind: output, shape index: {}]
  %s5 = sld [smem:[#allocation0]]
  $region34: #{_lambda_.40} parent=0
    _
  %s7 = ssub.s32 1, %s5
  %s8 = scalar_select 0, %s7, %s5
  // Predicated region
  $region2: #{_lambda_.40} parent=0 // pred_check
    _
  $region3: #{_lambda_.40} parent=0 // pred_check_branch
    %10 = sbr.rel (0) target = $region5
  $region4: #{_lambda_.40} parent=0 // pred_region
    _
  $region5: #{_lambda_.40} parent=0 // pred_fallthru
    _
  // Predicated region
  $region6: #{_lambda_.40} parent=0 // pred_check
    _
  $region7: #{_lambda_.40} parent=0 // pred_check_branch
    %12 = sbr.rel (0) target = $region9
  $region8: #{_lambda_.40} parent=0 // pred_region
    _
  $region9: #{_lambda_.40} parent=0 // pred_fallthru
    _
  // Predicated region
  $region10: #{_lambda_.40} parent=0 // pred_check
    _
  $region11: #{_lambda_.40} parent=0 // pred_check_branch
    %14 = sbr.rel (0) target = $region13
  $region12: #{_lambda_.40} parent=0 // pred_region
    _
  $region13: #{_lambda_.40} parent=0 // pred_fallthru
    _
  // Predicated region
  $region14: #{_lambda_.40} parent=0 // pred_check
    _
  $region15: #{_lambda_.40} parent=0 // pred_check_branch
    %16 = sbr.rel (0) target = $region17
  $region16: #{_lambda_.40} parent=0 // pred_region
    _
  $region17: #{_lambda_.40} parent=0 // pred_fallthru
    _
  %p18 = scmp.eq.s32.totalorder 0, 0
  // Predicated region
  $region18: #{_lambda_.40} parent=0 // pred_check
    %p19 = pneg %p18
  $region19: #{_lambda_.40} parent=0 // pred_check_branch
    %21 = sbr.rel (%p19) target = $region21
  $region20: #{_lambda_.40} parent=0 // pred_region
    %vm22 = vcmask 261120
    %23 = vst.msk [vmem:[#allocation2] sm:$0xff] %vm22, 0.0
    %24 = vst.msk [vmem:[#allocation2 + $0x8] sm:$0xff] %vm22, 0.0
    %25 = vst.msk [vmem:[#allocation2 + $0x10] sm:$0xff] %vm22, 0.0
    %26 = vst.msk [vmem:[#allocation2 + $0x18] sm:$0xff] %vm22, 0.0
  $region21: #{_lambda_.40} parent=0 // pred_fallthru
    _
  %v27 = vld [vmem:[#allocation2] sm:$0xff]
  %v28 = vld [vmem:[#allocation2 + $0x8] sm:$0xff]
  %v29 = vld [vmem:[#allocation2 + $0x10] sm:$0xff]
  %v30 = vld [vmem:[#allocation2 + $0x18] sm:$0xff]
  %v31 = vld [vmem:[%s0] sm:$0xff]
  %v32 = vld [vmem:[%s0 + $0x8] sm:$0xff]
  %v33 = vld [vmem:[%s0 + $0x10] sm:$0xff]
  %v34 = vld [vmem:[%s0 + $0x18] sm:$0xff]
  %v35 = vpack.c.bf16 %v32, %v31
  %v36 = vpack.c.bf16 %v34, %v33
  %v37 = vld [vmem:[%s1] sm:$0xf]
  %v38 = vld [vmem:[%s1 + $0x4] sm:$0xf]
  %v39 = vld [vmem:[%s1 + $0x8] sm:$0xf]
  %v40 = vld [vmem:[%s1 + $0xc] sm:$0xf]
  %v41 = vld [vmem:[%s1 + $0x10] sm:$0xf]
  %v42 = vld [vmem:[%s1 + $0x14] sm:$0xf]
  %v43 = vld [vmem:[%s1 + $0x18] sm:$0xf]
  %v44 = vld [vmem:[%s1 + $0x1c] sm:$0xf]
  %v45 = vld [vmem:[%s1 + $0x20] sm:$0xf]
  %v46 = vld [vmem:[%s1 + $0x24] sm:$0xf]
  %v47 = vld [vmem:[%s1 + $0x28] sm:$0xf]
  %v48 = vld [vmem:[%s1 + $0x2c] sm:$0xf]
  %v49 = vld [vmem:[%s1 + $0x30] sm:$0xf]
  %v50 = vld [vmem:[%s1 + $0x34] sm:$0xf]
  %v51 = vld [vmem:[%s1 + $0x38] sm:$0xf]
  %v52 = vld [vmem:[%s1 + $0x3c] sm:$0xf]
  %v69 = vunpack.c.l.b16 %v37
  %v70 = vunpack.c.l.b16 %v38
  %v71 = vunpack.c.l.b16 %v39
  %v72 = vunpack.c.l.b16 %v40
  %v73 = vunpack.c.l.b16 %v41
  %v74 = vunpack.c.l.b16 %v42
  %v75 = vunpack.c.l.b16 %v43
  %v76 = vunpack.c.l.b16 %v44
  %v77 = vunpack.c.l.b16 %v45
  %v78 = vunpack.c.l.b16 %v46
  %v79 = vunpack.c.l.b16 %v47
  %v80 = vunpack.c.l.b16 %v48
  %v81 = vunpack.c.l.b16 %v49
  %v82 = vunpack.c.l.b16 %v50
  %v83 = vunpack.c.l.b16 %v51
  %v84 = vunpack.c.l.b16 %v52
  %v85 = vpack.c.b16 %v70, %v69
  %v86 = vpack.c.b16 %v72, %v71
  %v87 = vpack.c.b16 %v74, %v73
  %v88 = vpack.c.b16 %v76, %v75
  %v89 = vpack.c.b16 %v78, %v77
  %v90 = vpack.c.b16 %v80, %v79
  %v91 = vpack.c.b16 %v82, %v81
  %v92 = vpack.c.b16 %v84, %v83
  %101 = vmatprep.subr.bf16.mxu0 0
  %102 = vmatpush1.bf16.msra.mxu0 %v85
  %103 = vmatprep.subr.bf16.mxu0 0
  %104 = vmatpush1.bf16.msra.mxu0 %v86
  %105 = vmatprep.subr.bf16.mxu0 0
  %106 = vmatpush1.bf16.msra.mxu0 %v87
  %107 = vmatprep.subr.bf16.mxu0 0
  %108 = vmatpush1.bf16.msra.mxu0 %v88
  %109 = vmatprep.subr.bf16.mxu0 0
  %110 = vmatpush1.bf16.msra.mxu0 %v89
  %111 = vmatprep.subr.bf16.mxu0 0
  %112 = vmatpush1.bf16.msra.mxu0 %v90
  %113 = vmatprep.subr.bf16.mxu0 0
  %114 = vmatpush1.bf16.msra.mxu0 %v91
  %115 = vmatprep.subr.bf16.mxu0 0
  %116 = vmatpush1.bf16.msra.mxu0 %v92
  %117 = vmatprep.subr.bf16.mxu0 0
  %118 = vmatpush1.bf16.msra.mxu0 0
  %119 = vmatprep.subr.bf16.mxu0 0
  %120 = vmatpush1.bf16.msra.mxu0 0
  %121 = vmatprep.subr.bf16.mxu0 0
  %122 = vmatpush1.bf16.msra.mxu0 0
  %123 = vmatprep.subr.bf16.mxu0 0
  %124 = vmatpush1.bf16.msra.mxu0 0
  %125 = vmatprep.subr.bf16.mxu0 0
  %126 = vmatpush1.bf16.msra.mxu0 0
  %127 = vmatprep.subr.bf16.mxu0 0
  %128 = vmatpush1.bf16.msra.mxu0 0
  %129 = vmatprep.subr.bf16.mxu0 0
  %130 = vmatpush1.bf16.msra.mxu0 0
  %131 = vmatprep.subr.bf16.mxu0 0
  %132 = vmatpush1.bf16.msra.mxu0 0
  %133 = vmatprep.mubr.bf16.mxu0 0
  %134 = vmatmul.mubr.bf16.gmra.mrb[0].mxu0 %v35
  %v135 = vpop.f32.mrb[0].mxu0
  %v136 = vadd.f32 0.0, %v135
  %v137 = vpop.f32.mrb[0].mxu0
  %v138 = vpop.f32.mrb[0].mxu0
  %v139 = vadd.f32 0.0, %v138
  %v140 = vpop.f32.mrb[0].mxu0
  %141 = vmatprep.mubr.bf16.mxu0 0
  %142 = vmatmul.mubr.bf16.gmra.mrb[0].mxu0 %v36
  %v143 = vpop.f32.mrb[0].mxu0
  %v144 = vadd.f32 0.0, %v143
  %v145 = vpop.f32.mrb[0].mxu0
  %v146 = vpop.f32.mrb[0].mxu0
  %v147 = vadd.f32 0.0, %v146
  %v148 = vpop.f32.mrb[0].mxu0
  %149 = vdwg.mxu0
  %v150 = vadd.f32 %v27, %v136
  %v151 = vadd.f32 %v28, %v139
  %v152 = vadd.f32 %v29, %v144
  %v153 = vadd.f32 %v30, %v147
  %vm154 = vcmask 261120
  %155 = vst.msk [vmem:[#allocation2] sm:$0xff] %vm154, %v150
  %156 = vst.msk [vmem:[#allocation2 + $0x8] sm:$0xff] %vm154, %v151
  %157 = vst.msk [vmem:[#allocation2 + $0x10] sm:$0xff] %vm154, %v152
  %158 = vst.msk [vmem:[#allocation2 + $0x18] sm:$0xff] %vm154, %v153
  // Predicated region
  $region22: #{_lambda_.40} parent=0 // pred_check
    %p159 = pneg %p18
  $region23: #{_lambda_.40} parent=0 // pred_check_branch
    %161 = sbr.rel (%p159) target = $region25
  $region24: #{_lambda_.40} parent=0 // pred_region
    %v162 = vld [vmem:[#allocation2] sm:$0xff]
    %v163 = vld [vmem:[#allocation2 + $0x8] sm:$0xff]
    %v164 = vld [vmem:[#allocation2 + $0x10] sm:$0xff]
    %v165 = vld [vmem:[#allocation2 + $0x18] sm:$0xff]
    %v166 = vld [vmem:[%s2] sm:$0x1]
    %v168 = vlaneseq
    %v169 = vshrl.u32 %v168, 7
    %v170 = vsub.s32 0, %v169
    %v171 = vrot.slane %v166, %v170
    %v173 = vadd.f32 %v162, %v171
    %v174 = vadd.f32 %v163, %v171
    %v175 = vadd.f32 %v164, %v171
    %v176 = vadd.f32 %v165, %v171
    %v177 = vld [vmem:[%s3] sm:$0xff]
    %v178 = vld [vmem:[%s3 + $0x8] sm:$0xff]
    %v179 = vld [vmem:[%s3 + $0x10] sm:$0xff]
    %v180 = vld [vmem:[%s3 + $0x18] sm:$0xff]
    %v181 = vadd.f32 %v173, %v177
    %v182 = vadd.f32 %v174, %v178
    %v183 = vadd.f32 %v175, %v179
    %v184 = vadd.f32 %v176, %v180
    %185 = vst.msk [vmem:[%s4] sm:$0xff] %vm154, %v181
    %186 = vst.msk [vmem:[%s4 + $0x8] sm:$0xff] %vm154, %v182
    %187 = vst.msk [vmem:[%s4 + $0x10] sm:$0xff] %vm154, %v183
    %188 = vst.msk [vmem:[%s4 + $0x18] sm:$0xff] %vm154, %v184
  $region25: #{_lambda_.40} parent=0 // pred_fallthru
    _
  // Predicated region
  $region26: #{_lambda_.40} parent=0 // pred_check
    _
  $region27: #{_lambda_.40} parent=0 // pred_check_branch
    %190 = sbr.rel (0) target = $region29
  $region28: #{_lambda_.40} parent=0 // pred_region
    _
  $region29: #{_lambda_.40} parent=0 // pred_fallthru
    _
  // Predicated region
  $region30: #{_lambda_.40} parent=0 // pred_check
    _
  $region31: #{_lambda_.40} parent=0 // pred_check_branch
    %192 = sbr.rel (0) target = $region33
  $region32: #{_lambda_.40} parent=0 // pred_region
    _
  $region33: #{_lambda_.40} parent=0 // pred_fallthru
    _

// kernel: _lambda_.42
$region0: #{_lambda_.42}
  #allocation0 [shape = 'u32[]', space=smem, size = 0x4, offset = 0x4, fixed_abs, tag = 'smem constant byte address 0x4 - core index']
  #allocation1 [shape = 'u32[144,128]{1,0:T(1,128)}', space=vmem, size = 0x12000, scoped, tag = 'internal scratch']
  #allocation2 [shape = 'f32[32,96]{1,0:T(8,128)}', space=vmem, size = 0x4000, scoped, tag = 'scratch operand']
  %s0 = inlined_call_operand.vmem [shape: f32[32,32], index: 0, kind: input, shape index: {}]
  %s1 = inlined_call_operand.vmem [shape: bf16[32,96], index: 1, kind: input, shape index: {}]
  %s2 = inlined_call_operand.hbm [shape: f32[1,96], index: 2, kind: input, shape index: {}]
  %s3 = inlined_call_operand.vmem [shape: f32[32,96], index: 3, kind: output, shape index: {}]
  %s4 = sld [smem:[#allocation0]]
  $region34: #{_lambda_.42} parent=0
    _
  %s6 = ssub.s32 1, %s4
  %s7 = scalar_select 0, %s6, %s4
  $region1: #{_lambda_.42} parent=0
    #allocation3 [shape = 'u8[512]{0}', space=vmem, size = 0x400, scoped, tag = 'input window, operand 2, single buffered']
    #allocation4 [shape = 's32[1]{0}', space=sflag, size = 0x4, scoped, tag = 'scoped memory for _lambda_.42']
    %8 = vsyncpa [#allocation4], 0
    // Predicated region
    $region2: #{_lambda_.42} parent=1 // pred_check
      _
    $region3: #{_lambda_.42} parent=1 // pred_check_branch
      %10 = sbr.rel (0) target = $region5
    $region4: #{_lambda_.42} parent=1 // pred_region
      _
    $region5: #{_lambda_.42} parent=1 // pred_fallthru
      _
    // Predicated region
    $region6: #{_lambda_.42} parent=1 // pred_check
      _
    $region7: #{_lambda_.42} parent=1 // pred_check_branch
      %12 = sbr.rel (0) target = $region9
    $region8: #{_lambda_.42} parent=1 // pred_region
      _
    $region9: #{_lambda_.42} parent=1 // pred_fallthru
      _
    // Predicated region
    $region10: #{_lambda_.42} parent=1 // pred_check
      _
    $region11: #{_lambda_.42} parent=1 // pred_check_branch
      %14 = sbr.rel (0) target = $region13
    $region12: #{_lambda_.42} parent=1 // pred_region
      %s16 = ssub.s32 16, 16
      %17 = vsyncadd [#allocation4], %s16
      %s19 = sshll.u32 [#allocation3], 4
      %s20 = int_to_ptr.vmem [resolvable:$true] %s19
      %22 = dma.hbm_to_vmem [thread:$0]  %s2, 16, %s20, [#allocation4]
    $region13: #{_lambda_.42} parent=1 // pred_fallthru
      _
    // Predicated region
    $region14: #{_lambda_.42} parent=1 // pred_check
      _
    $region15: #{_lambda_.42} parent=1 // pred_check_branch
      %24 = sbr.rel (0) target = $region17
    $region16: #{_lambda_.42} parent=1 // pred_region
      %25 = dma.done [#allocation4], 16
    $region17: #{_lambda_.42} parent=1 // pred_fallthru
      _
    %p27 = scmp.eq.s32.totalorder 0, 0
    // Predicated region
    $region18: #{_lambda_.42} parent=1 // pred_check
      %p28 = pneg %p27
    $region19: #{_lambda_.42} parent=1 // pred_check_branch
      %30 = sbr.rel (%p28) target = $region21
    $region20: #{_lambda_.42} parent=1 // pred_region
      %vm31 = vcmask 785408
      %32 = vst.msk [vmem:[#allocation2] sm:$0xff] %vm31, 0.0
      %33 = vst.msk [vmem:[#allocation2 + $0x8] sm:$0xff] %vm31, 0.0
      %34 = vst.msk [vmem:[#allocation2 + $0x10] sm:$0xff] %vm31, 0.0
      %35 = vst.msk [vmem:[#allocation2 + $0x18] sm:$0xff] %vm31, 0.0
    $region21: #{_lambda_.42} parent=1 // pred_fallthru
      _
    %v36 = vld [vmem:[#allocation2] sm:$0xff]
    %v37 = vld [vmem:[#allocation2 + $0x8] sm:$0xff]
    %v38 = vld [vmem:[#allocation2 + $0x10] sm:$0xff]
    %v39 = vld [vmem:[#allocation2 + $0x18] sm:$0xff]
    %v40 = vld [vmem:[%s0] sm:$0xff]
    %v41 = vld [vmem:[%s0 + $0x8] sm:$0xff]
    %v42 = vld [vmem:[%s0 + $0x10] sm:$0xff]
    %v43 = vld [vmem:[%s0 + $0x18] sm:$0xff]
    %v44 = vpack.c.bf16 %v41, %v40
    %v45 = vpack.c.bf16 %v43, %v42
    %v46 = vld [vmem:[%s1] sm:$0xf]
    %v47 = vld [vmem:[%s1 + $0x4] sm:$0xf]
    %v48 = vld [vmem:[%s1 + $0x8] sm:$0xf]
    %v49 = vld [vmem:[%s1 + $0xc] sm:$0xf]
    %v54 = vunpack.c.l.b16 %v46
    %v55 = vunpack.c.l.b16 %v47
    %v56 = vunpack.c.l.b16 %v48
    %v57 = vunpack.c.l.b16 %v49
    %v58 = vpack.c.b16 %v55, %v54
    %v59 = vpack.c.b16 %v57, %v56
    %vm62 = vcmask 261120
    %v64 = vsel %vm62, %v44, 0
    %v67 = vsel %vm62, %v45, 0
    %69 = vmatprep.subr.bf16.mxu0 0
    %70 = vmatpush1.bf16.msra.mxu0 %v58
    %71 = vmatprep.subr.bf16.mxu0 0
    %72 = vmatpush1.bf16.msra.mxu0 %v59
    %73 = vmatprep.subr.bf16.mxu0 0
    %74 = vmatpush1.bf16.msra.mxu0 0
    %75 = vmatprep.subr.bf16.mxu0 0
    %76 = vmatpush1.bf16.msra.mxu0 0
    %77 = vmatprep.subr.bf16.mxu0 0
    %78 = vmatpush1.bf16.msra.mxu0 0
    %79 = vmatprep.subr.bf16.mxu0 0
    %80 = vmatpush1.bf16.msra.mxu0 0
    %81 = vmatprep.subr.bf16.mxu0 0
    %82 = vmatpush1.bf16.msra.mxu0 0
    %83 = vmatprep.subr.bf16.mxu0 0
    %84 = vmatpush1.bf16.msra.mxu0 0
    %85 = vmatprep.subr.bf16.mxu0 0
    %86 = vmatpush1.bf16.msra.mxu0 0
    %87 = vmatprep.subr.bf16.mxu0 0
    %88 = vmatpush1.bf16.msra.mxu0 0
    %89 = vmatprep.subr.bf16.mxu0 0
    %90 = vmatpush1.bf16.msra.mxu0 0
    %91 = vmatprep.subr.bf16.mxu0 0
    %92 = vmatpush1.bf16.msra.mxu0 0
    %93 = vmatprep.subr.bf16.mxu0 0
    %94 = vmatpush1.bf16.msra.mxu0 0
    %95 = vmatprep.subr.bf16.mxu0 0
    %96 = vmatpush1.bf16.msra.mxu0 0
    %97 = vmatprep.subr.bf16.mxu0 0
    %98 = vmatpush1.bf16.msra.mxu0 0
    %99 = vmatprep.subr.bf16.mxu0 0
    %100 = vmatpush1.bf16.msra.mxu0 0
    %101 = vmatprep.mubr.bf16.mxu0 0
    %102 = vmatmul.mubr.bf16.gmra.mrb[0].mxu0 %v64
    %v103 = vpop.f32.mrb[0].mxu0
    %v104 = vadd.f32 0.0, %v103
    %v105 = vpop.f32.mrb[0].mxu0
    %v106 = vpop.f32.mrb[0].mxu0
    %v107 = vadd.f32 0.0, %v106
    %v108 = vpop.f32.mrb[0].mxu0
    %109 = vmatprep.mubr.bf16.mxu0 0
    %110 = vmatmul.mubr.bf16.gmra.mrb[0].mxu0 %v67
    %v111 = vpop.f32.mrb[0].mxu0
    %v112 = vadd.f32 0.0, %v111
    %v113 = vpop.f32.mrb[0].mxu0
    %v114 = vpop.f32.mrb[0].mxu0
    %v115 = vadd.f32 0.0, %v114
    %v116 = vpop.f32.mrb[0].mxu0
    %117 = vdwg.mxu0
    %v118 = vadd.f32 %v36, %v104
    %v119 = vadd.f32 %v37, %v107
    %v120 = vadd.f32 %v38, %v112
    %v121 = vadd.f32 %v39, %v115
    %vm122 = vcmask 785408
    %123 = vst.msk [vmem:[#allocation2] sm:$0xff] %vm122, %v118
    %124 = vst.msk [vmem:[#allocation2 + $0x8] sm:$0xff] %vm122, %v119
    %125 = vst.msk [vmem:[#allocation2 + $0x10] sm:$0xff] %vm122, %v120
    %126 = vst.msk [vmem:[#allocation2 + $0x18] sm:$0xff] %vm122, %v121
    // Predicated region
    $region22: #{_lambda_.42} parent=1 // pred_check
      %p127 = pneg %p27
    $region23: #{_lambda_.42} parent=1 // pred_check_branch
      %129 = sbr.rel (%p127) target = $region25
    $region24: #{_lambda_.42} parent=1 // pred_region
      %v130 = vld [vmem:[#allocation2] sm:$0xff]
      %v131 = vld [vmem:[#allocation2 + $0x8] sm:$0xff]
      %v132 = vld [vmem:[#allocation2 + $0x10] sm:$0xff]
      %v133 = vld [vmem:[#allocation2 + $0x18] sm:$0xff]
      %v134 = vld [vmem:[#allocation3] sm:$0x1]
      %v136 = vlaneseq
      %v137 = vshrl.u32 %v136, 7
      %v138 = vsub.s32 0, %v137
      %v139 = vrot.slane %v134, %v138
      %v141 = vadd.f32 %v130, %v139
      %v142 = vadd.f32 %v131, %v139
      %v143 = vadd.f32 %v132, %v139
      %v144 = vadd.f32 %v133, %v139
      %145 = vst.msk [vmem:[%s3] sm:$0xff] %vm122, %v141
      %146 = vst.msk [vmem:[%s3 + $0x8] sm:$0xff] %vm122, %v142
      %147 = vst.msk [vmem:[%s3 + $0x10] sm:$0xff] %vm122, %v143
      %148 = vst.msk [vmem:[%s3 + $0x18] sm:$0xff] %vm122, %v144
    $region25: #{_lambda_.42} parent=1 // pred_fallthru
      _
    // Predicated region
    $region26: #{_lambda_.42} parent=1 // pred_check
      _
    $region27: #{_lambda_.42} parent=1 // pred_check_branch
      %150 = sbr.rel (0) target = $region29
    $region28: #{_lambda_.42} parent=1 // pred_region
      _
    $region29: #{_lambda_.42} parent=1 // pred_fallthru
      _
    // Predicated region
    $region30: #{_lambda_.42} parent=1 // pred_check
      _
    $region31: #{_lambda_.42} parent=1 // pred_check_branch
      %152 = sbr.rel (0) target = $region33
    $region32: #{_lambda_.42} parent=1 // pred_region
      _
    $region33: #{_lambda_.42} parent=1 // pred_fallthru
      _
    %153 = vsyncpa [#allocation4], 1

// kernel: _lambda_.53
$region0: #{_lambda_.53}
  #allocation0 [shape = 'u32[]', space=smem, size = 0x4, offset = 0x4, fixed_abs, tag = 'smem constant byte address 0x4 - core index']
  #allocation1 [shape = 'u32[144,128]{1,0:T(1,128)}', space=vmem, size = 0x12000, scoped, tag = 'internal scratch']
  #allocation2 [shape = 'f32[32,128]{1,0:T(8,128)}', space=vmem, size = 0x4000, scoped, tag = 'scratch operand']
  %s0 = inlined_call_operand.vmem [shape: f32[32,32], index: 0, kind: input, shape index: {}]
  %s1 = inlined_call_operand.vmem [shape: bf16[32,128], index: 1, kind: input, shape index: {}]
  %s2 = inlined_call_operand.vmem [shape: f32[1,128], index: 2, kind: input, shape index: {}]
  %s3 = inlined_call_operand.vmem [shape: f32[32,128], index: 3, kind: output, shape index: {}]
  %s4 = sld [smem:[#allocation0]]
  $region30: #{_lambda_.53} parent=0
    _
  %s6 = ssub.s32 1, %s4
  %s7 = scalar_select 0, %s6, %s4
  // Predicated region
  $region2: #{_lambda_.53} parent=0 // pred_check
    _
  $region3: #{_lambda_.53} parent=0 // pred_check_branch
    %9 = sbr.rel (0) target = $region5
  $region4: #{_lambda_.53} parent=0 // pred_region
    _
  $region5: #{_lambda_.53} parent=0 // pred_fallthru
    _
  // Predicated region
  $region6: #{_lambda_.53} parent=0 // pred_check
    _
  $region7: #{_lambda_.53} parent=0 // pred_check_branch
    %11 = sbr.rel (0) target = $region9
  $region8: #{_lambda_.53} parent=0 // pred_region
    _
  $region9: #{_lambda_.53} parent=0 // pred_fallthru
    _
  // Predicated region
  $region10: #{_lambda_.53} parent=0 // pred_check
    _
  $region11: #{_lambda_.53} parent=0 // pred_check_branch
    %13 = sbr.rel (0) target = $region13
  $region12: #{_lambda_.53} parent=0 // pred_region
    _
  $region13: #{_lambda_.53} parent=0 // pred_fallthru
    _
  %p15 = scmp.eq.s32.totalorder 0, 0
  // Predicated region
  $region14: #{_lambda_.53} parent=0 // pred_check
    %p16 = pneg %p15
  $region15: #{_lambda_.53} parent=0 // pred_check_branch
    %18 = sbr.rel (%p16) target = $region17
  $region16: #{_lambda_.53} parent=0 // pred_region
    %19 = vst [vmem:[#allocation2] sm:$0xff] 0.0
    %20 = vst [vmem:[#allocation2 + $0x8] sm:$0xff] 0.0
    %21 = vst [vmem:[#allocation2 + $0x10] sm:$0xff] 0.0
    %22 = vst [vmem:[#allocation2 + $0x18] sm:$0xff] 0.0
  $region17: #{_lambda_.53} parent=0 // pred_fallthru
    _
  %v23 = vld [vmem:[#allocation2] sm:$0xff]
  %v24 = vld [vmem:[#allocation2 + $0x8] sm:$0xff]
  %v25 = vld [vmem:[#allocation2 + $0x10] sm:$0xff]
  %v26 = vld [vmem:[#allocation2 + $0x18] sm:$0xff]
  %v27 = vld [vmem:[%s0] sm:$0xff]
  %v28 = vld [vmem:[%s0 + $0x8] sm:$0xff]
  %v29 = vld [vmem:[%s0 + $0x10] sm:$0xff]
  %v30 = vld [vmem:[%s0 + $0x18] sm:$0xff]
  %v31 = vpack.c.bf16 %v28, %v27
  %v32 = vpack.c.bf16 %v30, %v29
  %v33 = vld [vmem:[%s1] sm:$0xf]
  %v34 = vld [vmem:[%s1 + $0x4] sm:$0xf]
  %v35 = vld [vmem:[%s1 + $0x8] sm:$0xf]
  %v36 = vld [vmem:[%s1 + $0xc] sm:$0xf]
  %v41 = vunpack.c.l.b16 %v33
  %v42 = vunpack.c.l.b16 %v34
  %v43 = vunpack.c.l.b16 %v35
  %v44 = vunpack.c.l.b16 %v36
  %v45 = vpack.c.b16 %v42, %v41
  %v46 = vpack.c.b16 %v44, %v43
  %vm49 = vcmask 261120
  %v51 = vsel %vm49, %v31, 0
  %v54 = vsel %vm49, %v32, 0
  %56 = vmatprep.subr.bf16.mxu0 0
  %57 = vmatpush1.bf16.msra.mxu0 %v45
  %58 = vmatprep.subr.bf16.mxu0 0
  %59 = vmatpush1.bf16.msra.mxu0 %v46
  %60 = vmatprep.subr.bf16.mxu0 0
  %61 = vmatpush1.bf16.msra.mxu0 0
  %62 = vmatprep.subr.bf16.mxu0 0
  %63 = vmatpush1.bf16.msra.mxu0 0
  %64 = vmatprep.subr.bf16.mxu0 0
  %65 = vmatpush1.bf16.msra.mxu0 0
  %66 = vmatprep.subr.bf16.mxu0 0
  %67 = vmatpush1.bf16.msra.mxu0 0
  %68 = vmatprep.subr.bf16.mxu0 0
  %69 = vmatpush1.bf16.msra.mxu0 0
  %70 = vmatprep.subr.bf16.mxu0 0
  %71 = vmatpush1.bf16.msra.mxu0 0
  %72 = vmatprep.subr.bf16.mxu0 0
  %73 = vmatpush1.bf16.msra.mxu0 0
  %74 = vmatprep.subr.bf16.mxu0 0
  %75 = vmatpush1.bf16.msra.mxu0 0
  %76 = vmatprep.subr.bf16.mxu0 0
  %77 = vmatpush1.bf16.msra.mxu0 0
  %78 = vmatprep.subr.bf16.mxu0 0
  %79 = vmatpush1.bf16.msra.mxu0 0
  %80 = vmatprep.subr.bf16.mxu0 0
  %81 = vmatpush1.bf16.msra.mxu0 0
  %82 = vmatprep.subr.bf16.mxu0 0
  %83 = vmatpush1.bf16.msra.mxu0 0
  %84 = vmatprep.subr.bf16.mxu0 0
  %85 = vmatpush1.bf16.msra.mxu0 0
  %86 = vmatprep.subr.bf16.mxu0 0
  %87 = vmatpush1.bf16.msra.mxu0 0
  %88 = vmatprep.mubr.bf16.mxu0 0
  %89 = vmatmul.mubr.bf16.gmra.mrb[0].mxu0 %v51
  %v90 = vpop.f32.mrb[0].mxu0
  %v91 = vadd.f32 0.0, %v90
  %v92 = vpop.f32.mrb[0].mxu0
  %v93 = vpop.f32.mrb[0].mxu0
  %v94 = vadd.f32 0.0, %v93
  %v95 = vpop.f32.mrb[0].mxu0
  %96 = vmatprep.mubr.bf16.mxu0 0
  %97 = vmatmul.mubr.bf16.gmra.mrb[0].mxu0 %v54
  %v98 = vpop.f32.mrb[0].mxu0
  %v99 = vadd.f32 0.0, %v98
  %v100 = vpop.f32.mrb[0].mxu0
  %v101 = vpop.f32.mrb[0].mxu0
  %v102 = vadd.f32 0.0, %v101
  %v103 = vpop.f32.mrb[0].mxu0
  %104 = vdwg.mxu0
  %v105 = vadd.f32 %v23, %v91
  %v106 = vadd.f32 %v24, %v94
  %v107 = vadd.f32 %v25, %v99
  %v108 = vadd.f32 %v26, %v102
  %109 = vst [vmem:[#allocation2] sm:$0xff] %v105
  %110 = vst [vmem:[#allocation2 + $0x8] sm:$0xff] %v106
  %111 = vst [vmem:[#allocation2 + $0x10] sm:$0xff] %v107
  %112 = vst [vmem:[#allocation2 + $0x18] sm:$0xff] %v108
  // Predicated region
  $region18: #{_lambda_.53} parent=0 // pred_check
    %p113 = pneg %p15
  $region19: #{_lambda_.53} parent=0 // pred_check_branch
    %115 = sbr.rel (%p113) target = $region21
  $region20: #{_lambda_.53} parent=0 // pred_region
    %v116 = vld [vmem:[#allocation2] sm:$0xff]
    %v117 = vld [vmem:[#allocation2 + $0x8] sm:$0xff]
    %v118 = vld [vmem:[#allocation2 + $0x10] sm:$0xff]
    %v119 = vld [vmem:[#allocation2 + $0x18] sm:$0xff]
    %v120 = vld [vmem:[%s2] sm:$0x1]
    %v122 = vlaneseq
    %v123 = vshrl.u32 %v122, 7
    %v124 = vsub.s32 0, %v123
    %v125 = vrot.slane %v120, %v124
    %v127 = vadd.f32 %v116, %v125
    %v128 = vadd.f32 %v117, %v125
    %v129 = vadd.f32 %v118, %v125
    %v130 = vadd.f32 %v119, %v125
    %v131 = vmul.f32 %v127, 0.5
    %v132 = vmul.f32 %v128, 0.5
    %v133 = vmul.f32 %v129, 0.5
    %v134 = vmul.f32 %v130, 0.5
    %v135 = vmul.f32 %v127, 0.044715
    %v136 = vmul.f32 %v128, 0.044715
    %v137 = vmul.f32 %v129, 0.044715
    %v138 = vmul.f32 %v130, 0.044715
    %v139 = vmul.f32 %v135, %v127
    %v140 = vmul.f32 %v136, %v128
    %v141 = vmul.f32 %v137, %v129
    %v142 = vmul.f32 %v138, %v130
    %v143 = vmul.f32 %v139, %v127
    %v144 = vmul.f32 %v140, %v128
    %v145 = vmul.f32 %v141, %v129
    %v146 = vmul.f32 %v142, %v130
    %v147 = vadd.f32 %v127, %v143
    %v148 = vadd.f32 %v128, %v144
    %v149 = vadd.f32 %v129, %v145
    %v150 = vadd.f32 %v130, %v146
    %v151 = vmul.f32 %v147, 0.7978846
    %v152 = vmul.f32 %v148, 0.7978846
    %v153 = vmul.f32 %v149, 0.7978846
    %v154 = vmul.f32 %v150, 0.7978846
    %v155 = vtanh.pop %v151
    %v156 = vtanh.pop %v152
    %v157 = vtanh.pop %v153
    %v158 = vtanh.pop %v154
    %v159 = vadd.f32 %v155, 1.0
    %v160 = vadd.f32 %v156, 1.0
    %v161 = vadd.f32 %v157, 1.0
    %v162 = vadd.f32 %v158, 1.0
    %v163 = vmul.f32 %v131, %v159
    %v164 = vmul.f32 %v132, %v160
    %v165 = vmul.f32 %v133, %v161
    %v166 = vmul.f32 %v134, %v162
    %167 = vst [vmem:[%s3] sm:$0xff] %v163
    %168 = vst [vmem:[%s3 + $0x8] sm:$0xff] %v164
    %169 = vst [vmem:[%s3 + $0x10] sm:$0xff] %v165
    %170 = vst [vmem:[%s3 + $0x18] sm:$0xff] %v166
  $region21: #{_lambda_.53} parent=0 // pred_fallthru
    _
  // Predicated region
  $region22: #{_lambda_.53} parent=0 // pred_check
    _
  $region23: #{_lambda_.53} parent=0 // pred_check_branch
    %172 = sbr.rel (0) target = $region25
  $region24: #{_lambda_.53} parent=0 // pred_region
    _
  $region25: #{_lambda_.53} parent=0 // pred_fallthru
    _
  // Predicated region
  $region26: #{_lambda_.53} parent=0 // pred_check
    _
  $region27: #{_lambda_.53} parent=0 // pred_check_branch
    %174 = sbr.rel (0) target = $region29
  $region28: #{_lambda_.53} parent=0 // pred_region
    _
  $region29: #{_lambda_.53} parent=0 // pred_fallthru
    _

// kernel: _lambda_.63
$region0: #{_lambda_.63}
  #allocation0 [shape = 'u32[]', space=smem, size = 0x4, offset = 0x4, fixed_abs, tag = 'smem constant byte address 0x4 - core index']
  #allocation1 [shape = 'u32[144,128]{1,0:T(1,128)}', space=vmem, size = 0x12000, scoped, tag = 'internal scratch']
  %s0 = inlined_call_operand.vmem [shape: f32[32,32], index: 0, kind: input, shape index: {}]
  %s1 = inlined_call_operand.vmem [shape: f32[1,32], index: 1, kind: input, shape index: {}]
  %s2 = inlined_call_operand.vmem [shape: f32[1,32], index: 2, kind: input, shape index: {}]
  %s3 = inlined_call_operand.vmem [shape: f32[32,32], index: 3, kind: output, shape index: {}]
  %s4 = sld [smem:[#allocation0]]
  $region22: #{_lambda_.63} parent=0
    _
  %s6 = ssub.s32 1, %s4
  %s7 = scalar_select 0, %s6, %s4
  // Predicated region
  $region2: #{_lambda_.63} parent=0 // pred_check
    _
  $region3: #{_lambda_.63} parent=0 // pred_check_branch
    %9 = sbr.rel (0) target = $region5
  $region4: #{_lambda_.63} parent=0 // pred_region
    _
  $region5: #{_lambda_.63} parent=0 // pred_fallthru
    _
  // Predicated region
  $region6: #{_lambda_.63} parent=0 // pred_check
    _
  $region7: #{_lambda_.63} parent=0 // pred_check_branch
    %11 = sbr.rel (0) target = $region9
  $region8: #{_lambda_.63} parent=0 // pred_region
    _
  $region9: #{_lambda_.63} parent=0 // pred_fallthru
    _
  // Predicated region
  $region10: #{_lambda_.63} parent=0 // pred_check
    _
  $region11: #{_lambda_.63} parent=0 // pred_check_branch
    %13 = sbr.rel (0) target = $region13
  $region12: #{_lambda_.63} parent=0 // pred_region
    _
  $region13: #{_lambda_.63} parent=0 // pred_fallthru
    _
  %v14 = vld [vmem:[%s0] sm:$0xff]
  %v15 = vld [vmem:[%s0 + $0x8] sm:$0xff]
  %v16 = vld [vmem:[%s0 + $0x10] sm:$0xff]
  %v17 = vld [vmem:[%s0 + $0x18] sm:$0xff]
  %vm18 = vcmask 261120
  %v19 = vsel %vm18, %v14, 0.0
  %20 = vadd.xlane.f32.xlu0 %v19
  %v21 = vpop.xlane.xlu0 %20
  %v22 = vsel %vm18, %v15, 0.0
  %23 = vadd.xlane.f32.xlu0 %v22
  %v24 = vpop.xlane.xlu0 %23
  %v25 = vsel %vm18, %v16, 0.0
  %26 = vadd.xlane.f32.xlu0 %v25
  %v27 = vpop.xlane.xlu0 %26
  %v28 = vsel %vm18, %v17, 0.0
  %29 = vadd.xlane.f32.xlu0 %v28
  %v30 = vpop.xlane.xlu0 %29
  %v31 = vrcp.pop 32.0
  %v32 = vmul.f32 %v21, %v31
  %v33 = vmul.f32 %v24, %v31
  %v34 = vmul.f32 %v27, %v31
  %v35 = vmul.f32 %v30, %v31
  %v36 = vsub.f32 %v14, %v32
  %v37 = vsub.f32 %v15, %v33
  %v38 = vsub.f32 %v16, %v34
  %v39 = vsub.f32 %v17, %v35
  %v40 = vmul.f32 %v36, %v36
  %v41 = vmul.f32 %v37, %v37
  %v42 = vmul.f32 %v38, %v38
  %v43 = vmul.f32 %v39, %v39
  %v44 = vsel %vm18, %v40, 0.0
  %45 = vadd.xlane.f32.xlu0 %v44
  %v46 = vpop.xlane.xlu0 %45
  %v47 = vsel %vm18, %v41, 0.0
  %48 = vadd.xlane.f32.xlu0 %v47
  %v49 = vpop.xlane.xlu0 %48
  %v50 = vsel %vm18, %v42, 0.0
  %51 = vadd.xlane.f32.xlu0 %v50
  %v52 = vpop.xlane.xlu0 %51
  %v53 = vsel %vm18, %v43, 0.0
  %54 = vadd.xlane.f32.xlu0 %v53
  %v55 = vpop.xlane.xlu0 %54
  %v56 = vmul.f32 %v46, %v31
  %v57 = vmul.f32 %v49, %v31
  %v58 = vmul.f32 %v52, %v31
  %v59 = vmul.f32 %v55, %v31
  %v60 = vadd.f32 %v56, 1e-06
  %v61 = vadd.f32 %v57, 1e-06
  %v62 = vadd.f32 %v58, 1e-06
  %v63 = vadd.f32 %v59, 1e-06
  %v64 = vrsqrt.pop %v60
  %v65 = vrsqrt.pop %v61
  %v66 = vrsqrt.pop %v62
  %v67 = vrsqrt.pop %v63
  %v68 = vmul.f32 %v36, %v64
  %v69 = vmul.f32 %v37, %v65
  %v70 = vmul.f32 %v38, %v66
  %v71 = vmul.f32 %v39, %v67
  %v72 = vld [vmem:[%s1] sm:$0x1]
  %v74 = vlaneseq
  %v75 = vshrl.u32 %v74, 7
  %v76 = vsub.s32 0, %v75
  %v77 = vrot.slane %v72, %v76
  %v79 = vmul.f32 %v68, %v77
  %v80 = vmul.f32 %v69, %v77
  %v81 = vmul.f32 %v70, %v77
  %v82 = vmul.f32 %v71, %v77
  %v83 = vld [vmem:[%s2] sm:$0x1]
  %v85 = vlaneseq
  %v86 = vshrl.u32 %v85, 7
  %v87 = vsub.s32 0, %v86
  %v88 = vrot.slane %v83, %v87
  %v90 = vadd.f32 %v79, %v88
  %v91 = vadd.f32 %v80, %v88
  %v92 = vadd.f32 %v81, %v88
  %v93 = vadd.f32 %v82, %v88
  %94 = vst.msk [vmem:[%s3] sm:$0xff] %vm18, %v90
  %95 = vst.msk [vmem:[%s3 + $0x8] sm:$0xff] %vm18, %v91
  %96 = vst.msk [vmem:[%s3 + $0x10] sm:$0xff] %vm18, %v92
  %97 = vst.msk [vmem:[%s3 + $0x18] sm:$0xff] %vm18, %v93
  // Predicated region
  $region14: #{_lambda_.63} parent=0 // pred_check
    _
  $region15: #{_lambda_.63} parent=0 // pred_check_branch
    %99 = sbr.rel (0) target = $region17
  $region16: #{_lambda_.63} parent=0 // pred_region
    _
  $region17: #{_lambda_.63} parent=0 // pred_fallthru
    _
  // Predicated region
  $region18: #{_lambda_.63} parent=0 // pred_check
    _
  $region19: #{_lambda_.63} parent=0 // pred_check_branch
    %101 = sbr.rel (0) target = $region21
  $region20: #{_lambda_.63} parent=0 // pred_region
    _
  $region21: #{_lambda_.63} parent=0 // pred_fallthru
    _

// kernel: _lambda_.62
$region0: #{_lambda_.62}
  #allocation0 [shape = 'u32[]', space=smem, size = 0x4, offset = 0x4, fixed_abs, tag = 'smem constant byte address 0x4 - core index']
  #allocation1 [shape = 'u32[144,128]{1,0:T(1,128)}', space=vmem, size = 0x12000, scoped, tag = 'internal scratch']
  #allocation2 [shape = 'f32[32,32]{1,0:T(8,128)}', space=vmem, size = 0x4000, scoped, tag = 'scratch operand']
  %s0 = inlined_call_operand.vmem [shape: f32[32,32], index: 0, kind: input, shape index: {}]
  %s1 = inlined_call_operand.vmem [shape: bf16[32,32], index: 1, kind: input, shape index: {}]
  %s2 = inlined_call_operand.vmem [shape: f32[32,32], index: 2, kind: output, shape index: {}]
  %s3 = sld [smem:[#allocation0]]
  $region26: #{_lambda_.62} parent=0
    _
  %s5 = ssub.s32 1, %s3
  %s6 = scalar_select 0, %s5, %s3
  // Predicated region
  $region2: #{_lambda_.62} parent=0 // pred_check
    _
  $region3: #{_lambda_.62} parent=0 // pred_check_branch
    %8 = sbr.rel (0) target = $region5
  $region4: #{_lambda_.62} parent=0 // pred_region
    _
  $region5: #{_lambda_.62} parent=0 // pred_fallthru
    _
  // Predicated region
  $region6: #{_lambda_.62} parent=0 // pred_check
    _
  $region7: #{_lambda_.62} parent=0 // pred_check_branch
    %10 = sbr.rel (0) target = $region9
  $region8: #{_lambda_.62} parent=0 // pred_region
    _
  $region9: #{_lambda_.62} parent=0 // pred_fallthru
    _
  %p12 = scmp.eq.s32.totalorder 0, 0
  // Predicated region
  $region10: #{_lambda_.62} parent=0 // pred_check
    %p13 = pneg %p12
  $region11: #{_lambda_.62} parent=0 // pred_check_branch
    %15 = sbr.rel (%p13) target = $region13
  $region12: #{_lambda_.62} parent=0 // pred_region
    %vm16 = vcmask 261120
    %17 = vst.msk [vmem:[#allocation2] sm:$0xff] %vm16, 0.0
    %18 = vst.msk [vmem:[#allocation2 + $0x8] sm:$0xff] %vm16, 0.0
    %19 = vst.msk [vmem:[#allocation2 + $0x10] sm:$0xff] %vm16, 0.0
    %20 = vst.msk [vmem:[#allocation2 + $0x18] sm:$0xff] %vm16, 0.0
  $region13: #{_lambda_.62} parent=0 // pred_fallthru
    _
  %v21 = vld [vmem:[#allocation2] sm:$0xff]
  %v22 = vld [vmem:[#allocation2 + $0x8] sm:$0xff]
  %v23 = vld [vmem:[#allocation2 + $0x10] sm:$0xff]
  %v24 = vld [vmem:[#allocation2 + $0x18] sm:$0xff]
  %v25 = vld [vmem:[%s0] sm:$0xff]
  %v26 = vld [vmem:[%s0 + $0x8] sm:$0xff]
  %v27 = vld [vmem:[%s0 + $0x10] sm:$0xff]
  %v28 = vld [vmem:[%s0 + $0x18] sm:$0xff]
  %v29 = vpack.c.bf16 %v26, %v25
  %v30 = vpack.c.bf16 %v28, %v27
  %v31 = vld [vmem:[%s1] sm:$0xf]
  %v32 = vld [vmem:[%s1 + $0x4] sm:$0xf]
  %v33 = vld [vmem:[%s1 + $0x8] sm:$0xf]
  %v34 = vld [vmem:[%s1 + $0xc] sm:$0xf]
  %v39 = vunpack.c.l.b16 %v31
  %v40 = vunpack.c.l.b16 %v32
  %v41 = vunpack.c.l.b16 %v33
  %v42 = vunpack.c.l.b16 %v34
  %v43 = vpack.c.b16 %v40, %v39
  %v44 = vpack.c.b16 %v42, %v41
  %vm47 = vcmask 261120
  %v49 = vsel %vm47, %v29, 0
  %v52 = vsel %vm47, %v30, 0
  %54 = vmatprep.subr.bf16.mxu0 0
  %55 = vmatpush1.bf16.msra.mxu0 %v43
  %56 = vmatprep.subr.bf16.mxu0 0
  %57 = vmatpush1.bf16.msra.mxu0 %v44
  %58 = vmatprep.subr.bf16.mxu0 0
  %59 = vmatpush1.bf16.msra.mxu0 0
  %60 = vmatprep.subr.bf16.mxu0 0
  %61 = vmatpush1.bf16.msra.mxu0 0
  %62 = vmatprep.subr.bf16.mxu0 0
  %63 = vmatpush1.bf16.msra.mxu0 0
  %64 = vmatprep.subr.bf16.mxu0 0
  %65 = vmatpush1.bf16.msra.mxu0 0
  %66 = vmatprep.subr.bf16.mxu0 0
  %67 = vmatpush1.bf16.msra.mxu0 0
  %68 = vmatprep.subr.bf16.mxu0 0
  %69 = vmatpush1.bf16.msra.mxu0 0
  %70 = vmatprep.subr.bf16.mxu0 0
  %71 = vmatpush1.bf16.msra.mxu0 0
  %72 = vmatprep.subr.bf16.mxu0 0
  %73 = vmatpush1.bf16.msra.mxu0 0
  %74 = vmatprep.subr.bf16.mxu0 0
  %75 = vmatpush1.bf16.msra.mxu0 0
  %76 = vmatprep.subr.bf16.mxu0 0
  %77 = vmatpush1.bf16.msra.mxu0 0
  %78 = vmatprep.subr.bf16.mxu0 0
  %79 = vmatpush1.bf16.msra.mxu0 0
  %80 = vmatprep.subr.bf16.mxu0 0
  %81 = vmatpush1.bf16.msra.mxu0 0
  %82 = vmatprep.subr.bf16.mxu0 0
  %83 = vmatpush1.bf16.msra.mxu0 0
  %84 = vmatprep.subr.bf16.mxu0 0
  %85 = vmatpush1.bf16.msra.mxu0 0
  %86 = vmatprep.mubr.bf16.mxu0 0
  %87 = vmatmul.mubr.bf16.gmra.mrb[0].mxu0 %v49
  %v88 = vpop.f32.mrb[0].mxu0
  %v89 = vadd.f32 0.0, %v88
  %v90 = vpop.f32.mrb[0].mxu0
  %v91 = vpop.f32.mrb[0].mxu0
  %v92 = vadd.f32 0.0, %v91
  %v93 = vpop.f32.mrb[0].mxu0
  %94 = vmatprep.mubr.bf16.mxu0 0
  %95 = vmatmul.mubr.bf16.gmra.mrb[0].mxu0 %v52
  %v96 = vpop.f32.mrb[0].mxu0
  %v97 = vadd.f32 0.0, %v96
  %v98 = vpop.f32.mrb[0].mxu0
  %v99 = vpop.f32.mrb[0].mxu0
  %v100 = vadd.f32 0.0, %v99
  %v101 = vpop.f32.mrb[0].mxu0
  %102 = vdwg.mxu0
  %v103 = vadd.f32 %v21, %v89
  %v104 = vadd.f32 %v22, %v92
  %v105 = vadd.f32 %v23, %v97
  %v106 = vadd.f32 %v24, %v100
  %107 = vst.msk [vmem:[#allocation2] sm:$0xff] %vm47, %v103
  %108 = vst.msk [vmem:[#allocation2 + $0x8] sm:$0xff] %vm47, %v104
  %109 = vst.msk [vmem:[#allocation2 + $0x10] sm:$0xff] %vm47, %v105
  %110 = vst.msk [vmem:[#allocation2 + $0x18] sm:$0xff] %vm47, %v106
  // Predicated region
  $region14: #{_lambda_.62} parent=0 // pred_check
    %p111 = pneg %p12
  $region15: #{_lambda_.62} parent=0 // pred_check_branch
    %113 = sbr.rel (%p111) target = $region17
  $region16: #{_lambda_.62} parent=0 // pred_region
    %v114 = vld [vmem:[#allocation2] sm:$0xff]
    %v115 = vld [vmem:[#allocation2 + $0x8] sm:$0xff]
    %v116 = vld [vmem:[#allocation2 + $0x10] sm:$0xff]
    %v117 = vld [vmem:[#allocation2 + $0x18] sm:$0xff]
    %118 = vst.msk [vmem:[%s2] sm:$0xff] %vm47, %v114
    %119 = vst.msk [vmem:[%s2 + $0x8] sm:$0xff] %vm47, %v115
    %120 = vst.msk [vmem:[%s2 + $0x10] sm:$0xff] %vm47, %v116
    %121 = vst.msk [vmem:[%s2 + $0x18] sm:$0xff] %vm47, %v117
  $region17: #{_lambda_.62} parent=0 // pred_fallthru
    _
  // Predicated region
  $region18: #{_lambda_.62} parent=0 // pred_check
    _
  $region19: #{_lambda_.62} parent=0 // pred_check_branch
    %123 = sbr.rel (0) target = $region21
  $region20: #{_lambda_.62} parent=0 // pred_region
    _
  $region21: #{_lambda_.62} parent=0 // pred_fallthru
    _
  // Predicated region
  $region22: #{_lambda_.62} parent=0 // pred_check
    _
  $region23: #{_lambda_.62} parent=0 // pred_check_branch
    %125 = sbr.rel (0) target = $region25
  $region24: #{_lambda_.62} parent=0 // pred_region
    _
  $region25: #{_lambda_.62} parent=0 // pred_fallthru
    _

// kernel: _lambda_.65
$region0: #{_lambda_.65}
  #allocation0 [shape = 'u32[]', space=smem, size = 0x4, offset = 0x4, fixed_abs, tag = 'smem constant byte address 0x4 - core index']
  #allocation1 [shape = 'u32[144,128]{1,0:T(1,128)}', space=vmem, size = 0x12000, scoped, tag = 'internal scratch']
  %s0 = inlined_call_operand.vmem [shape: f32[32,32], index: 0, kind: input, shape index: {}]
  %s1 = inlined_call_operand.vmem [shape: f32[1,32], index: 1, kind: input, shape index: {}]
  %s2 = inlined_call_operand.vmem [shape: f32[1,32], index: 2, kind: input, shape index: {}]
  %s3 = inlined_call_operand.hbm [shape: f32[32,32], index: 3, kind: output, shape index: {}]
  %s4 = sld [smem:[#allocation0]]
  $region22: #{_lambda_.65} parent=0
    _
  %s6 = ssub.s32 1, %s4
  %s7 = scalar_select 0, %s6, %s4
  $region1: #{_lambda_.65} parent=0
    #allocation2 [shape = 'u8[16384]{0}', space=vmem, size = 0x4000, scoped, tag = 'output window, operand 0, single buffered']
    #allocation3 [shape = 's32[1]{0}', space=sflag, size = 0x4, scoped, tag = 'scoped memory for _lambda_.65']
    %8 = vsyncpa [#allocation3], 0
    // Predicated region
    $region2: #{_lambda_.65} parent=1 // pred_check
      _
    $region3: #{_lambda_.65} parent=1 // pred_check_branch
      %10 = sbr.rel (0) target = $region5
    $region4: #{_lambda_.65} parent=1 // pred_region
      _
    $region5: #{_lambda_.65} parent=1 // pred_fallthru
      _
    // Predicated region
    $region6: #{_lambda_.65} parent=1 // pred_check
      _
    $region7: #{_lambda_.65} parent=1 // pred_check_branch
      %12 = sbr.rel (0) target = $region9
    $region8: #{_lambda_.65} parent=1 // pred_region
      _
    $region9: #{_lambda_.65} parent=1 // pred_fallthru
      _
    // Predicated region
    $region10: #{_lambda_.65} parent=1 // pred_check
      _
    $region11: #{_lambda_.65} parent=1 // pred_check_branch
      %14 = sbr.rel (0) target = $region13
    $region12: #{_lambda_.65} parent=1 // pred_region
      _
    $region13: #{_lambda_.65} parent=1 // pred_fallthru
      _
    %v15 = vld [vmem:[%s0] sm:$0xff]
    %v16 = vld [vmem:[%s0 + $0x8] sm:$0xff]
    %v17 = vld [vmem:[%s0 + $0x10] sm:$0xff]
    %v18 = vld [vmem:[%s0 + $0x18] sm:$0xff]
    %vm19 = vcmask 261120
    %v20 = vsel %vm19, %v15, 0.0
    %21 = vadd.xlane.f32.xlu0 %v20
    %v22 = vpop.xlane.xlu0 %21
    %v23 = vsel %vm19, %v16, 0.0
    %24 = vadd.xlane.f32.xlu0 %v23
    %v25 = vpop.xlane.xlu0 %24
    %v26 = vsel %vm19, %v17, 0.0
    %27 = vadd.xlane.f32.xlu0 %v26
    %v28 = vpop.xlane.xlu0 %27
    %v29 = vsel %vm19, %v18, 0.0
    %30 = vadd.xlane.f32.xlu0 %v29
    %v31 = vpop.xlane.xlu0 %30
    %v32 = vrcp.pop 32.0
    %v33 = vmul.f32 %v22, %v32
    %v34 = vmul.f32 %v25, %v32
    %v35 = vmul.f32 %v28, %v32
    %v36 = vmul.f32 %v31, %v32
    %v37 = vsub.f32 %v15, %v33
    %v38 = vsub.f32 %v16, %v34
    %v39 = vsub.f32 %v17, %v35
    %v40 = vsub.f32 %v18, %v36
    %v41 = vmul.f32 %v37, %v37
    %v42 = vmul.f32 %v38, %v38
    %v43 = vmul.f32 %v39, %v39
    %v44 = vmul.f32 %v40, %v40
    %v45 = vsel %vm19, %v41, 0.0
    %46 = vadd.xlane.f32.xlu0 %v45
    %v47 = vpop.xlane.xlu0 %46
    %v48 = vsel %vm19, %v42, 0.0
    %49 = vadd.xlane.f32.xlu0 %v48
    %v50 = vpop.xlane.xlu0 %49
    %v51 = vsel %vm19, %v43, 0.0
    %52 = vadd.xlane.f32.xlu0 %v51
    %v53 = vpop.xlane.xlu0 %52
    %v54 = vsel %vm19, %v44, 0.0
    %55 = vadd.xlane.f32.xlu0 %v54
    %v56 = vpop.xlane.xlu0 %55
    %v57 = vmul.f32 %v47, %v32
    %v58 = vmul.f32 %v50, %v32
    %v59 = vmul.f32 %v53, %v32
    %v60 = vmul.f32 %v56, %v32
    %v61 = vadd.f32 %v57, 1e-06
    %v62 = vadd.f32 %v58, 1e-06
    %v63 = vadd.f32 %v59, 1e-06
    %v64 = vadd.f32 %v60, 1e-06
    %v65 = vrsqrt.pop %v61
    %v66 = vrsqrt.pop %v62
    %v67 = vrsqrt.pop %v63
    %v68 = vrsqrt.pop %v64
    %v69 = vmul.f32 %v37, %v65
    %v70 = vmul.f32 %v38, %v66
    %v71 = vmul.f32 %v39, %v67
    %v72 = vmul.f32 %v40, %v68
    %v73 = vld [vmem:[%s1] sm:$0x1]
    %v75 = vlaneseq
    %v76 = vshrl.u32 %v75, 7
    %v77 = vsub.s32 0, %v76
    %v78 = vrot.slane %v73, %v77
    %v80 = vmul.f32 %v69, %v78
    %v81 = vmul.f32 %v70, %v78
    %v82 = vmul.f32 %v71, %v78
    %v83 = vmul.f32 %v72, %v78
    %v84 = vld [vmem:[%s2] sm:$0x1]
    %v86 = vlaneseq
    %v87 = vshrl.u32 %v86, 7
    %v88 = vsub.s32 0, %v87
    %v89 = vrot.slane %v84, %v88
    %v91 = vadd.f32 %v80, %v89
    %v92 = vadd.f32 %v81, %v89
    %v93 = vadd.f32 %v82, %v89
    %v94 = vadd.f32 %v83, %v89
    %95 = vst.msk [vmem:[#allocation2] sm:$0xff] %vm19, %v91
    %96 = vst.msk [vmem:[#allocation2 + $0x8] sm:$0xff] %vm19, %v92
    %97 = vst.msk [vmem:[#allocation2 + $0x10] sm:$0xff] %vm19, %v93
    %98 = vst.msk [vmem:[#allocation2 + $0x18] sm:$0xff] %vm19, %v94
    // Predicated region
    $region14: #{_lambda_.65} parent=1 // pred_check
      _
    $region15: #{_lambda_.65} parent=1 // pred_check_branch
      %100 = sbr.rel (0) target = $region17
    $region16: #{_lambda_.65} parent=1 // pred_region
      %s102 = ssub.s32 512, 512
      %103 = vsyncadd [#allocation3], %s102
      %s104 = sshll.u32 [#allocation2], 4
      %s105 = int_to_ptr.vmem [resolvable:$true] %s104
      %110 = dma.vmem_to_hbm [thread:$0]  %s105, 512, %s3, [#allocation3], 128, 128, 8
    $region17: #{_lambda_.65} parent=1 // pred_fallthru
      _
    // Predicated region
    $region18: #{_lambda_.65} parent=1 // pred_check
      _
    $region19: #{_lambda_.65} parent=1 // pred_check_branch
      %112 = sbr.rel (0) target = $region21
    $region20: #{_lambda_.65} parent=1 // pred_region
      %113 = dma.done [#allocation3], 512
    $region21: #{_lambda_.65} parent=1 // pred_fallthru
      _
    %114 = vsyncpa [#allocation3], 1

// kernel: _lambda_.64
$region0: #{_lambda_.64}
  #allocation0 [shape = 'u32[]', space=smem, size = 0x4, offset = 0x4, fixed_abs, tag = 'smem constant byte address 0x4 - core index']
  #allocation1 [shape = 'u32[144,128]{1,0:T(1,128)}', space=vmem, size = 0x12000, scoped, tag = 'internal scratch']
  %s0 = inlined_call_operand.vmem [shape: bf16[2,6,6,32], index: 0, kind: input, shape index: {}]
  %s1 = inlined_call_operand.vmem [shape: bf16[9,32,32], index: 1, kind: input, shape index: {}]
  %s2 = inlined_call_operand.vmem [shape: f32[2,4,4,32], index: 2, kind: output, shape index: {}]
  %s3 = sld [smem:[#allocation0]]
  $region48: #{_lambda_.64} parent=0
    _
  %s5 = ssub.s32 1, %s3
  %s6 = scalar_select 0, %s5, %s3
  loop: start=0, step=1, limit=4
  $region2: #{_lambda_.64} parent=0 // loop_pre_header
    _
  $region3: #{_lambda_.64} parent=0 // loop_header
    %s8 = sphi 0, %s12
    %p9 = scmp.ge.s32.totalorder %s8, 4
    %s18 = sphi 0, %s20
    %s21 = sphi 0, %s18
    %s22 = sphi 0, %s21
    %s38 = sphi 0, %s22
    %s42 = sphi 0, %s42
    %s44 = sphi 0, %s42
    %s45 = sphi 0, %s44
    %s59 = sphi 0, %s45
    %s65 = sphi 0, %s67
    %s68 = sphi 0, %s65
    %s69 = sphi 0, %s68
    %s85 = sphi 0, %s69
  $region4: #{_lambda_.64} parent=0 // loop_header_branch
    %11 = sbr.rel (%p9) target = $region8
  $region5: #{_lambda_.64} parent=0 // loop_body
    %s13 = ssub.s32 %s8, 1
    %s14 = ssub.s32 %s8, 2
    %s15 = sadd.s32 %s8, 1
    %s16 = ssub.s32 %s8, %s15
    %p17 = scmp.eq.s32.totalorder %s16, 0
    %s19 = sadd.s32 %s18, 1
    %s20 = scalar_select %p17, %s18, %s19
    %p23 = pneg %p17
    %p24 = scmp.eq.s32.totalorder %s8, 1
    %p25 = por %p23, %p24
    %p26 = scmp.ne.s32.totalorder %s18, %s21
    %p27 = scmp.eq.s32.totalorder %s8, 0
    %p28 = por %p26, %p27
    %p29 = scmp.ne.s32.totalorder %s18, %s21
    %p30 = scmp.eq.s32.totalorder %s13, 1
    %p31 = por %p29, %p30
    %p32 = scmp.ne.s32.totalorder %s21, %s22
    %p33 = scmp.eq.s32.totalorder %s13, 0
    %p34 = por %p32, %p33
    %p35 = scmp.ne.s32.totalorder %s21, %s22
    %p36 = scmp.eq.s32.totalorder %s14, 1
    %p37 = por %p35, %p36
    %p39 = scmp.ne.s32.totalorder %s22, %s38
    %p40 = scmp.eq.s32.totalorder %s14, 0
    %p41 = por %p39, %p40
    %s43 = sadd.s32 %s42, 1
    %p46 = scmp.eq.s32.totalorder %s8, 1
    %p47 = scmp.ne.s32.totalorder %s42, %s44
    %p48 = scmp.eq.s32.totalorder %s8, 0
    %p49 = por %p47, %p48
    %p50 = scmp.ne.s32.totalorder %s42, %s44
    %p51 = scmp.eq.s32.totalorder %s13, 1
    %p52 = por %p50, %p51
    %p53 = scmp.ne.s32.totalorder %s44, %s45
    %p54 = scmp.eq.s32.totalorder %s13, 0
    %p55 = por %p53, %p54
    %p56 = scmp.ne.s32.totalorder %s44, %s45
    %p57 = scmp.eq.s32.totalorder %s14, 1
    %p58 = por %p56, %p57
    %p60 = scmp.ne.s32.totalorder %s45, %s59
    %p61 = scmp.eq.s32.totalorder %s14, 0
    %p62 = por %p60, %p61
    %s63 = ssub.s32 %s8, %s15
    %p64 = scmp.eq.s32.totalorder %s63, 0
    %s66 = sadd.s32 %s65, 1
    %s67 = scalar_select %p64, %s65, %s66
    %p70 = pneg %p64
    %p71 = scmp.eq.s32.totalorder %s8, 1
    %p72 = por %p70, %p71
    %p73 = scmp.ne.s32.totalorder %s65, %s68
    %p74 = scmp.eq.s32.totalorder %s8, 0
    %p75 = por %p73, %p74
    %p76 = scmp.ne.s32.totalorder %s65, %s68
    %p77 = scmp.eq.s32.totalorder %s13, 1
    %p78 = por %p76, %p77
    %p79 = scmp.ne.s32.totalorder %s68, %s69
    %p80 = scmp.eq.s32.totalorder %s13, 0
    %p81 = por %p79, %p80
    %p82 = scmp.ne.s32.totalorder %s68, %s69
    %p83 = scmp.eq.s32.totalorder %s14, 1
    %p84 = por %p82, %p83
    %p86 = scmp.ne.s32.totalorder %s69, %s85
    %p87 = scmp.eq.s32.totalorder %s14, 0
    %p88 = por %p86, %p87
    %p89 = scmp.le.s32.totalorder 1, %s8
    %p90 = scmp.lt.s32.totalorder %s8, 3
    %p91 = pnand %p89, %p90
    %p92 = pneg %p91
    // Predicated region
    $region9: #{_lambda_.64} parent=5 // pred_check
      _
    $region10: #{_lambda_.64} parent=5 // pred_check_branch
      %94 = sbr.rel (%p91) target = $region12
    $region11: #{_lambda_.64} parent=5 // pred_region
      %s95 = ssub.s32 %s8, 1
      // Predicated region
      $region13: #{_lambda_.64} parent=11 // pred_check
        %p96 = pneg %p55
      $region14: #{_lambda_.64} parent=11 // pred_check_branch
        %98 = sbr.rel (%p96) target = $region16
      $region15: #{_lambda_.64} parent=11 // pred_region
        _
      $region16: #{_lambda_.64} parent=11 // pred_fallthru
        _
    $region12: #{_lambda_.64} parent=5 // pred_fallthru
      _
    %p99 = scmp.lt.s32.totalorder %s8, 2
    // Predicated region
    $region17: #{_lambda_.64} parent=5 // pred_check
      %p100 = pneg %p99
    $region18: #{_lambda_.64} parent=5 // pred_check_branch
      %102 = sbr.rel (%p100) target = $region20
    $region19: #{_lambda_.64} parent=5 // pred_region
      // Predicated region
      $region21: #{_lambda_.64} parent=19 // pred_check
        %p103 = pneg %p28
      $region22: #{_lambda_.64} parent=19 // pred_check_branch
        %105 = sbr.rel (%p103) target = $region24
      $region23: #{_lambda_.64} parent=19 // pred_region
        %p106 = scmp.lt.s32.totalorder %s8, 1
        %s107 = scalar_select %p106, %s8, 1
        %s108 = smul.addr %s107, 6
        %s109 = smul.addr %s108, 4
        %s110 = scalar_lea.vmem %s0, %s109
      $region24: #{_lambda_.64} parent=19 // pred_fallthru
        _
    $region20: #{_lambda_.64} parent=5 // pred_fallthru
      _
    %p111 = scmp.le.s32.totalorder 1, %s8
    %p112 = scmp.lt.s32.totalorder %s8, 3
    %p113 = pnand %p111, %p112
    %p114 = pneg %p113
    // Predicated region
    $region25: #{_lambda_.64} parent=5 // pred_check
      _
    $region26: #{_lambda_.64} parent=5 // pred_check_branch
      %116 = sbr.rel (%p113) target = $region28
    $region27: #{_lambda_.64} parent=5 // pred_region
      %s117 = ssub.s32 %s8, 1
      %p118 = scmp.lt.s32.totalorder %s13, 1
      %s119 = scalar_select %p118, %s13, 1
      %s120 = smul.addr %s119, 6
      %s121 = smul.addr %s120, 4
      %s122 = scalar_lea.vmem %s0, %s121
      %p123 = pneg %p34
      %p124 = pneg %p31
      %p125 = pneg %p55
      %p126 = pneg %p52
      %p127 = pneg %p81
      %p128 = pneg %p78
      %p129 = scmp.lt.s32.totalorder %s13, 1
      %s130 = scalar_select %p129, %s13, 1
      %s131 = smul.addr %s130, 4
      %s132 = smul.addr %s131, 4
      %s133 = scalar_lea.vmem %s2, %s132
      %p134 = scmp.lt.s32.totalorder %s13, 1
      %s135 = scalar_select %p134, %s13, 1
      %s136 = smul.addr %s135, 6
      %s137 = smul.addr %s136, 4
      %s138 = scalar_lea.vmem %s0, %s137
      %p139 = scmp.lt.s32.totalorder %s13, 1
      %s140 = scalar_select %p139, %s13, 1
      %s141 = smul.addr %s140, 4
      %s142 = smul.addr %s141, 4
      %s143 = scalar_lea.vmem %s2, %s142
      loop: start=0, step=1, limit=4
      $region29: #{_lambda_.64} parent=27 // loop_pre_header
        _
      $region30: #{_lambda_.64} parent=27 // loop_header
        %s146 = sphi 0, %s150
        %p147 = scmp.ge.s32.totalorder %s146, 4
      $region31: #{_lambda_.64} parent=27 // loop_header_branch
        %149 = sbr.rel (%p147) target = $region35
      $region32: #{_lambda_.64} parent=27 // loop_body
        %s151 = smul.addr %s146, 4
        %s152 = scalar_lea.vmem %s138, %s151
        %v153 = vld [vmem:[%s152] sm:$0x3]
        %v154 = vld [vmem:[%s1] sm:$0xf]
        %v155 = vld [vmem:[%s1 + $0x4] sm:$0xf]
        %v156 = vld [vmem:[%s1 + $0x8] sm:$0xf]
        %v157 = vld [vmem:[%s1 + $0xc] sm:$0xf]
        %v158 = vld [vmem:[%s152] sm:$0x7]
        %s159 = scalar_lea.vmem %s1, 16
        %v160 = vld [vmem:[%s159] sm:$0xf]
        %v161 = vld [vmem:[%s159 + $0x4] sm:$0xf]
        %v162 = vld [vmem:[%s159 + $0x8] sm:$0xf]
        %v163 = vld [vmem:[%s159 + $0xc] sm:$0xf]
        %v165 = vunpack.c.l.b16 %v158
        %v166 = vpack.c.b16 %v165, %v165
        %v168 = vshrl.u32 %v166, 16
        %v170 = vshll.u32 %v166, 16
        %v172 = vrot.slane %v170, 1
        %v173 = vor.u32 %v168, %v172
        %v178 = vunpack.c.l.b16 %v160
        %v179 = vunpack.c.l.b16 %v161
        %v180 = vunpack.c.l.b16 %v162
        %v181 = vunpack.c.l.b16 %v163
        %v182 = vpack.c.b16 %v179, %v178
        %v183 = vpack.c.b16 %v181, %v180
        %vm186 = vcmask 261120
        %v188 = vsel %vm186, %v173, 0
        %190 = vmatprep.subr.bf16.mxu0 0
        %191 = vmatpush1.bf16.msra.mxu0 %v182
        %192 = vmatprep.subr.bf16.mxu0 0
        %193 = vmatpush1.bf16.msra.mxu0 %v183
        %194 = vmatprep.subr.bf16.mxu0 0
        %195 = vmatpush1.bf16.msra.mxu0 0
        %196 = vmatprep.subr.bf16.mxu0 0
        %197 = vmatpush1.bf16.msra.mxu0 0
        %198 = vmatprep.subr.bf16.mxu0 0
        %199 = vmatpush1.bf16.msra.mxu0 0
        %200 = vmatprep.subr.bf16.mxu0 0
        %201 = vmatpush1.bf16.msra.mxu0 0
        %202 = vmatprep.subr.bf16.mxu0 0
        %203 = vmatpush1.bf16.msra.mxu0 0
        %204 = vmatprep.subr.bf16.mxu0 0
        %205 = vmatpush1.bf16.msra.mxu0 0
        %206 = vmatprep.subr.bf16.mxu0 0
        %207 = vmatpush1.bf16.msra.mxu0 0
        %208 = vmatprep.subr.bf16.mxu0 0
        %209 = vmatpush1.bf16.msra.mxu0 0
        %210 = vmatprep.subr.bf16.mxu0 0
        %211 = vmatpush1.bf16.msra.mxu0 0
        %212 = vmatprep.subr.bf16.mxu0 0
        %213 = vmatpush1.bf16.msra.mxu0 0
        %214 = vmatprep.subr.bf16.mxu0 0
        %215 = vmatpush1.bf16.msra.mxu0 0
        %216 = vmatprep.subr.bf16.mxu0 0
        %217 = vmatpush1.bf16.msra.mxu0 0
        %218 = vmatprep.subr.bf16.mxu0 0
        %219 = vmatpush1.bf16.msra.mxu0 0
        %220 = vmatprep.subr.bf16.mxu0 0
        %221 = vmatpush1.bf16.msra.mxu0 0
        %222 = vmatprep.mubr.bf16.mxu0 0
        %223 = vmatmul.mubr.bf16.gmra.mrb[0].mxu0 %v188
        %v224 = vpop.f32.mrb[0].mxu0
        %v225 = vadd.f32 0.0, %v224
        %v226 = vpop.f32.mrb[0].mxu0
        %v227 = vpop.f32.mrb[0].mxu0
        %v228 = vpop.f32.mrb[0].mxu0
        %229 = vdwg.mxu0
        %v234 = vunpack.c.l.b16 %v154
        %v235 = vunpack.c.l.b16 %v155
        %v236 = vunpack.c.l.b16 %v156
        %v237 = vunpack.c.l.b16 %v157
        %v238 = vpack.c.b16 %v235, %v234
        %v239 = vpack.c.b16 %v237, %v236
        %v243 = vsel %vm186, %v153, 0
        %245 = vmatprep.subr.bf16.mxu0 0
        %246 = vmatpush1.bf16.msra.mxu0 %v238
        %247 = vmatprep.subr.bf16.mxu0 0
        %248 = vmatpush1.bf16.msra.mxu0 %v239
        %249 = vmatprep.subr.bf16.mxu0 0
        %250 = vmatpush1.bf16.msra.mxu0 0
        %251 = vmatprep.subr.bf16.mxu0 0
        %252 = vmatpush1.bf16.msra.mxu0 0
        %253 = vmatprep.subr.bf16.mxu0 0
        %254 = vmatpush1.bf16.msra.mxu0 0
        %255 = vmatprep.subr.bf16.mxu0 0
        %256 = vmatpush1.bf16.msra.mxu0 0
        %257 = vmatprep.subr.bf16.mxu0 0
        %258 = vmatpush1.bf16.msra.mxu0 0
        %259 = vmatprep.subr.bf16.mxu0 0
        %260 = vmatpush1.bf16.msra.mxu0 0
        %261 = vmatprep.subr.bf16.mxu0 0
        %262 = vmatpush1.bf16.msra.mxu0 0
        %263 = vmatprep.subr.bf16.mxu0 0
        %264 = vmatpush1.bf16.msra.mxu0 0
        %265 = vmatprep.subr.bf16.mxu0 0
        %266 = vmatpush1.bf16.msra.mxu0 0
        %267 = vmatprep.subr.bf16.mxu0 0
        %268 = vmatpush1.bf16.msra.mxu0 0
        %269 = vmatprep.subr.bf16.mxu0 0
        %270 = vmatpush1.bf16.msra.mxu0 0
        %271 = vmatprep.subr.bf16.mxu0 0
        %272 = vmatpush1.bf16.msra.mxu0 0
        %273 = vmatprep.subr.bf16.mxu0 0
        %274 = vmatpush1.bf16.msra.mxu0 0
        %275 = vmatprep.subr.bf16.mxu0 0
        %276 = vmatpush1.bf16.msra.mxu0 0
        %277 = vmatprep.mubr.bf16.mxu0 0
        %278 = vmatmul.mubr.bf16.gmra.mrb[0].mxu0 %v243
        %v279 = vpop.f32.mrb[0].mxu0
        %v280 = vadd.f32 %v225, %v279
        %v281 = vpop.f32.mrb[0].mxu0
        %v282 = vpop.f32.mrb[0].mxu0
        %v283 = vpop.f32.mrb[0].mxu0
        %284 = vdwg.mxu0
        %v285 = vld [vmem:[%s152] sm:$0x6]
        %s286 = scalar_lea.vmem %s1, 32
        %v287 = vld [vmem:[%s286] sm:$0xf]
        %v288 = vld [vmem:[%s286 + $0x4] sm:$0xf]
        %v289 = vld [vmem:[%s286 + $0x8] sm:$0xf]
        %v290 = vld [vmem:[%s286 + $0xc] sm:$0xf]
        %v292 = vunpack.c.l.b16 %v285
        %v293 = vpack.c.b16 %v292, %v292
        %v294 = vrot.slane %v293, 1
        %v299 = vunpack.c.l.b16 %v287
        %v300 = vunpack.c.l.b16 %v288
        %v301 = vunpack.c.l.b16 %v289
        %v302 = vunpack.c.l.b16 %v290
        %v303 = vpack.c.b16 %v300, %v299
        %v304 = vpack.c.b16 %v302, %v301
        %v308 = vsel %vm186, %v294, 0
        %310 = vmatprep.subr.bf16.mxu0 0
        %311 = vmatpush1.bf16.msra.mxu0 %v303
        %312 = vmatprep.subr.bf16.mxu0 0
        %313 = vmatpush1.bf16.msra.mxu0 %v304
        %314 = vmatprep.subr.bf16.mxu0 0
        %315 = vmatpush1.bf16.msra.mxu0 0
        %316 = vmatprep.subr.bf16.mxu0 0
        %317 = vmatpush1.bf16.msra.mxu0 0
        %318 = vmatprep.subr.bf16.mxu0 0
        %319 = vmatpush1.bf16.msra.mxu0 0
        %320 = vmatprep.subr.bf16.mxu0 0
        %321 = vmatpush1.bf16.msra.mxu0 0
        %322 = vmatprep.subr.bf16.mxu0 0
        %323 = vmatpush1.bf16.msra.mxu0 0
        %324 = vmatprep.subr.bf16.mxu0 0
        %325 = vmatpush1.bf16.msra.mxu0 0
        %326 = vmatprep.subr.bf16.mxu0 0
        %327 = vmatpush1.bf16.msra.mxu0 0
        %328 = vmatprep.subr.bf16.mxu0 0
        %329 = vmatpush1.bf16.msra.mxu0 0
        %330 = vmatprep.subr.bf16.mxu0 0
        %331 = vmatpush1.bf16.msra.mxu0 0
        %332 = vmatprep.subr.bf16.mxu0 0
        %333 = vmatpush1.bf16.msra.mxu0 0
        %334 = vmatprep.subr.bf16.mxu0 0
        %335 = vmatpush1.bf16.msra.mxu0 0
        %336 = vmatprep.subr.bf16.mxu0 0
        %337 = vmatpush1.bf16.msra.mxu0 0
        %338 = vmatprep.subr.bf16.mxu0 0
        %339 = vmatpush1.bf16.msra.mxu0 0
        %340 = vmatprep.subr.bf16.mxu0 0
        %341 = vmatpush1.bf16.msra.mxu0 0
        %342 = vmatprep.mubr.bf16.mxu0 0
        %343 = vmatmul.mubr.bf16.gmra.mrb[0].mxu0 %v308
        %v344 = vpop.f32.mrb[0].mxu0
        %v345 = vadd.f32 0.0, %v344
        %v346 = vpop.f32.mrb[0].mxu0
        %v347 = vpop.f32.mrb[0].mxu0
        %v348 = vpop.f32.mrb[0].mxu0
        %349 = vdwg.mxu0
        %v350 = vadd.f32 %v280, %v345
        %s351 = sadd.s32 %s146, 1
        %s352 = smul.addr %s351, 4
        %s353 = scalar_lea.vmem %s138, %s352
        %v354 = vld [vmem:[%s353] sm:$0x3]
        %s355 = scalar_lea.vmem %s1, 48
        %v356 = vld [vmem:[%s355] sm:$0xf]
        %v357 = vld [vmem:[%s355 + $0x4] sm:$0xf]
        %v358 = vld [vmem:[%s355 + $0x8] sm:$0xf]
        %v359 = vld [vmem:[%s355 + $0xc] sm:$0xf]
        %v364 = vunpack.c.l.b16 %v356
        %v365 = vunpack.c.l.b16 %v357
        %v366 = vunpack.c.l.b16 %v358
        %v367 = vunpack.c.l.b16 %v359
        %v368 = vpack.c.b16 %v365, %v364
        %v369 = vpack.c.b16 %v367, %v366
        %v373 = vsel %vm186, %v354, 0
        %375 = vmatprep.subr.bf16.mxu0 0
        %376 = vmatpush1.bf16.msra.mxu0 %v368
        %377 = vmatprep.subr.bf16.mxu0 0
        %378 = vmatpush1.bf16.msra.mxu0 %v369
        %379 = vmatprep.subr.bf16.mxu0 0
        %380 = vmatpush1.bf16.msra.mxu0 0
        %381 = vmatprep.subr.bf16.mxu0 0
        %382 = vmatpush1.bf16.msra.mxu0 0
        %383 = vmatprep.subr.bf16.mxu0 0
        %384 = vmatpush1.bf16.msra.mxu0 0
        %385 = vmatprep.subr.bf16.mxu0 0
        %386 = vmatpush1.bf16.msra.mxu0 0
        %387 = vmatprep.subr.bf16.mxu0 0
        %388 = vmatpush1.bf16.msra.mxu0 0
        %389 = vmatprep.subr.bf16.mxu0 0
        %390 = vmatpush1.bf16.msra.mxu0 0
        %391 = vmatprep.subr.bf16.mxu0 0
        %392 = vmatpush1.bf16.msra.mxu0 0
        %393 = vmatprep.subr.bf16.mxu0 0
        %394 = vmatpush1.bf16.msra.mxu0 0
        %395 = vmatprep.subr.bf16.mxu0 0
        %396 = vmatpush1.bf16.msra.mxu0 0
        %397 = vmatprep.subr.bf16.mxu0 0
        %398 = vmatpush1.bf16.msra.mxu0 0
        %399 = vmatprep.subr.bf16.mxu0 0
        %400 = vmatpush1.bf16.msra.mxu0 0
        %401 = vmatprep.subr.bf16.mxu0 0
        %402 = vmatpush1.bf16.msra.mxu0 0
        %403 = vmatprep.subr.bf16.mxu0 0
        %404 = vmatpush1.bf16.msra.mxu0 0
        %405 = vmatprep.subr.bf16.mxu0 0
        %406 = vmatpush1.bf16.msra.mxu0 0
        %407 = vmatprep.mubr.bf16.mxu0 0
        %408 = vmatmul.mubr.bf16.gmra.mrb[0].mxu0 %v373
        %v409 = vpop.f32.mrb[0].mxu0
        %v410 = vadd.f32 0.0, %v409
        %v411 = vpop.f32.mrb[0].mxu0
        %v412 = vpop.f32.mrb[0].mxu0
        %v413 = vpop.f32.mrb[0].mxu0
        %414 = vdwg.mxu0
        %v415 = vadd.f32 %v350, %v410
        %v416 = vld [vmem:[%s353] sm:$0x7]
        %s417 = scalar_lea.vmem %s1, 64
        %v418 = vld [vmem:[%s417] sm:$0xf]
        %v419 = vld [vmem:[%s417 + $0x4] sm:$0xf]
        %v420 = vld [vmem:[%s417 + $0x8] sm:$0xf]
        %v421 = vld [vmem:[%s417 + $0xc] sm:$0xf]
        %v423 = vunpack.c.l.b16 %v416
        %v424 = vpack.c.b16 %v423, %v423
        %v426 = vshrl.u32 %v424, 16
        %v428 = vshll.u32 %v424, 16
        %v430 = vrot.slane %v428, 1
        %v431 = vor.u32 %v426, %v430
        %v436 = vunpack.c.l.b16 %v418
        %v437 = vunpack.c.l.b16 %v419
        %v438 = vunpack.c.l.b16 %v420
        %v439 = vunpack.c.l.b16 %v421
        %v440 = vpack.c.b16 %v437, %v436
        %v441 = vpack.c.b16 %v439, %v438
        %v445 = vsel %vm186, %v431, 0
        %447 = vmatprep.subr.bf16.mxu0 0
        %448 = vmatpush1.bf16.msra.mxu0 %v440
        %449 = vmatprep.subr.bf16.mxu0 0
        %450 = vmatpush1.bf16.msra.mxu0 %v441
        %451 = vmatprep.subr.bf16.mxu0 0
        %452 = vmatpush1.bf16.msra.mxu0 0
        %453 = vmatprep.subr.bf16.mxu0 0
        %454 = vmatpush1.bf16.msra.mxu0 0
        %455 = vmatprep.subr.bf16.mxu0 0
        %456 = vmatpush1.bf16.msra.mxu0 0
        %457 = vmatprep.subr.bf16.mxu0 0
        %458 = vmatpush1.bf16.msra.mxu0 0
        %459 = vmatprep.subr.bf16.mxu0 0
        %460 = vmatpush1.bf16.msra.mxu0 0
        %461 = vmatprep.subr.bf16.mxu0 0
        %462 = vmatpush1.bf16.msra.mxu0 0
        %463 = vmatprep.subr.bf16.mxu0 0
        %464 = vmatpush1.bf16.msra.mxu0 0
        %465 = vmatprep.subr.bf16.mxu0 0
        %466 = vmatpush1.bf16.msra.mxu0 0
        %467 = vmatprep.subr.bf16.mxu0 0
        %468 = vmatpush1.bf16.msra.mxu0 0
        %469 = vmatprep.subr.bf16.mxu0 0
        %470 = vmatpush1.bf16.msra.mxu0 0
        %471 = vmatprep.subr.bf16.mxu0 0
        %472 = vmatpush1.bf16.msra.mxu0 0
        %473 = vmatprep.subr.bf16.mxu0 0
        %474 = vmatpush1.bf16.msra.mxu0 0
        %475 = vmatprep.subr.bf16.mxu0 0
        %476 = vmatpush1.bf16.msra.mxu0 0
        %477 = vmatprep.subr.bf16.mxu0 0
        %478 = vmatpush1.bf16.msra.mxu0 0
        %479 = vmatprep.mubr.bf16.mxu0 0
        %480 = vmatmul.mubr.bf16.gmra.mrb[0].mxu0 %v445
        %v481 = vpop.f32.mrb[0].mxu0
        %v482 = vadd.f32 0.0, %v481
        %v483 = vpop.f32.mrb[0].mxu0
        %v484 = vpop.f32.mrb[0].mxu0
        %v485 = vpop.f32.mrb[0].mxu0
        %486 = vdwg.mxu0
        %v487 = vadd.f32 %v415, %v482
        %v488 = vld [vmem:[%s353] sm:$0x6]
        %s489 = scalar_lea.vmem %s1, 80
        %v490 = vld [vmem:[%s489] sm:$0xf]
        %v491 = vld [vmem:[%s489 + $0x4] sm:$0xf]
        %v492 = vld [vmem:[%s489 + $0x8] sm:$0xf]
        %v493 = vld [vmem:[%s489 + $0xc] sm:$0xf]
        %v495 = vunpack.c.l.b16 %v488
        %v496 = vpack.c.b16 %v495, %v495
        %v497 = vrot.slane %v496, 1
        %v502 = vunpack.c.l.b16 %v490
        %v503 = vunpack.c.l.b16 %v491
        %v504 = vunpack.c.l.b16 %v492
        %v505 = vunpack.c.l.b16 %v493
        %v506 = vpack.c.b16 %v503, %v502
        %v507 = vpack.c.b16 %v505, %v504
        %v511 = vsel %vm186, %v497, 0
        %513 = vmatprep.subr.bf16.mxu0 0
        %514 = vmatpush1.bf16.msra.mxu0 %v506
        %515 = vmatprep.subr.bf16.mxu0 0
        %516 = vmatpush1.bf16.msra.mxu0 %v507
        %517 = vmatprep.subr.bf16.mxu0 0
        %518 = vmatpush1.bf16.msra.mxu0 0
        %519 = vmatprep.subr.bf16.mxu0 0
        %520 = vmatpush1.bf16.msra.mxu0 0
        %521 = vmatprep.subr.bf16.mxu0 0
        %522 = vmatpush1.bf16.msra.mxu0 0
        %523 = vmatprep.subr.bf16.mxu0 0
        %524 = vmatpush1.bf16.msra.mxu0 0
        %525 = vmatprep.subr.bf16.mxu0 0
        %526 = vmatpush1.bf16.msra.mxu0 0
        %527 = vmatprep.subr.bf16.mxu0 0
        %528 = vmatpush1.bf16.msra.mxu0 0
        %529 = vmatprep.subr.bf16.mxu0 0
        %530 = vmatpush1.bf16.msra.mxu0 0
        %531 = vmatprep.subr.bf16.mxu0 0
        %532 = vmatpush1.bf16.msra.mxu0 0
        %533 = vmatprep.subr.bf16.mxu0 0
        %534 = vmatpush1.bf16.msra.mxu0 0
        %535 = vmatprep.subr.bf16.mxu0 0
        %536 = vmatpush1.bf16.msra.mxu0 0
        %537 = vmatprep.subr.bf16.mxu0 0
        %538 = vmatpush1.bf16.msra.mxu0 0
        %539 = vmatprep.subr.bf16.mxu0 0
        %540 = vmatpush1.bf16.msra.mxu0 0
        %541 = vmatprep.subr.bf16.mxu0 0
        %542 = vmatpush1.bf16.msra.mxu0 0
        %543 = vmatprep.subr.bf16.mxu0 0
        %544 = vmatpush1.bf16.msra.mxu0 0
        %545 = vmatprep.mubr.bf16.mxu0 0
        %546 = vmatmul.mubr.bf16.gmra.mrb[0].mxu0 %v511
        %v547 = vpop.f32.mrb[0].mxu0
        %v548 = vadd.f32 0.0, %v547
        %v549 = vpop.f32.mrb[0].mxu0
        %v550 = vpop.f32.mrb[0].mxu0
        %v551 = vpop.f32.mrb[0].mxu0
        %552 = vdwg.mxu0
        %v553 = vadd.f32 %v487, %v548
        %s554 = sadd.s32 %s146, 2
        %s555 = smul.addr %s554, 4
        %s556 = scalar_lea.vmem %s138, %s555
        %v557 = vld [vmem:[%s556] sm:$0x3]
        %s558 = scalar_lea.vmem %s1, 96
        %v559 = vld [vmem:[%s558] sm:$0xf]
        %v560 = vld [vmem:[%s558 + $0x4] sm:$0xf]
        %v561 = vld [vmem:[%s558 + $0x8] sm:$0xf]
        %v562 = vld [vmem:[%s558 + $0xc] sm:$0xf]
        %v567 = vunpack.c.l.b16 %v559
        %v568 = vunpack.c.l.b16 %v560
        %v569 = vunpack.c.l.b16 %v561
        %v570 = vunpack.c.l.b16 %v562
        %v571 = vpack.c.b16 %v568, %v567
        %v572 = vpack.c.b16 %v570, %v569
        %v576 = vsel %vm186, %v557, 0
        %578 = vmatprep.subr.bf16.mxu0 0
        %579 = vmatpush1.bf16.msra.mxu0 %v571
        %580 = vmatprep.subr.bf16.mxu0 0
        %581 = vmatpush1.bf16.msra.mxu0 %v572
        %582 = vmatprep.subr.bf16.mxu0 0
        %583 = vmatpush1.bf16.msra.mxu0 0
        %584 = vmatprep.subr.bf16.mxu0 0
        %585 = vmatpush1.bf16.msra.mxu0 0
        %586 = vmatprep.subr.bf16.mxu0 0
        %587 = vmatpush1.bf16.msra.mxu0 0
        %588 = vmatprep.subr.bf16.mxu0 0
        %589 = vmatpush1.bf16.msra.mxu0 0
        %590 = vmatprep.subr.bf16.mxu0 0
        %591 = vmatpush1.bf16.msra.mxu0 0
        %592 = vmatprep.subr.bf16.mxu0 0
        %593 = vmatpush1.bf16.msra.mxu0 0
        %594 = vmatprep.subr.bf16.mxu0 0
        %595 = vmatpush1.bf16.msra.mxu0 0
        %596 = vmatprep.subr.bf16.mxu0 0
        %597 = vmatpush1.bf16.msra.mxu0 0
        %598 = vmatprep.subr.bf16.mxu0 0
        %599 = vmatpush1.bf16.msra.mxu0 0
        %600 = vmatprep.subr.bf16.mxu0 0
        %601 = vmatpush1.bf16.msra.mxu0 0
        %602 = vmatprep.subr.bf16.mxu0 0
        %603 = vmatpush1.bf16.msra.mxu0 0
        %604 = vmatprep.subr.bf16.mxu0 0
        %605 = vmatpush1.bf16.msra.mxu0 0
        %606 = vmatprep.subr.bf16.mxu0 0
        %607 = vmatpush1.bf16.msra.mxu0 0
        %608 = vmatprep.subr.bf16.mxu0 0
        %609 = vmatpush1.bf16.msra.mxu0 0
        %610 = vmatprep.mubr.bf16.mxu0 0
        %611 = vmatmul.mubr.bf16.gmra.mrb[0].mxu0 %v576
        %v612 = vpop.f32.mrb[0].mxu0
        %v613 = vadd.f32 0.0, %v612
        %v614 = vpop.f32.mrb[0].mxu0
        %v615 = vpop.f32.mrb[0].mxu0
        %v616 = vpop.f32.mrb[0].mxu0
        %617 = vdwg.mxu0
        %v618 = vadd.f32 %v553, %v613
        %v619 = vld [vmem:[%s556] sm:$0x7]
        %s620 = scalar_lea.vmem %s1, 112
        %v621 = vld [vmem:[%s620] sm:$0xf]
        %v622 = vld [vmem:[%s620 + $0x4] sm:$0xf]
        %v623 = vld [vmem:[%s620 + $0x8] sm:$0xf]
        %v624 = vld [vmem:[%s620 + $0xc] sm:$0xf]
        %v626 = vunpack.c.l.b16 %v619
        %v627 = vpack.c.b16 %v626, %v626
        %v629 = vshrl.u32 %v627, 16
        %v631 = vshll.u32 %v627, 16
        %v633 = vrot.slane %v631, 1
        %v634 = vor.u32 %v629, %v633
        %v639 = vunpack.c.l.b16 %v621
        %v640 = vunpack.c.l.b16 %v622
        %v641 = vunpack.c.l.b16 %v623
        %v642 = vunpack.c.l.b16 %v624
        %v643 = vpack.c.b16 %v640, %v639
        %v644 = vpack.c.b16 %v642, %v641
        %v648 = vsel %vm186, %v634, 0
        %650 = vmatprep.subr.bf16.mxu0 0
        %651 = vmatpush1.bf16.msra.mxu0 %v643
        %652 = vmatprep.subr.bf16.mxu0 0
        %653 = vmatpush1.bf16.msra.mxu0 %v644
        %654 = vmatprep.subr.bf16.mxu0 0
        %655 = vmatpush1.bf16.msra.mxu0 0
        %656 = vmatprep.subr.bf16.mxu0 0
        %657 = vmatpush1.bf16.msra.mxu0 0
        %658 = vmatprep.subr.bf16.mxu0 0
        %659 = vmatpush1.bf16.msra.mxu0 0
        %660 = vmatprep.subr.bf16.mxu0 0
        %661 = vmatpush1.bf16.msra.mxu0 0
        %662 = vmatprep.subr.bf16.mxu0 0
        %663 = vmatpush1.bf16.msra.mxu0 0
        %664 = vmatprep.subr.bf16.mxu0 0
        %665 = vmatpush1.bf16.msra.mxu0 0
        %666 = vmatprep.subr.bf16.mxu0 0
        %667 = vmatpush1.bf16.msra.mxu0 0
        %668 = vmatprep.subr.bf16.mxu0 0
        %669 = vmatpush1.bf16.msra.mxu0 0
        %670 = vmatprep.subr.bf16.mxu0 0
        %671 = vmatpush1.bf16.msra.mxu0 0
        %672 = vmatprep.subr.bf16.mxu0 0
        %673 = vmatpush1.bf16.msra.mxu0 0
        %674 = vmatprep.subr.bf16.mxu0 0
        %675 = vmatpush1.bf16.msra.mxu0 0
        %676 = vmatprep.subr.bf16.mxu0 0
        %677 = vmatpush1.bf16.msra.mxu0 0
        %678 = vmatprep.subr.bf16.mxu0 0
        %679 = vmatpush1.bf16.msra.mxu0 0
        %680 = vmatprep.subr.bf16.mxu0 0
        %681 = vmatpush1.bf16.msra.mxu0 0
        %682 = vmatprep.mubr.bf16.mxu0 0
        %683 = vmatmul.mubr.bf16.gmra.mrb[0].mxu0 %v648
        %v684 = vpop.f32.mrb[0].mxu0
        %v685 = vadd.f32 0.0, %v684
        %v686 = vpop.f32.mrb[0].mxu0
        %v687 = vpop.f32.mrb[0].mxu0
        %v688 = vpop.f32.mrb[0].mxu0
        %689 = vdwg.mxu0
        %v690 = vadd.f32 %v618, %v685
        %v691 = vld [vmem:[%s556] sm:$0x6]
        %s692 = scalar_lea.vmem %s1, 128
        %v693 = vld [vmem:[%s692] sm:$0xf]
        %v694 = vld [vmem:[%s692 + $0x4] sm:$0xf]
        %v695 = vld [vmem:[%s692 + $0x8] sm:$0xf]
        %v696 = vld [vmem:[%s692 + $0xc] sm:$0xf]
        %v698 = vunpack.c.l.b16 %v691
        %v699 = vpack.c.b16 %v698, %v698
        %v700 = vrot.slane %v699, 1
        %v705 = vunpack.c.l.b16 %v693
        %v706 = vunpack.c.l.b16 %v694
        %v707 = vunpack.c.l.b16 %v695
        %v708 = vunpack.c.l.b16 %v696
        %v709 = vpack.c.b16 %v706, %v705
        %v710 = vpack.c.b16 %v708, %v707
        %v714 = vsel %vm186, %v700, 0
        %716 = vmatprep.subr.bf16.mxu0 0
        %717 = vmatpush1.bf16.msra.mxu0 %v709
        %718 = vmatprep.subr.bf16.mxu0 0
        %719 = vmatpush1.bf16.msra.mxu0 %v710
        %720 = vmatprep.subr.bf16.mxu0 0
        %721 = vmatpush1.bf16.msra.mxu0 0
        %722 = vmatprep.subr.bf16.mxu0 0
        %723 = vmatpush1.bf16.msra.mxu0 0
        %724 = vmatprep.subr.bf16.mxu0 0
        %725 = vmatpush1.bf16.msra.mxu0 0
        %726 = vmatprep.subr.bf16.mxu0 0
        %727 = vmatpush1.bf16.msra.mxu0 0
        %728 = vmatprep.subr.bf16.mxu0 0
        %729 = vmatpush1.bf16.msra.mxu0 0
        %730 = vmatprep.subr.bf16.mxu0 0
        %731 = vmatpush1.bf16.msra.mxu0 0
        %732 = vmatprep.subr.bf16.mxu0 0
        %733 = vmatpush1.bf16.msra.mxu0 0
        %734 = vmatprep.subr.bf16.mxu0 0
        %735 = vmatpush1.bf16.msra.mxu0 0
        %736 = vmatprep.subr.bf16.mxu0 0
        %737 = vmatpush1.bf16.msra.mxu0 0
        %738 = vmatprep.subr.bf16.mxu0 0
        %739 = vmatpush1.bf16.msra.mxu0 0
        %740 = vmatprep.subr.bf16.mxu0 0
        %741 = vmatpush1.bf16.msra.mxu0 0
        %742 = vmatprep.subr.bf16.mxu0 0
        %743 = vmatpush1.bf16.msra.mxu0 0
        %744 = vmatprep.subr.bf16.mxu0 0
        %745 = vmatpush1.bf16.msra.mxu0 0
        %746 = vmatprep.subr.bf16.mxu0 0
        %747 = vmatpush1.bf16.msra.mxu0 0
        %748 = vmatprep.mubr.bf16.mxu0 0
        %749 = vmatmul.mubr.bf16.gmra.mrb[0].mxu0 %v714
        %v750 = vpop.f32.mrb[0].mxu0
        %v751 = vadd.f32 0.0, %v750
        %v752 = vpop.f32.mrb[0].mxu0
        %v753 = vpop.f32.mrb[0].mxu0
        %v754 = vpop.f32.mrb[0].mxu0
        %755 = vdwg.mxu0
        %v756 = vadd.f32 %v690, %v751
        %s757 = smul.u32 %s146, 4
        %s758 = scalar_lea.vmem %s143, %s757
        %vm759 = vcmask 257024
        %760 = vst.msk [vmem:[%s758] sm:$0xf] %vm759, %v756
      $region33: #{_lambda_.64} parent=27 // loop_footer
        %s150 = sadd.s32 1, %s146
      $region34: #{_lambda_.64} parent=27 // loop_footer_branch
        %145 = sbr.rel target = $region30
      $region35: #{_lambda_.64} parent=27 // loop_exit
        _
      %p761 = scmp.lt.s32.totalorder %s13, 1
      %s762 = scalar_select %p761, %s13, 1
      %s763 = smul.addr %s762, 4
      %s764 = smul.addr %s763, 4
      %s765 = scalar_lea.vmem %s2, %s764
      // Predicated region
      $region36: #{_lambda_.64} parent=27 // pred_check
        %p766 = pneg %p78
      $region37: #{_lambda_.64} parent=27 // pred_check_branch
        %768 = sbr.rel (%p766) target = $region39
      $region38: #{_lambda_.64} parent=27 // pred_region
        _
      $region39: #{_lambda_.64} parent=27 // pred_fallthru
        _
    $region28: #{_lambda_.64} parent=5 // pred_fallthru
      _
    %p769 = scmp.le.s32.totalorder 2, %s8
    // Predicated region
    $region40: #{_lambda_.64} parent=5 // pred_check
      %p770 = pneg %p769
    $region41: #{_lambda_.64} parent=5 // pred_check_branch
      %772 = sbr.rel (%p770) target = $region43
    $region42: #{_lambda_.64} parent=5 // pred_region
      %s773 = ssub.s32 %s8, 2
      // Predicated region
      $region44: #{_lambda_.64} parent=42 // pred_check
        %p774 = pneg %p84
      $region45: #{_lambda_.64} parent=42 // pred_check_branch
        %776 = sbr.rel (%p774) target = $region47
      $region46: #{_lambda_.64} parent=42 // pred_region
        %p777 = scmp.lt.s32.totalorder %s14, 1
        %s778 = scalar_select %p777, %s14, 1
        %s779 = smul.addr %s778, 4
        %s780 = smul.addr %s779, 4
        %s781 = scalar_lea.vmem %s2, %s780
      $region47: #{_lambda_.64} parent=42 // pred_fallthru
        _
    $region43: #{_lambda_.64} parent=5 // pred_fallthru
      _
  $region6: #{_lambda_.64} parent=0 // loop_footer
    %s12 = sadd.s32 1, %s8
  $region7: #{_lambda_.64} parent=0 // loop_footer_branch
    %7 = sbr.rel target = $region3
  $region8: #{_lambda_.64} parent=0 // loop_exit
    _

</llo_original>
